<compile_context>
chip_gen: v7x
topology: tpu7x:2x2x1
jax: 0.10.0
libtpu: 0.0.40
codegen_flags: <defaults>
</compile_context>

<pallas_src>
import jax
import jax.numpy as jnp
from jax import lax
from jax.experimental import pallas as pl
from jax.experimental.pallas import tpu as pltpu


_BLOCK_N = 16         # images per grid step (clamped so grid_n >= 2 for small batches)
_CPAD = 128           # all channel / hidden dims padded to one full lane width


# ------------------------------ fused kernel -------------------------------- #

def _disc_kernel(x_ref, w1_ref, b1_ref, w2_ref, b2_ref,
                 wf1_ref, bf1_ref, wf2_ref, bf2_ref, o_ref):
    f32 = jnp.float32
    bf16 = jnp.bfloat16
    B = x_ref.shape[0]

    # ---- conv1: ONE K=25 matmul over the wrapper-im2col'd bf16 input -------------
    lhs1 = x_ref[...].reshape(B * 576, 25)                          # bf16
    acc1 = jnp.dot(lhs1, w1_ref[...], preferred_element_type=f32)   # (B*576, 128)

    # 2x2 max-pool = elementwise max of 4 aligned 144-row slabs (row order set in the
    # wrapper), then bias AFTER pool (commutes), then ReLU, then ONE bf16 cast.
    r1 = acc1.reshape(B, 4, 144, _CPAD)
    pooled1 = jnp.maximum(jnp.maximum(r1[:, 0], r1[:, 1]),
                          jnp.maximum(r1[:, 2], r1[:, 3]))           # (B, 144, 128)
    h1 = jnp.maximum(pooled1 + b1_ref[...], 0.0)
    h1b = h1.astype(bf16).reshape(B, 12, 12, _CPAD)                  # (y, x) row-major

    # ---- conv2: lane-concat the 25 taps -> ONE K=3200 MXU matmul ------------------
    parts = [h1b[:, di:di + 8, dj:dj + 8, :].reshape(B * 64, _CPAD)
             for di in range(5) for dj in range(5)]
    lhs2 = jnp.concatenate(parts, axis=-1)                           # (B*64, 3200) bf16
    acc2 = jnp.dot(lhs2, w2_ref[...], preferred_element_type=f32)    # (B*64, 128)

    # 2x2 max-pool (height: aligned 8-row slabs; width: tiny adjacent-row max),
    # bias after pool, ReLU.
    gh = jnp.max(acc2.reshape(B, 4, 2, 8, _CPAD), axis=2)            # (B, 4, 8, 128)
    gw = jnp.max(gh.reshape(B, 4, 4, 2, _CPAD), axis=3)              # (B, 4, 4, 128)
    h2 = jnp.maximum(gw + b2_ref[...], 0.0)

    # ---- fc1 (+ReLU); PyTorch's NCHW flatten order is baked into the prepped weight ----
    flat = h2.reshape(B, 4 * 4 * _CPAD).astype(bf16)                 # (B, 2048)
    z1 = jnp.dot(flat, wf1_ref[...], preferred_element_type=f32) + bf1_ref[...]
    z1 = jnp.maximum(z1, 0.0)                                        # (B, 128), cols >= 50 are 0
    # TODO(synk): Dropout2d / F.dropout (training-mode random masks) are eval-mode identities.

    # ---- fc2 (output width 1) as a lane reduction + sigmoid -----------------------
    z2 = jnp.sum(z1 * wf2_ref[...], axis=-1, keepdims=True) + bf2_ref[...]
    p = 1.0 / (1.0 + jnp.exp(-z2))                                   # (B, 1)

    # lane-dense store; column 0 is the real result (wrapper slices it out)
    o_ref[...] = jnp.broadcast_to(p, (B, _CPAD)).reshape(1, B, _CPAD)


# --------------------------- parameter preparation -------------------------- #

def init_params(key):
    """Random parameters in PyTorch layouts."""
    ks = jax.random.split(key, 8)
    s = 0.1
    return {
        "conv1_w": s * jax.random.normal(ks[0], (10, 1, 5, 5), jnp.float32),
        "conv1_b": s * jax.random.normal(ks[1], (10,), jnp.float32),
        "conv2_w": s * jax.random.normal(ks[2], (20, 10, 5, 5), jnp.float32),
        "conv2_b": s * jax.random.normal(ks[3], (20,), jnp.float32),
        "fc1_w": s * jax.random.normal(ks[4], (50, 320), jnp.float32),   # (out, in)
        "fc1_b": s * jax.random.normal(ks[5], (50,), jnp.float32),
        "fc2_w": s * jax.random.normal(ks[6], (1, 50), jnp.float32),     # (out, in)
        "fc2_b": s * jax.random.normal(ks[7], (1,), jnp.float32),
    }


def prepare_params(params):
    """One-time layout prep: matmul layouts, 128-lane zero padding, bf16 weights,
    and the fc1 row permutation that absorbs PyTorch's NCHW flatten order."""
    f32, bf16 = jnp.float32, jnp.bfloat16

    # conv1: (co, 1, kh, kw) -> (tap=kh*5+kw = 25, co_pad=128)
    w1 = jnp.transpose(params["conv1_w"][:, 0], (1, 2, 0)).reshape(25, 10)
    w1p = jnp.zeros((25, _CPAD), f32).at[:, :10].set(w1).astype(bf16)
    b1p = jnp.zeros((1, _CPAD), f32).at[0, :10].set(params["conv1_b"])

    # conv2: (co, ci, kh, kw) -> rows = tap*128 + ci  (matches the in-kernel lane concat)
    w2 = jnp.transpose(params["conv2_w"], (2, 3, 1, 0))                    # (5, 5, 10, 20)
    w2p = (jnp.zeros((5, 5, _CPAD, _CPAD), f32).at[:, :, :10, :20].set(w2)
           .reshape(25 * _CPAD, _CPAD).astype(bf16))                       # (3200, 128)
    b2p = jnp.zeros((1, _CPAD), f32).at[0, :20].set(params["conv2_b"])

    # fc1: torch feature index f = c*16 + i*4 + j  ->  kernel flatten g = (i*4+j)*128 + c
    wf1 = params["fc1_w"].T.reshape(20, 4, 4, 50)                          # (c, i, j, o)
    wf1 = jnp.transpose(wf1, (1, 2, 0, 3))                                 # (i, j, c, o)
    wf1p = (jnp.zeros((4, 4, _CPAD, _CPAD), f32)
            .at[:, :, :20, :50].set(wf1).reshape(4 * 4 * _CPAD, _CPAD).astype(bf16))
    bf1p = jnp.zeros((1, _CPAD), f32).at[0, :50].set(params["fc1_b"])

    # fc2: kept f32; used as a lane-reduction weight row
    wf2p = jnp.zeros((1, _CPAD), f32).at[0, :50].set(params["fc2_w"][0])
    bf2p = params["fc2_b"].reshape(1, 1).astype(f32)

    return dict(w1p=w1p, b1p=b1p, w2p=w2p, b2p=b2p,
                wf1p=wf1p, bf1p=bf1p, wf2p=wf2p, bf2p=bf2p)


# ----------------------------- wrapper-side im2col --------------------------- #

def _im2col_conv1(x2):
    """(n, 28, 28) f32 -> (n, 576, 25) bf16.

    Per-image row index = q*144 + y*12 + x with q = q_h*2 + q_w, where the conv1
    output position is (oh, ow) = (2*y + q_h, 2*x + q_w); tap index t = di*5 + dj.
    This ordering makes the 2x2 max-pool inside the kernel an elementwise max of
    four sublane-aligned 144-row slabs."""
    n = x2.shape[0]
    cols = []
    for qh in range(2):
        for qw in range(2):
            taps = [x2[:, qh + di: qh + di + 24: 2, qw + dj: qw + dj + 24: 2]
                    for di in range(5) for dj in range(5)]
            cols.append(jnp.stack(taps, axis=-1))                     # (n, 12, 12, 25)
    xim = jnp.stack(cols, axis=1)                                     # (n, 4, 12, 12, 25)
    return xim.reshape(n, 576, 25).astype(jnp.bfloat16)


# --------------------------------- forward ----------------------------------- #

@jax.jit
def discriminator_forward(x_nchw, prepped):
    """x_nchw: (N, 1, 28, 28) float32 -> (N, 1) sigmoid probabilities."""
    x = x_nchw.astype(jnp.float32)
    n = x.shape[0]
    # clamp the batch block so grid_n >= 2 when n >= 2 (keeps v7x's 2nd TensorCore busy)
    block_n = min(_BLOCK_N, max(1, -(-n // 2)))
    grid_n = -(-n // block_n)
    n_pad = grid_n * block_n
    if n_pad != n:
        x = jnp.pad(x, ((0, n_pad - n), (0, 0), (0, 0), (0, 0)))

    xim = _im2col_conv1(x[:, 0])                                       # (n_pad, 576, 25) bf16

    out = pl.pallas_call(
        _disc_kernel,
        out_shape=jax.ShapeDtypeStruct((grid_n, block_n, _CPAD), jnp.float32),
        grid=(grid_n,),
        in_specs=[
            pl.BlockSpec((block_n, 576, 25), lambda g: (g, 0, 0)),     # im2col'd input (bf16)
            pl.BlockSpec((25, _CPAD), lambda g: (0, 0)),               # conv1 w
            pl.BlockSpec((1, _CPAD), lambda g: (0, 0)),                # conv1 b
            pl.BlockSpec((25 * _CPAD, _CPAD), lambda g: (0, 0)),       # conv2 w (K=3200)
            pl.BlockSpec((1, _CPAD), lambda g: (0, 0)),                # conv2 b
            pl.BlockSpec((4 * 4 * _CPAD, _CPAD), lambda g: (0, 0)),    # fc1 w
            pl.BlockSpec((1, _CPAD), lambda g: (0, 0)),                # fc1 b
            pl.BlockSpec((1, _CPAD), lambda g: (0, 0)),                # fc2 w (row)
            pl.BlockSpec((1, 1), lambda g: (0, 0)),                    # fc2 b
        ],
        out_specs=pl.BlockSpec((1, block_n, _CPAD), lambda g: (g, 0, 0)),
        compiler_params=pltpu.CompilerParams(
            dimension_semantics=("parallel",),
            vmem_limit_bytes=48 * 1024 * 1024,     # fits v7x (64 MiB) and v5e/v6e
        ),
    )(xim, prepped["w1p"], prepped["b1p"], prepped["w2p"], prepped["b2p"],
      prepped["wf1p"], prepped["bf1p"], prepped["wf2p"], prepped["bf2p"])

    return out.reshape(n_pad, _CPAD)[:n, :1]


# ----------------------------- pure-JAX reference ---------------------------- #

def _reference_forward(x_nchw, params):
    dn = ("NCHW", "OIHW", "NCHW")
    y = lax.conv_general_dilated(x_nchw, params["conv1_w"], (1, 1), "VALID",
                                 dimension_numbers=dn)
    y = y + params["conv1_b"][None, :, None, None]
    y = lax.reduce_window(y, -jnp.inf, lax.max, (1, 1, 2, 2), (1, 1, 2, 2), "VALID")
    y = jnp.maximum(y, 0.0)
    y = lax.conv_general_dilated(y, params["conv2_w"], (1, 1), "VALID",
                                 dimension_numbers=dn)
    y = y + params["conv2_b"][None, :, None, None]
    y = lax.reduce_window(y, -jnp.inf, lax.max, (1, 1, 2, 2), (1, 1, 2, 2), "VALID")
    y = jnp.maximum(y, 0.0)
    flat = y.reshape(y.shape[0], 320)
    z = jnp.maximum(flat @ params["fc1_w"].T + params["fc1_b"], 0.0)
    z = z @ params["fc2_w"].T + params["fc2_b"]
    return 1.0 / (1.0 + jnp.exp(-z))


# ----------------------------------- main ------------------------------------ #

if __name__ == "__main__":
    key = jax.random.PRNGKey(0)
    k_x, k_p = jax.random.split(key)
    # forward implies MNIST-sized input (flattened feature size 320 = 20*4*4)
    x = jax.random.normal(k_x, (2, 1, 28, 28), jnp.float32)
    params = init_params(k_p)
    prepped = prepare_params(params)

    out = discriminator_forward(x, prepped)
    out = jax.block_until_ready(out)

    assert out.shape == (2, 1)
    assert bool(jnp.all(jnp.isfinite(out)))
    assert bool(jnp.all((out >= 0.0) & (out <= 1.0)))

    ref = _reference_forward(x, params)
    assert bool(jnp.max(jnp.abs(out - ref)) < 5e-2), (out, ref)

    print("KERNEL_OK")
</pallas_src>

<mosaic_0001>
module attributes {stable_mosaic.version = 11 : i64} {
  func.func @_disc_kernel(%arg0: i32, %arg1: memref<1x576x25xbf16, #tpu.memory_space<vmem>>, %arg2: memref<25x128xbf16, #tpu.memory_space<vmem>>, %arg3: memref<1x128xf32, #tpu.memory_space<vmem>>, %arg4: memref<3200x128xbf16, #tpu.memory_space<vmem>>, %arg5: memref<1x128xf32, #tpu.memory_space<vmem>>, %arg6: memref<2048x128xbf16, #tpu.memory_space<vmem>>, %arg7: memref<1x128xf32, #tpu.memory_space<vmem>>, %arg8: memref<1x128xf32, #tpu.memory_space<vmem>>, %arg9: memref<1x1xf32, #tpu.memory_space<vmem>>, %arg10: memref<1x1x128xf32, #tpu.memory_space<vmem>>) attributes {dimension_semantics = [#tpu.dimension_semantics<parallel>], iteration_bounds = array<i64: 2>, scalar_prefetch = 0 : i64, scratch_operands = 0 : i64, tpu.core_type = #tpu.core_type<tc>, window_params = [{transform_indices = @transform_0, window_bounds = array<i64: 1, 576, 25>}, {pipeline_mode = #tpu.pipeline_mode<synchronous>, transform_indices = @transform_1, window_bounds = array<i64: 25, 128>}, {pipeline_mode = #tpu.pipeline_mode<synchronous>, transform_indices = @transform_2, window_bounds = array<i64: 1, 128>}, {pipeline_mode = #tpu.pipeline_mode<synchronous>, transform_indices = @transform_3, window_bounds = array<i64: 3200, 128>}, {pipeline_mode = #tpu.pipeline_mode<synchronous>, transform_indices = @transform_4, window_bounds = array<i64: 1, 128>}, {pipeline_mode = #tpu.pipeline_mode<synchronous>, transform_indices = @transform_5, window_bounds = array<i64: 2048, 128>}, {pipeline_mode = #tpu.pipeline_mode<synchronous>, transform_indices = @transform_6, window_bounds = array<i64: 1, 128>}, {pipeline_mode = #tpu.pipeline_mode<synchronous>, transform_indices = @transform_7, window_bounds = array<i64: 1, 128>}, {pipeline_mode = #tpu.pipeline_mode<synchronous>, transform_indices = @transform_8, window_bounds = array<i64: 1, 1>}, {transform_indices = @transform_9, window_bounds = array<i64: 1, 1, 128>}]} {
    %c0 = arith.constant 0 : index
    %c0_0 = arith.constant 0 : index
    %c0_1 = arith.constant 0 : index
    %0 = vector.load %arg1[%c0, %c0_0, %c0_1] : memref<1x576x25xbf16, #tpu.memory_space<vmem>>, vector<1x576x25xbf16>
    %1 = vector.shape_cast %0 : vector<1x576x25xbf16> to vector<576x25xbf16>
    %c0_2 = arith.constant 0 : index
    %c0_3 = arith.constant 0 : index
    %2 = vector.load %arg2[%c0_2, %c0_3] : memref<25x128xbf16, #tpu.memory_space<vmem>>, vector<25x128xbf16>
    %cst = arith.constant dense<0.000000e+00> : vector<576x128xf32>
    %3 = tpu.matmul %1, %2, %cst {dimension_numbers = #tpu.dot_dimension_numbers<[1], [0], [0], [1], [0, 0, 1, 1], [], []>} : vector<576x25xbf16>, vector<25x128xbf16>, vector<576x128xf32> -> vector<576x128xf32>
    %4 = vector.shape_cast %3 : vector<576x128xf32> to vector<1x4x144x128xf32>
    %5 = vector.extract_strided_slice %4 {offsets = [0, 0, 0, 0], sizes = [1, 1, 144, 128], strides = [1, 1, 1, 1]} : vector<1x4x144x128xf32> to vector<1x1x144x128xf32>
    %6 = vector.shape_cast %5 : vector<1x1x144x128xf32> to vector<1x144x128xf32>
    %7 = vector.extract_strided_slice %4 {offsets = [0, 1, 0, 0], sizes = [1, 1, 144, 128], strides = [1, 1, 1, 1]} : vector<1x4x144x128xf32> to vector<1x1x144x128xf32>
    %8 = vector.shape_cast %7 : vector<1x1x144x128xf32> to vector<1x144x128xf32>
    %9 = arith.maximumf %6, %8 : vector<1x144x128xf32>
    %10 = vector.extract_strided_slice %4 {offsets = [0, 2, 0, 0], sizes = [1, 1, 144, 128], strides = [1, 1, 1, 1]} : vector<1x4x144x128xf32> to vector<1x1x144x128xf32>
    %11 = vector.shape_cast %10 : vector<1x1x144x128xf32> to vector<1x144x128xf32>
    %12 = vector.extract_strided_slice %4 {offsets = [0, 3, 0, 0], sizes = [1, 1, 144, 128], strides = [1, 1, 1, 1]} : vector<1x4x144x128xf32> to vector<1x1x144x128xf32>
    %13 = vector.shape_cast %12 : vector<1x1x144x128xf32> to vector<1x144x128xf32>
    %14 = arith.maximumf %11, %13 : vector<1x144x128xf32>
    %15 = arith.maximumf %9, %14 : vector<1x144x128xf32>
    %c0_4 = arith.constant 0 : index
    %c0_5 = arith.constant 0 : index
    %16 = vector.load %arg3[%c0_4, %c0_5] : memref<1x128xf32, #tpu.memory_space<vmem>>, vector<1x128xf32>
    %17 = vector.shape_cast %16 : vector<1x128xf32> to vector<1x1x128xf32>
    %18 = vector.broadcast %17 : vector<1x1x128xf32> to vector<1x144x128xf32>
    %19 = arith.addf %15, %18 : vector<1x144x128xf32>
    %cst_6 = arith.constant 0.000000e+00 : f32
    %20 = vector.broadcast %cst_6 : f32 to vector<1x144x128xf32>
    %21 = arith.maximumf %19, %20 : vector<1x144x128xf32>
    %22 = arith.truncf %21 : vector<1x144x128xf32> to vector<1x144x128xbf16>
    %23 = vector.shape_cast %22 : vector<1x144x128xbf16> to vector<1x12x12x128xbf16>
    %24 = vector.extract_strided_slice %23 {offsets = [0, 0, 0, 0], sizes = [1, 8, 8, 128], strides = [1, 1, 1, 1]} : vector<1x12x12x128xbf16> to vector<1x8x8x128xbf16>
    %25 = vector.shape_cast %24 : vector<1x8x8x128xbf16> to vector<64x128xbf16>
    %26 = vector.extract_strided_slice %23 {offsets = [0, 0, 1, 0], sizes = [1, 8, 8, 128], strides = [1, 1, 1, 1]} : vector<1x12x12x128xbf16> to vector<1x8x8x128xbf16>
    %27 = vector.shape_cast %26 : vector<1x8x8x128xbf16> to vector<64x128xbf16>
    %28 = vector.extract_strided_slice %23 {offsets = [0, 0, 2, 0], sizes = [1, 8, 8, 128], strides = [1, 1, 1, 1]} : vector<1x12x12x128xbf16> to vector<1x8x8x128xbf16>
    %29 = vector.shape_cast %28 : vector<1x8x8x128xbf16> to vector<64x128xbf16>
    %30 = vector.extract_strided_slice %23 {offsets = [0, 0, 3, 0], sizes = [1, 8, 8, 128], strides = [1, 1, 1, 1]} : vector<1x12x12x128xbf16> to vector<1x8x8x128xbf16>
    %31 = vector.shape_cast %30 : vector<1x8x8x128xbf16> to vector<64x128xbf16>
    %32 = vector.extract_strided_slice %23 {offsets = [0, 0, 4, 0], sizes = [1, 8, 8, 128], strides = [1, 1, 1, 1]} : vector<1x12x12x128xbf16> to vector<1x8x8x128xbf16>
    %33 = vector.shape_cast %32 : vector<1x8x8x128xbf16> to vector<64x128xbf16>
    %34 = vector.extract_strided_slice %23 {offsets = [0, 1, 0, 0], sizes = [1, 8, 8, 128], strides = [1, 1, 1, 1]} : vector<1x12x12x128xbf16> to vector<1x8x8x128xbf16>
    %35 = vector.shape_cast %34 : vector<1x8x8x128xbf16> to vector<64x128xbf16>
    %36 = vector.extract_strided_slice %23 {offsets = [0, 1, 1, 0], sizes = [1, 8, 8, 128], strides = [1, 1, 1, 1]} : vector<1x12x12x128xbf16> to vector<1x8x8x128xbf16>
    %37 = vector.shape_cast %36 : vector<1x8x8x128xbf16> to vector<64x128xbf16>
    %38 = vector.extract_strided_slice %23 {offsets = [0, 1, 2, 0], sizes = [1, 8, 8, 128], strides = [1, 1, 1, 1]} : vector<1x12x12x128xbf16> to vector<1x8x8x128xbf16>
    %39 = vector.shape_cast %38 : vector<1x8x8x128xbf16> to vector<64x128xbf16>
    %40 = vector.extract_strided_slice %23 {offsets = [0, 1, 3, 0], sizes = [1, 8, 8, 128], strides = [1, 1, 1, 1]} : vector<1x12x12x128xbf16> to vector<1x8x8x128xbf16>
    %41 = vector.shape_cast %40 : vector<1x8x8x128xbf16> to vector<64x128xbf16>
    %42 = vector.extract_strided_slice %23 {offsets = [0, 1, 4, 0], sizes = [1, 8, 8, 128], strides = [1, 1, 1, 1]} : vector<1x12x12x128xbf16> to vector<1x8x8x128xbf16>
    %43 = vector.shape_cast %42 : vector<1x8x8x128xbf16> to vector<64x128xbf16>
    %44 = vector.extract_strided_slice %23 {offsets = [0, 2, 0, 0], sizes = [1, 8, 8, 128], strides = [1, 1, 1, 1]} : vector<1x12x12x128xbf16> to vector<1x8x8x128xbf16>
    %45 = vector.shape_cast %44 : vector<1x8x8x128xbf16> to vector<64x128xbf16>
    %46 = vector.extract_strided_slice %23 {offsets = [0, 2, 1, 0], sizes = [1, 8, 8, 128], strides = [1, 1, 1, 1]} : vector<1x12x12x128xbf16> to vector<1x8x8x128xbf16>
    %47 = vector.shape_cast %46 : vector<1x8x8x128xbf16> to vector<64x128xbf16>
    %48 = vector.extract_strided_slice %23 {offsets = [0, 2, 2, 0], sizes = [1, 8, 8, 128], strides = [1, 1, 1, 1]} : vector<1x12x12x128xbf16> to vector<1x8x8x128xbf16>
    %49 = vector.shape_cast %48 : vector<1x8x8x128xbf16> to vector<64x128xbf16>
    %50 = vector.extract_strided_slice %23 {offsets = [0, 2, 3, 0], sizes = [1, 8, 8, 128], strides = [1, 1, 1, 1]} : vector<1x12x12x128xbf16> to vector<1x8x8x128xbf16>
    %51 = vector.shape_cast %50 : vector<1x8x8x128xbf16> to vector<64x128xbf16>
    %52 = vector.extract_strided_slice %23 {offsets = [0, 2, 4, 0], sizes = [1, 8, 8, 128], strides = [1, 1, 1, 1]} : vector<1x12x12x128xbf16> to vector<1x8x8x128xbf16>
    %53 = vector.shape_cast %52 : vector<1x8x8x128xbf16> to vector<64x128xbf16>
    %54 = vector.extract_strided_slice %23 {offsets = [0, 3, 0, 0], sizes = [1, 8, 8, 128], strides = [1, 1, 1, 1]} : vector<1x12x12x128xbf16> to vector<1x8x8x128xbf16>
    %55 = vector.shape_cast %54 : vector<1x8x8x128xbf16> to vector<64x128xbf16>
    %56 = vector.extract_strided_slice %23 {offsets = [0, 3, 1, 0], sizes = [1, 8, 8, 128], strides = [1, 1, 1, 1]} : vector<1x12x12x128xbf16> to vector<1x8x8x128xbf16>
    %57 = vector.shape_cast %56 : vector<1x8x8x128xbf16> to vector<64x128xbf16>
    %58 = vector.extract_strided_slice %23 {offsets = [0, 3, 2, 0], sizes = [1, 8, 8, 128], strides = [1, 1, 1, 1]} : vector<1x12x12x128xbf16> to vector<1x8x8x128xbf16>
    %59 = vector.shape_cast %58 : vector<1x8x8x128xbf16> to vector<64x128xbf16>
    %60 = vector.extract_strided_slice %23 {offsets = [0, 3, 3, 0], sizes = [1, 8, 8, 128], strides = [1, 1, 1, 1]} : vector<1x12x12x128xbf16> to vector<1x8x8x128xbf16>
    %61 = vector.shape_cast %60 : vector<1x8x8x128xbf16> to vector<64x128xbf16>
    %62 = vector.extract_strided_slice %23 {offsets = [0, 3, 4, 0], sizes = [1, 8, 8, 128], strides = [1, 1, 1, 1]} : vector<1x12x12x128xbf16> to vector<1x8x8x128xbf16>
    %63 = vector.shape_cast %62 : vector<1x8x8x128xbf16> to vector<64x128xbf16>
    %64 = vector.extract_strided_slice %23 {offsets = [0, 4, 0, 0], sizes = [1, 8, 8, 128], strides = [1, 1, 1, 1]} : vector<1x12x12x128xbf16> to vector<1x8x8x128xbf16>
    %65 = vector.shape_cast %64 : vector<1x8x8x128xbf16> to vector<64x128xbf16>
    %66 = vector.extract_strided_slice %23 {offsets = [0, 4, 1, 0], sizes = [1, 8, 8, 128], strides = [1, 1, 1, 1]} : vector<1x12x12x128xbf16> to vector<1x8x8x128xbf16>
    %67 = vector.shape_cast %66 : vector<1x8x8x128xbf16> to vector<64x128xbf16>
    %68 = vector.extract_strided_slice %23 {offsets = [0, 4, 2, 0], sizes = [1, 8, 8, 128], strides = [1, 1, 1, 1]} : vector<1x12x12x128xbf16> to vector<1x8x8x128xbf16>
    %69 = vector.shape_cast %68 : vector<1x8x8x128xbf16> to vector<64x128xbf16>
    %70 = vector.extract_strided_slice %23 {offsets = [0, 4, 3, 0], sizes = [1, 8, 8, 128], strides = [1, 1, 1, 1]} : vector<1x12x12x128xbf16> to vector<1x8x8x128xbf16>
    %71 = vector.shape_cast %70 : vector<1x8x8x128xbf16> to vector<64x128xbf16>
    %72 = vector.extract_strided_slice %23 {offsets = [0, 4, 4, 0], sizes = [1, 8, 8, 128], strides = [1, 1, 1, 1]} : vector<1x12x12x128xbf16> to vector<1x8x8x128xbf16>
    %73 = vector.shape_cast %72 : vector<1x8x8x128xbf16> to vector<64x128xbf16>
    %74 = tpu.concatenate %25, %27, %29, %31, %33, %35, %37, %39, %41, %43, %45, %47, %49, %51, %53, %55 in 1 : vector<64x128xbf16>, vector<64x128xbf16>, vector<64x128xbf16>, vector<64x128xbf16>, vector<64x128xbf16>, vector<64x128xbf16>, vector<64x128xbf16>, vector<64x128xbf16>, vector<64x128xbf16>, vector<64x128xbf16>, vector<64x128xbf16>, vector<64x128xbf16>, vector<64x128xbf16>, vector<64x128xbf16>, vector<64x128xbf16>, vector<64x128xbf16> -> vector<64x2048xbf16>
    %75 = tpu.concatenate %57, %59, %61, %63, %65, %67, %69, %71, %73 in 1 : vector<64x128xbf16>, vector<64x128xbf16>, vector<64x128xbf16>, vector<64x128xbf16>, vector<64x128xbf16>, vector<64x128xbf16>, vector<64x128xbf16>, vector<64x128xbf16>, vector<64x128xbf16> -> vector<64x1152xbf16>
    %76 = tpu.concatenate %74, %75 in 1 : vector<64x2048xbf16>, vector<64x1152xbf16> -> vector<64x3200xbf16>
    %c0_7 = arith.constant 0 : index
    %c0_8 = arith.constant 0 : index
    %77 = vector.load %arg4[%c0_7, %c0_8] : memref<3200x128xbf16, #tpu.memory_space<vmem>>, vector<3200x128xbf16>
    %cst_9 = arith.constant dense<0.000000e+00> : vector<64x128xf32>
    %78 = tpu.matmul %76, %77, %cst_9 {dimension_numbers = #tpu.dot_dimension_numbers<[1], [0], [0], [1], [0, 0, 1, 1], [], []>} : vector<64x3200xbf16>, vector<3200x128xbf16>, vector<64x128xf32> -> vector<64x128xf32>
    %79 = vector.shape_cast %78 : vector<64x128xf32> to vector<1x4x2x8x128xf32>
    %cst_10 = arith.constant dense<0xFF800000> : vector<1x4x8x128xf32>
    %80 = vector.multi_reduction <maximumf>, %79, %cst_10 [2] : vector<1x4x2x8x128xf32> to vector<1x4x8x128xf32>
    %81 = vector.shape_cast %80 : vector<1x4x8x128xf32> to vector<1x4x4x2x128xf32>
    %cst_11 = arith.constant dense<0xFF800000> : vector<1x4x4x128xf32>
    %82 = vector.multi_reduction <maximumf>, %81, %cst_11 [3] : vector<1x4x4x2x128xf32> to vector<1x4x4x128xf32>
    %c0_12 = arith.constant 0 : index
    %c0_13 = arith.constant 0 : index
    %83 = vector.load %arg5[%c0_12, %c0_13] : memref<1x128xf32, #tpu.memory_space<vmem>>, vector<1x128xf32>
    %84 = vector.shape_cast %83 : vector<1x128xf32> to vector<1x1x1x128xf32>
    %85 = vector.broadcast %84 : vector<1x1x1x128xf32> to vector<1x4x4x128xf32>
    %86 = arith.addf %82, %85 : vector<1x4x4x128xf32>
    %cst_14 = arith.constant 0.000000e+00 : f32
    %87 = vector.broadcast %cst_14 : f32 to vector<1x4x4x128xf32>
    %88 = arith.maximumf %86, %87 : vector<1x4x4x128xf32>
    %89 = vector.shape_cast %88 : vector<1x4x4x128xf32> to vector<1x2048xf32>
    %90 = arith.truncf %89 : vector<1x2048xf32> to vector<1x2048xbf16>
    %c0_15 = arith.constant 0 : index
    %c0_16 = arith.constant 0 : index
    %91 = vector.load %arg6[%c0_15, %c0_16] : memref<2048x128xbf16, #tpu.memory_space<vmem>>, vector<2048x128xbf16>
    %cst_17 = arith.constant dense<0.000000e+00> : vector<1x128xf32>
    %92 = tpu.matmul %90, %91, %cst_17 {dimension_numbers = #tpu.dot_dimension_numbers<[1], [0], [0], [1], [0, 0, 1, 1], [], []>} : vector<1x2048xbf16>, vector<2048x128xbf16>, vector<1x128xf32> -> vector<1x128xf32>
    %c0_18 = arith.constant 0 : index
    %c0_19 = arith.constant 0 : index
    %93 = vector.load %arg7[%c0_18, %c0_19] : memref<1x128xf32, #tpu.memory_space<vmem>>, vector<1x128xf32>
    %94 = arith.addf %92, %93 : vector<1x128xf32>
    %cst_20 = arith.constant 0.000000e+00 : f32
    %95 = vector.broadcast %cst_20 : f32 to vector<1x128xf32>
    %96 = arith.maximumf %94, %95 : vector<1x128xf32>
    %c0_21 = arith.constant 0 : index
    %c0_22 = arith.constant 0 : index
    %97 = vector.load %arg8[%c0_21, %c0_22] : memref<1x128xf32, #tpu.memory_space<vmem>>, vector<1x128xf32>
    %98 = arith.mulf %96, %97 : vector<1x128xf32>
    %cst_23 = arith.constant dense<0.000000e+00> : vector<1xf32>
    %99 = vector.multi_reduction <add>, %98, %cst_23 [1] : vector<1x128xf32> to vector<1xf32>
    %100 = vector.shape_cast %99 : vector<1xf32> to vector<1x1xf32>
    %c0_24 = arith.constant 0 : index
    %c0_25 = arith.constant 0 : index
    %101 = vector.load %arg9[%c0_24, %c0_25] : memref<1x1xf32, #tpu.memory_space<vmem>>, vector<1x1xf32>
    %102 = arith.addf %100, %101 : vector<1x1xf32>
    %cst_26 = arith.constant 0.000000e+00 : f32
    %103 = vector.broadcast %cst_26 : f32 to vector<1x1xf32>
    %104 = arith.subf %103, %102 : vector<1x1xf32>
    %105 = math.exp %104 : vector<1x1xf32>
    %cst_27 = arith.constant 1.000000e+00 : f32
    %106 = vector.broadcast %cst_27 : f32 to vector<1x1xf32>
    %107 = arith.addf %106, %105 : vector<1x1xf32>
    %cst_28 = arith.constant 1.000000e+00 : f32
    %108 = vector.broadcast %cst_28 : f32 to vector<1x1xf32>
    %109 = arith.divf %108, %107 : vector<1x1xf32>
    %110 = vector.shape_cast %109 : vector<1x1xf32> to vector<1x1xf32>
    %111 = vector.broadcast %110 : vector<1x1xf32> to vector<1x128xf32>
    %112 = vector.shape_cast %111 : vector<1x128xf32> to vector<1x1x128xf32>
    %c0_29 = arith.constant 0 : index
    %c0_30 = arith.constant 0 : index
    %c0_31 = arith.constant 0 : index
    %113 = vector.load %arg10[%c0_29, %c0_30, %c0_31] : memref<1x1x128xf32, #tpu.memory_space<vmem>>, vector<1x1x128xf32>
    tpu.vector_store %arg10[%c0_29, %c0_30, %c0_31], %112 {strides = array<i32>} : memref<1x1x128xf32, #tpu.memory_space<vmem>>, vector<1x1x128xf32>,
    return
  }
  func.func @transform_0(%arg0: i32) -> (i32, i32, i32) {
    %c0_i32 = arith.constant 0 : i32
    %c0_i32_0 = arith.constant 0 : i32
    %c0_i32_1 = arith.constant 0 : i32
    return %arg0, %c0_i32, %c0_i32_0 : i32, i32, i32
  }
  func.func @transform_1(%arg0: i32) -> (i32, i32) {
    %c0_i32 = arith.constant 0 : i32
    %c0_i32_0 = arith.constant 0 : i32
    %c0_i32_1 = arith.constant 0 : i32
    return %c0_i32, %c0_i32_0 : i32, i32
  }
  func.func @transform_2(%arg0: i32) -> (i32, i32) {
    %c0_i32 = arith.constant 0 : i32
    %c0_i32_0 = arith.constant 0 : i32
    %c0_i32_1 = arith.constant 0 : i32
    return %c0_i32, %c0_i32_0 : i32, i32
  }
  func.func @transform_3(%arg0: i32) -> (i32, i32) {
    %c0_i32 = arith.constant 0 : i32
    %c0_i32_0 = arith.constant 0 : i32
    %c0_i32_1 = arith.constant 0 : i32
    return %c0_i32, %c0_i32_0 : i32, i32
  }
  func.func @transform_4(%arg0: i32) -> (i32, i32) {
    %c0_i32 = arith.constant 0 : i32
    %c0_i32_0 = arith.constant 0 : i32
    %c0_i32_1 = arith.constant 0 : i32
    return %c0_i32, %c0_i32_0 : i32, i32
  }
  func.func @transform_5(%arg0: i32) -> (i32, i32) {
    %c0_i32 = arith.constant 0 : i32
    %c0_i32_0 = arith.constant 0 : i32
    %c0_i32_1 = arith.constant 0 : i32
    return %c0_i32, %c0_i32_0 : i32, i32
  }
  func.func @transform_6(%arg0: i32) -> (i32, i32) {
    %c0_i32 = arith.constant 0 : i32
    %c0_i32_0 = arith.constant 0 : i32
    %c0_i32_1 = arith.constant 0 : i32
    return %c0_i32, %c0_i32_0 : i32, i32
  }
  func.func @transform_7(%arg0: i32) -> (i32, i32) {
    %c0_i32 = arith.constant 0 : i32
    %c0_i32_0 = arith.constant 0 : i32
    %c0_i32_1 = arith.constant 0 : i32
    return %c0_i32, %c0_i32_0 : i32, i32
  }
  func.func @transform_8(%arg0: i32) -> (i32, i32) {
    %c0_i32 = arith.constant 0 : i32
    %c0_i32_0 = arith.constant 0 : i32
    %c0_i32_1 = arith.constant 0 : i32
    return %c0_i32, %c0_i32_0 : i32, i32
  }
  func.func @transform_9(%arg0: i32) -> (i32, i32, i32) {
    %c0_i32 = arith.constant 0 : i32
    %c0_i32_0 = arith.constant 0 : i32
    %c0_i32_1 = arith.constant 0 : i32
    return %arg0, %c0_i32, %c0_i32_0 : i32, i32, i32
  }
}

</mosaic_0001>

<llo_original>
// kernel: discriminator_forward.1
$region0: #{discriminator_forward.1}
  #allocation0 [shape = 'u32[]', space=smem, size = 0x4, offset = 0x4, fixed_abs, tag = 'smem constant byte address 0x4 - core index']
  #allocation1 [shape = 'u32[144,128]{1,0:T(1,128)}', space=vmem, size = 0x12000, scoped, tag = 'internal scratch']
  #allocation2 [shape = 'f32[1,1]{1,0:T(1,128)S(1)}', space=vmem, size = 0x200, scoped, tag = 'scoped memory for discriminator_forward.1']
  %s0 = inlined_call_operand.vmem [shape: bf16[2,576,25], index: 0, kind: input, shape index: {}]
  %s1 = inlined_call_operand.vmem [shape: bf16[25,128], index: 1, kind: input, shape index: {}]
  %s2 = inlined_call_operand.vmem [shape: f32[1,128], index: 2, kind: input, shape index: {}]
  %s3 = inlined_call_operand.vmem [shape: bf16[3200,128], index: 3, kind: input, shape index: {}]
  %s4 = inlined_call_operand.vmem [shape: f32[1,128], index: 4, kind: input, shape index: {}]
  %s5 = inlined_call_operand.vmem [shape: bf16[2048,128], index: 5, kind: input, shape index: {}]
  %s6 = inlined_call_operand.vmem [shape: f32[1,128], index: 6, kind: input, shape index: {}]
  %s7 = inlined_call_operand.vmem [shape: f32[1,128], index: 7, kind: input, shape index: {}]
  %s8 = inlined_call_operand.<no memory space> [shape: f32[1,1], index: 8, kind: input, shape index: {}]
  %s9 = inlined_call_operand.vmem [shape: f32[2,1,128], index: 9, kind: output, shape index: {}]
  %s10 = sld [smem:[#allocation0]]
  $region69: #{discriminator_forward.1} parent=0
    _
  %s12 = ssub.s32 1, %s10
  %s13 = scalar_select 0, %s12, %s10
  %v14 = vstv %s8
  %15 = vst [vmem:[#allocation2] sm:$0x1] %v14
  loop: start=0, step=1, limit=4
  $region2: #{discriminator_forward.1} parent=0 // loop_pre_header
    _
  $region3: #{discriminator_forward.1} parent=0 // loop_header
    %s17 = sphi 0, %s21
    %p18 = scmp.ge.s32.totalorder %s17, 4
    %s27 = sphi 0, %s29
    %s30 = sphi 0, %s27
    %s31 = sphi 0, %s30
    %s47 = sphi 0, %s31
    %s51 = sphi 0, %s51
    %s53 = sphi 0, %s51
    %s54 = sphi 0, %s53
    %s68 = sphi 0, %s54
    %s72 = sphi 0, %s72
    %s74 = sphi 0, %s72
    %s75 = sphi 0, %s74
    %s89 = sphi 0, %s75
    %s93 = sphi 0, %s93
    %s95 = sphi 0, %s93
    %s96 = sphi 0, %s95
    %s110 = sphi 0, %s96
    %s114 = sphi 0, %s114
    %s116 = sphi 0, %s114
    %s117 = sphi 0, %s116
    %s131 = sphi 0, %s117
    %s135 = sphi 0, %s135
    %s137 = sphi 0, %s135
    %s138 = sphi 0, %s137
    %s152 = sphi 0, %s138
    %s156 = sphi 0, %s156
    %s158 = sphi 0, %s156
    %s159 = sphi 0, %s158
    %s173 = sphi 0, %s159
    %s177 = sphi 0, %s177
    %s179 = sphi 0, %s177
    %s180 = sphi 0, %s179
    %s194 = sphi 0, %s180
    %s198 = sphi 0, %s198
    %s200 = sphi 0, %s198
    %s201 = sphi 0, %s200
    %s215 = sphi 0, %s201
    %s221 = sphi 0, %s223
    %s224 = sphi 0, %s221
    %s225 = sphi 0, %s224
    %s241 = sphi 0, %s225
  $region4: #{discriminator_forward.1} parent=0 // loop_header_branch
    %20 = sbr.rel (%p18) target = $region8
  $region5: #{discriminator_forward.1} parent=0 // loop_body
    %s22 = ssub.s32 %s17, 1
    %s23 = ssub.s32 %s17, 2
    %s24 = sadd.s32 %s17, 1
    %s25 = ssub.s32 %s17, %s24
    %p26 = scmp.eq.s32.totalorder %s25, 0
    %s28 = sadd.s32 %s27, 1
    %s29 = scalar_select %p26, %s27, %s28
    %p32 = pneg %p26
    %p33 = scmp.eq.s32.totalorder %s17, 1
    %p34 = por %p32, %p33
    %p35 = scmp.ne.s32.totalorder %s27, %s30
    %p36 = scmp.eq.s32.totalorder %s17, 0
    %p37 = por %p35, %p36
    %p38 = scmp.ne.s32.totalorder %s27, %s30
    %p39 = scmp.eq.s32.totalorder %s22, 1
    %p40 = por %p38, %p39
    %p41 = scmp.ne.s32.totalorder %s30, %s31
    %p42 = scmp.eq.s32.totalorder %s22, 0
    %p43 = por %p41, %p42
    %p44 = scmp.ne.s32.totalorder %s30, %s31
    %p45 = scmp.eq.s32.totalorder %s23, 1
    %p46 = por %p44, %p45
    %p48 = scmp.ne.s32.totalorder %s31, %s47
    %p49 = scmp.eq.s32.totalorder %s23, 0
    %p50 = por %p48, %p49
    %s52 = sadd.s32 %s51, 1
    %p55 = scmp.eq.s32.totalorder %s17, 1
    %p56 = scmp.ne.s32.totalorder %s51, %s53
    %p57 = scmp.eq.s32.totalorder %s17, 0
    %p58 = por %p56, %p57
    %p59 = scmp.ne.s32.totalorder %s51, %s53
    %p60 = scmp.eq.s32.totalorder %s22, 1
    %p61 = por %p59, %p60
    %p62 = scmp.ne.s32.totalorder %s53, %s54
    %p63 = scmp.eq.s32.totalorder %s22, 0
    %p64 = por %p62, %p63
    %p65 = scmp.ne.s32.totalorder %s53, %s54
    %p66 = scmp.eq.s32.totalorder %s23, 1
    %p67 = por %p65, %p66
    %p69 = scmp.ne.s32.totalorder %s54, %s68
    %p70 = scmp.eq.s32.totalorder %s23, 0
    %p71 = por %p69, %p70
    %s73 = sadd.s32 %s72, 1
    %p76 = scmp.eq.s32.totalorder %s17, 1
    %p77 = scmp.ne.s32.totalorder %s72, %s74
    %p78 = scmp.eq.s32.totalorder %s17, 0
    %p79 = por %p77, %p78
    %p80 = scmp.ne.s32.totalorder %s72, %s74
    %p81 = scmp.eq.s32.totalorder %s22, 1
    %p82 = por %p80, %p81
    %p83 = scmp.ne.s32.totalorder %s74, %s75
    %p84 = scmp.eq.s32.totalorder %s22, 0
    %p85 = por %p83, %p84
    %p86 = scmp.ne.s32.totalorder %s74, %s75
    %p87 = scmp.eq.s32.totalorder %s23, 1
    %p88 = por %p86, %p87
    %p90 = scmp.ne.s32.totalorder %s75, %s89
    %p91 = scmp.eq.s32.totalorder %s23, 0
    %p92 = por %p90, %p91
    %s94 = sadd.s32 %s93, 1
    %p97 = scmp.eq.s32.totalorder %s17, 1
    %p98 = scmp.ne.s32.totalorder %s93, %s95
    %p99 = scmp.eq.s32.totalorder %s17, 0
    %p100 = por %p98, %p99
    %p101 = scmp.ne.s32.totalorder %s93, %s95
    %p102 = scmp.eq.s32.totalorder %s22, 1
    %p103 = por %p101, %p102
    %p104 = scmp.ne.s32.totalorder %s95, %s96
    %p105 = scmp.eq.s32.totalorder %s22, 0
    %p106 = por %p104, %p105
    %p107 = scmp.ne.s32.totalorder %s95, %s96
    %p108 = scmp.eq.s32.totalorder %s23, 1
    %p109 = por %p107, %p108
    %p111 = scmp.ne.s32.totalorder %s96, %s110
    %p112 = scmp.eq.s32.totalorder %s23, 0
    %p113 = por %p111, %p112
    %s115 = sadd.s32 %s114, 1
    %p118 = scmp.eq.s32.totalorder %s17, 1
    %p119 = scmp.ne.s32.totalorder %s114, %s116
    %p120 = scmp.eq.s32.totalorder %s17, 0
    %p121 = por %p119, %p120
    %p122 = scmp.ne.s32.totalorder %s114, %s116
    %p123 = scmp.eq.s32.totalorder %s22, 1
    %p124 = por %p122, %p123
    %p125 = scmp.ne.s32.totalorder %s116, %s117
    %p126 = scmp.eq.s32.totalorder %s22, 0
    %p127 = por %p125, %p126
    %p128 = scmp.ne.s32.totalorder %s116, %s117
    %p129 = scmp.eq.s32.totalorder %s23, 1
    %p130 = por %p128, %p129
    %p132 = scmp.ne.s32.totalorder %s117, %s131
    %p133 = scmp.eq.s32.totalorder %s23, 0
    %p134 = por %p132, %p133
    %s136 = sadd.s32 %s135, 1
    %p139 = scmp.eq.s32.totalorder %s17, 1
    %p140 = scmp.ne.s32.totalorder %s135, %s137
    %p141 = scmp.eq.s32.totalorder %s17, 0
    %p142 = por %p140, %p141
    %p143 = scmp.ne.s32.totalorder %s135, %s137
    %p144 = scmp.eq.s32.totalorder %s22, 1
    %p145 = por %p143, %p144
    %p146 = scmp.ne.s32.totalorder %s137, %s138
    %p147 = scmp.eq.s32.totalorder %s22, 0
    %p148 = por %p146, %p147
    %p149 = scmp.ne.s32.totalorder %s137, %s138
    %p150 = scmp.eq.s32.totalorder %s23, 1
    %p151 = por %p149, %p150
    %p153 = scmp.ne.s32.totalorder %s138, %s152
    %p154 = scmp.eq.s32.totalorder %s23, 0
    %p155 = por %p153, %p154
    %s157 = sadd.s32 %s156, 1
    %p160 = scmp.eq.s32.totalorder %s17, 1
    %p161 = scmp.ne.s32.totalorder %s156, %s158
    %p162 = scmp.eq.s32.totalorder %s17, 0
    %p163 = por %p161, %p162
    %p164 = scmp.ne.s32.totalorder %s156, %s158
    %p165 = scmp.eq.s32.totalorder %s22, 1
    %p166 = por %p164, %p165
    %p167 = scmp.ne.s32.totalorder %s158, %s159
    %p168 = scmp.eq.s32.totalorder %s22, 0
    %p169 = por %p167, %p168
    %p170 = scmp.ne.s32.totalorder %s158, %s159
    %p171 = scmp.eq.s32.totalorder %s23, 1
    %p172 = por %p170, %p171
    %p174 = scmp.ne.s32.totalorder %s159, %s173
    %p175 = scmp.eq.s32.totalorder %s23, 0
    %p176 = por %p174, %p175
    %s178 = sadd.s32 %s177, 1
    %p181 = scmp.eq.s32.totalorder %s17, 1
    %p182 = scmp.ne.s32.totalorder %s177, %s179
    %p183 = scmp.eq.s32.totalorder %s17, 0
    %p184 = por %p182, %p183
    %p185 = scmp.ne.s32.totalorder %s177, %s179
    %p186 = scmp.eq.s32.totalorder %s22, 1
    %p187 = por %p185, %p186
    %p188 = scmp.ne.s32.totalorder %s179, %s180
    %p189 = scmp.eq.s32.totalorder %s22, 0
    %p190 = por %p188, %p189
    %p191 = scmp.ne.s32.totalorder %s179, %s180
    %p192 = scmp.eq.s32.totalorder %s23, 1
    %p193 = por %p191, %p192
    %p195 = scmp.ne.s32.totalorder %s180, %s194
    %p196 = scmp.eq.s32.totalorder %s23, 0
    %p197 = por %p195, %p196
    %s199 = sadd.s32 %s198, 1
    %p202 = scmp.eq.s32.totalorder %s17, 1
    %p203 = scmp.ne.s32.totalorder %s198, %s200
    %p204 = scmp.eq.s32.totalorder %s17, 0
    %p205 = por %p203, %p204
    %p206 = scmp.ne.s32.totalorder %s198, %s200
    %p207 = scmp.eq.s32.totalorder %s22, 1
    %p208 = por %p206, %p207
    %p209 = scmp.ne.s32.totalorder %s200, %s201
    %p210 = scmp.eq.s32.totalorder %s22, 0
    %p211 = por %p209, %p210
    %p212 = scmp.ne.s32.totalorder %s200, %s201
    %p213 = scmp.eq.s32.totalorder %s23, 1
    %p214 = por %p212, %p213
    %p216 = scmp.ne.s32.totalorder %s201, %s215
    %p217 = scmp.eq.s32.totalorder %s23, 0
    %p218 = por %p216, %p217
    %s219 = ssub.s32 %s17, %s24
    %p220 = scmp.eq.s32.totalorder %s219, 0
    %s222 = sadd.s32 %s221, 1
    %s223 = scalar_select %p220, %s221, %s222
    %p226 = pneg %p220
    %p227 = scmp.eq.s32.totalorder %s17, 1
    %p228 = por %p226, %p227
    %p229 = scmp.ne.s32.totalorder %s221, %s224
    %p230 = scmp.eq.s32.totalorder %s17, 0
    %p231 = por %p229, %p230
    %p232 = scmp.ne.s32.totalorder %s221, %s224
    %p233 = scmp.eq.s32.totalorder %s22, 1
    %p234 = por %p232, %p233
    %p235 = scmp.ne.s32.totalorder %s224, %s225
    %p236 = scmp.eq.s32.totalorder %s22, 0
    %p237 = por %p235, %p236
    %p238 = scmp.ne.s32.totalorder %s224, %s225
    %p239 = scmp.eq.s32.totalorder %s23, 1
    %p240 = por %p238, %p239
    %p242 = scmp.ne.s32.totalorder %s225, %s241
    %p243 = scmp.eq.s32.totalorder %s23, 0
    %p244 = por %p242, %p243
    %p245 = scmp.le.s32.totalorder 1, %s17
    %p246 = scmp.lt.s32.totalorder %s17, 3
    %p247 = pnand %p245, %p246
    %p248 = pneg %p247
    // Predicated region
    $region9: #{discriminator_forward.1} parent=5 // pred_check
      _
    $region10: #{discriminator_forward.1} parent=5 // pred_check_branch
      %250 = sbr.rel (%p247) target = $region12
    $region11: #{discriminator_forward.1} parent=5 // pred_region
      %s251 = ssub.s32 %s17, 1
      // Predicated region
      $region13: #{discriminator_forward.1} parent=11 // pred_check
        %p252 = pneg %p64
      $region14: #{discriminator_forward.1} parent=11 // pred_check_branch
        %254 = sbr.rel (%p252) target = $region16
      $region15: #{discriminator_forward.1} parent=11 // pred_region
        _
      $region16: #{discriminator_forward.1} parent=11 // pred_fallthru
        _
      // Predicated region
      $region17: #{discriminator_forward.1} parent=11 // pred_check
        %p255 = pneg %p85
      $region18: #{discriminator_forward.1} parent=11 // pred_check_branch
        %257 = sbr.rel (%p255) target = $region20
      $region19: #{discriminator_forward.1} parent=11 // pred_region
        _
      $region20: #{discriminator_forward.1} parent=11 // pred_fallthru
        _
      // Predicated region
      $region21: #{discriminator_forward.1} parent=11 // pred_check
        %p258 = pneg %p106
      $region22: #{discriminator_forward.1} parent=11 // pred_check_branch
        %260 = sbr.rel (%p258) target = $region24
      $region23: #{discriminator_forward.1} parent=11 // pred_region
        _
      $region24: #{discriminator_forward.1} parent=11 // pred_fallthru
        _
      // Predicated region
      $region25: #{discriminator_forward.1} parent=11 // pred_check
        %p261 = pneg %p127
      $region26: #{discriminator_forward.1} parent=11 // pred_check_branch
        %263 = sbr.rel (%p261) target = $region28
      $region27: #{discriminator_forward.1} parent=11 // pred_region
        _
      $region28: #{discriminator_forward.1} parent=11 // pred_fallthru
        _
      // Predicated region
      $region29: #{discriminator_forward.1} parent=11 // pred_check
        %p264 = pneg %p148
      $region30: #{discriminator_forward.1} parent=11 // pred_check_branch
        %266 = sbr.rel (%p264) target = $region32
      $region31: #{discriminator_forward.1} parent=11 // pred_region
        _
      $region32: #{discriminator_forward.1} parent=11 // pred_fallthru
        _
      // Predicated region
      $region33: #{discriminator_forward.1} parent=11 // pred_check
        %p267 = pneg %p169
      $region34: #{discriminator_forward.1} parent=11 // pred_check_branch
        %269 = sbr.rel (%p267) target = $region36
      $region35: #{discriminator_forward.1} parent=11 // pred_region
        _
      $region36: #{discriminator_forward.1} parent=11 // pred_fallthru
        _
      // Predicated region
      $region37: #{discriminator_forward.1} parent=11 // pred_check
        %p270 = pneg %p190
      $region38: #{discriminator_forward.1} parent=11 // pred_check_branch
        %272 = sbr.rel (%p270) target = $region40
      $region39: #{discriminator_forward.1} parent=11 // pred_region
        _
      $region40: #{discriminator_forward.1} parent=11 // pred_fallthru
        _
      // Predicated region
      $region41: #{discriminator_forward.1} parent=11 // pred_check
        %p273 = pneg %p211
      $region42: #{discriminator_forward.1} parent=11 // pred_check_branch
        %275 = sbr.rel (%p273) target = $region44
      $region43: #{discriminator_forward.1} parent=11 // pred_region
        _
      $region44: #{discriminator_forward.1} parent=11 // pred_fallthru
        _
    $region12: #{discriminator_forward.1} parent=5 // pred_fallthru
      _
    %p276 = scmp.lt.s32.totalorder %s17, 2
    // Predicated region
    $region45: #{discriminator_forward.1} parent=5 // pred_check
      %p277 = pneg %p276
    $region46: #{discriminator_forward.1} parent=5 // pred_check_branch
      %279 = sbr.rel (%p277) target = $region48
    $region47: #{discriminator_forward.1} parent=5 // pred_region
      // Predicated region
      $region49: #{discriminator_forward.1} parent=47 // pred_check
        %p280 = pneg %p37
      $region50: #{discriminator_forward.1} parent=47 // pred_check_branch
        %282 = sbr.rel (%p280) target = $region52
      $region51: #{discriminator_forward.1} parent=47 // pred_region
        %p283 = scmp.lt.s32.totalorder %s17, 1
        %s284 = scalar_select %p283, %s17, 1
        %s285 = smul.addr %s284, 72
        %s286 = smul.addr %s285, 4
        %s287 = scalar_lea.vmem %s0, %s286
      $region52: #{discriminator_forward.1} parent=47 // pred_fallthru
        _
    $region48: #{discriminator_forward.1} parent=5 // pred_fallthru
      _
    %p288 = scmp.le.s32.totalorder 1, %s17
    %p289 = scmp.lt.s32.totalorder %s17, 3
    %p290 = pnand %p288, %p289
    %p291 = pneg %p290
    // Predicated region
    $region53: #{discriminator_forward.1} parent=5 // pred_check
      _
    $region54: #{discriminator_forward.1} parent=5 // pred_check_branch
      %293 = sbr.rel (%p290) target = $region56
    $region55: #{discriminator_forward.1} parent=5 // pred_region
      %s294 = ssub.s32 %s17, 1
      %p295 = scmp.lt.s32.totalorder %s22, 1
      %s296 = scalar_select %p295, %s22, 1
      %s297 = smul.addr %s296, 72
      %s298 = smul.addr %s297, 4
      %s299 = scalar_lea.vmem %s0, %s298
      %p300 = pneg %p43
      %p301 = pneg %p40
      %p302 = pneg %p64
      %p303 = pneg %p61
      %p304 = pneg %p85
      %p305 = pneg %p82
      %p306 = pneg %p106
      %p307 = pneg %p103
      %p308 = pneg %p127
      %p309 = pneg %p124
      %p310 = pneg %p148
      %p311 = pneg %p145
      %p312 = pneg %p169
      %p313 = pneg %p166
      %p314 = pneg %p190
      %p315 = pneg %p187
      %p316 = pneg %p211
      %p317 = pneg %p208
      %p318 = pneg %p237
      %p319 = pneg %p234
      %p320 = scmp.lt.s32.totalorder %s22, 1
      %s321 = scalar_select %p320, %s22, 1
      %s322 = scalar_lea.vmem %s9, %s321
      %p323 = scmp.lt.s32.totalorder %s22, 1
      %s324 = scalar_select %p323, %s22, 1
      %s325 = smul.addr %s324, 72
      %s326 = smul.addr %s325, 4
      %s327 = scalar_lea.vmem %s0, %s326
      %p328 = scmp.lt.s32.totalorder %s22, 1
      %s329 = scalar_select %p328, %s22, 1
      %s330 = scalar_lea.vmem %s9, %s329
      %v332 = vld [vmem:[%s327] sm:$0xf]
      %v333 = vld [vmem:[%s327 + $0x4] sm:$0xf]
      %v334 = vld [vmem:[%s327 + $0x8] sm:$0xf]
      %v335 = vld [vmem:[%s327 + $0xc] sm:$0xf]
      %v336 = vld [vmem:[%s327 + $0x10] sm:$0xf]
      %v337 = vld [vmem:[%s327 + $0x14] sm:$0xf]
      %v338 = vld [vmem:[%s327 + $0x18] sm:$0xf]
      %v339 = vld [vmem:[%s327 + $0x1c] sm:$0xf]
      %v340 = vld [vmem:[%s327 + $0x20] sm:$0xf]
      %v341 = vld [vmem:[%s327 + $0x24] sm:$0xf]
      %v342 = vld [vmem:[%s327 + $0x28] sm:$0xf]
      %v343 = vld [vmem:[%s327 + $0x2c] sm:$0xf]
      %v344 = vld [vmem:[%s327 + $0x30] sm:$0xf]
      %v345 = vld [vmem:[%s327 + $0x34] sm:$0xf]
      %v346 = vld [vmem:[%s327 + $0x38] sm:$0xf]
      %v347 = vld [vmem:[%s327 + $0x3c] sm:$0xf]
      %v348 = vld [vmem:[%s327 + $0x40] sm:$0xf]
      %v349 = vld [vmem:[%s327 + $0x44] sm:$0xf]
      %v350 = vld [vmem:[%s327 + $0x48] sm:$0xf]
      %v351 = vld [vmem:[%s327 + $0x4c] sm:$0xf]
      %v352 = vld [vmem:[%s327 + $0x50] sm:$0xf]
      %v353 = vld [vmem:[%s327 + $0x54] sm:$0xf]
      %v354 = vld [vmem:[%s327 + $0x58] sm:$0xf]
      %v355 = vld [vmem:[%s327 + $0x5c] sm:$0xf]
      %v356 = vld [vmem:[%s327 + $0x60] sm:$0xf]
      %v357 = vld [vmem:[%s327 + $0x64] sm:$0xf]
      %v358 = vld [vmem:[%s327 + $0x68] sm:$0xf]
      %v359 = vld [vmem:[%s327 + $0x6c] sm:$0xf]
      %v360 = vld [vmem:[%s327 + $0x70] sm:$0xf]
      %v361 = vld [vmem:[%s327 + $0x74] sm:$0xf]
      %v362 = vld [vmem:[%s327 + $0x78] sm:$0xf]
      %v363 = vld [vmem:[%s327 + $0x7c] sm:$0xf]
      %v364 = vld [vmem:[%s327 + $0x80] sm:$0xf]
      %v365 = vld [vmem:[%s327 + $0x84] sm:$0xf]
      %v366 = vld [vmem:[%s327 + $0x88] sm:$0xf]
      %v367 = vld [vmem:[%s327 + $0x8c] sm:$0xf]
      %v368 = vld [vmem:[%s327 + $0x90] sm:$0xf]
      %v369 = vld [vmem:[%s327 + $0x94] sm:$0xf]
      %v370 = vld [vmem:[%s327 + $0x98] sm:$0xf]
      %v371 = vld [vmem:[%s327 + $0x9c] sm:$0xf]
      %v372 = vld [vmem:[%s327 + $0xa0] sm:$0xf]
      %v373 = vld [vmem:[%s327 + $0xa4] sm:$0xf]
      %v374 = vld [vmem:[%s327 + $0xa8] sm:$0xf]
      %v375 = vld [vmem:[%s327 + $0xac] sm:$0xf]
      %v376 = vld [vmem:[%s327 + $0xb0] sm:$0xf]
      %v377 = vld [vmem:[%s327 + $0xb4] sm:$0xf]
      %v378 = vld [vmem:[%s327 + $0xb8] sm:$0xf]
      %v379 = vld [vmem:[%s327 + $0xbc] sm:$0xf]
      %v380 = vld [vmem:[%s327 + $0xc0] sm:$0xf]
      %v381 = vld [vmem:[%s327 + $0xc4] sm:$0xf]
      %v382 = vld [vmem:[%s327 + $0xc8] sm:$0xf]
      %v383 = vld [vmem:[%s327 + $0xcc] sm:$0xf]
      %v384 = vld [vmem:[%s327 + $0xd0] sm:$0xf]
      %v385 = vld [vmem:[%s327 + $0xd4] sm:$0xf]
      %v386 = vld [vmem:[%s327 + $0xd8] sm:$0xf]
      %v387 = vld [vmem:[%s327 + $0xdc] sm:$0xf]
      %v388 = vld [vmem:[%s327 + $0xe0] sm:$0xf]
      %v389 = vld [vmem:[%s327 + $0xe4] sm:$0xf]
      %v390 = vld [vmem:[%s327 + $0xe8] sm:$0xf]
      %v391 = vld [vmem:[%s327 + $0xec] sm:$0xf]
      %v392 = vld [vmem:[%s327 + $0xf0] sm:$0xf]
      %v393 = vld [vmem:[%s327 + $0xf4] sm:$0xf]
      %v394 = vld [vmem:[%s327 + $0xf8] sm:$0xf]
      %v395 = vld [vmem:[%s327 + $0xfc] sm:$0xf]
      %v396 = vld [vmem:[%s327 + $0x100] sm:$0xf]
      %v397 = vld [vmem:[%s327 + $0x104] sm:$0xf]
      %v398 = vld [vmem:[%s327 + $0x108] sm:$0xf]
      %v399 = vld [vmem:[%s327 + $0x10c] sm:$0xf]
      %v400 = vld [vmem:[%s327 + $0x110] sm:$0xf]
      %v401 = vld [vmem:[%s327 + $0x114] sm:$0xf]
      %v402 = vld [vmem:[%s327 + $0x118] sm:$0xf]
      %v403 = vld [vmem:[%s327 + $0x11c] sm:$0xf]
      %v404 = vld [vmem:[%s1] sm:$0xf]
      %v405 = vld [vmem:[%s1 + $0x4] sm:$0xf]
      %v406 = vld [vmem:[%s1 + $0x8] sm:$0xf]
      %v407 = vld [vmem:[%s1 + $0xc] sm:$0x1]
      %v480 = vunpack.c.l.b16 %v332
      %v481 = vunpack.c.l.b16 %v333
      %v482 = vunpack.c.l.b16 %v334
      %v483 = vunpack.c.l.b16 %v335
      %v484 = vunpack.c.l.b16 %v336
      %v485 = vunpack.c.l.b16 %v337
      %v486 = vunpack.c.l.b16 %v338
      %v487 = vunpack.c.l.b16 %v339
      %v488 = vunpack.c.l.b16 %v340
      %v489 = vunpack.c.l.b16 %v341
      %v490 = vunpack.c.l.b16 %v342
      %v491 = vunpack.c.l.b16 %v343
      %v492 = vunpack.c.l.b16 %v344
      %v493 = vunpack.c.l.b16 %v345
      %v494 = vunpack.c.l.b16 %v346
      %v495 = vunpack.c.l.b16 %v347
      %v496 = vunpack.c.l.b16 %v348
      %v497 = vunpack.c.l.b16 %v349
      %v498 = vunpack.c.l.b16 %v350
      %v499 = vunpack.c.l.b16 %v351
      %v500 = vunpack.c.l.b16 %v352
      %v501 = vunpack.c.l.b16 %v353
      %v502 = vunpack.c.l.b16 %v354
      %v503 = vunpack.c.l.b16 %v355
      %v504 = vunpack.c.l.b16 %v356
      %v505 = vunpack.c.l.b16 %v357
      %v506 = vunpack.c.l.b16 %v358
      %v507 = vunpack.c.l.b16 %v359
      %v508 = vunpack.c.l.b16 %v360
      %v509 = vunpack.c.l.b16 %v361
      %v510 = vunpack.c.l.b16 %v362
      %v511 = vunpack.c.l.b16 %v363
      %v512 = vunpack.c.l.b16 %v364
      %v513 = vunpack.c.l.b16 %v365
      %v514 = vunpack.c.l.b16 %v366
      %v515 = vunpack.c.l.b16 %v367
      %v516 = vunpack.c.l.b16 %v368
      %v517 = vunpack.c.l.b16 %v369
      %v518 = vunpack.c.l.b16 %v370
      %v519 = vunpack.c.l.b16 %v371
      %v520 = vunpack.c.l.b16 %v372
      %v521 = vunpack.c.l.b16 %v373
      %v522 = vunpack.c.l.b16 %v374
      %v523 = vunpack.c.l.b16 %v375
      %v524 = vunpack.c.l.b16 %v376
      %v525 = vunpack.c.l.b16 %v377
      %v526 = vunpack.c.l.b16 %v378
      %v527 = vunpack.c.l.b16 %v379
      %v528 = vunpack.c.l.b16 %v380
      %v529 = vunpack.c.l.b16 %v381
      %v530 = vunpack.c.l.b16 %v382
      %v531 = vunpack.c.l.b16 %v383
      %v532 = vunpack.c.l.b16 %v384
      %v533 = vunpack.c.l.b16 %v385
      %v534 = vunpack.c.l.b16 %v386
      %v535 = vunpack.c.l.b16 %v387
      %v536 = vunpack.c.l.b16 %v388
      %v537 = vunpack.c.l.b16 %v389
      %v538 = vunpack.c.l.b16 %v390
      %v539 = vunpack.c.l.b16 %v391
      %v540 = vunpack.c.l.b16 %v392
      %v541 = vunpack.c.l.b16 %v393
      %v542 = vunpack.c.l.b16 %v394
      %v543 = vunpack.c.l.b16 %v395
      %v544 = vunpack.c.l.b16 %v396
      %v545 = vunpack.c.l.b16 %v397
      %v546 = vunpack.c.l.b16 %v398
      %v547 = vunpack.c.l.b16 %v399
      %v548 = vunpack.c.l.b16 %v400
      %v549 = vunpack.c.l.b16 %v401
      %v550 = vunpack.c.l.b16 %v402
      %v551 = vunpack.c.l.b16 %v403
      %v552 = vpack.c.b16 %v481, %v480
      %v553 = vpack.c.b16 %v483, %v482
      %v554 = vpack.c.b16 %v485, %v484
      %v555 = vpack.c.b16 %v487, %v486
      %v556 = vpack.c.b16 %v489, %v488
      %v557 = vpack.c.b16 %v491, %v490
      %v558 = vpack.c.b16 %v493, %v492
      %v559 = vpack.c.b16 %v495, %v494
      %v560 = vpack.c.b16 %v497, %v496
      %v561 = vpack.c.b16 %v499, %v498
      %v562 = vpack.c.b16 %v501, %v500
      %v563 = vpack.c.b16 %v503, %v502
      %v564 = vpack.c.b16 %v505, %v504
      %v565 = vpack.c.b16 %v507, %v506
      %v566 = vpack.c.b16 %v509, %v508
      %v567 = vpack.c.b16 %v511, %v510
      %v568 = vpack.c.b16 %v513, %v512
      %v569 = vpack.c.b16 %v515, %v514
      %v570 = vpack.c.b16 %v517, %v516
      %v571 = vpack.c.b16 %v519, %v518
      %v572 = vpack.c.b16 %v521, %v520
      %v573 = vpack.c.b16 %v523, %v522
      %v574 = vpack.c.b16 %v525, %v524
      %v575 = vpack.c.b16 %v527, %v526
      %v576 = vpack.c.b16 %v529, %v528
      %v577 = vpack.c.b16 %v531, %v530
      %v578 = vpack.c.b16 %v533, %v532
      %v579 = vpack.c.b16 %v535, %v534
      %v580 = vpack.c.b16 %v537, %v536
      %v581 = vpack.c.b16 %v539, %v538
      %v582 = vpack.c.b16 %v541, %v540
      %v583 = vpack.c.b16 %v543, %v542
      %v584 = vpack.c.b16 %v545, %v544
      %v585 = vpack.c.b16 %v547, %v546
      %v586 = vpack.c.b16 %v549, %v548
      %v587 = vpack.c.b16 %v551, %v550
      %v592 = vunpack.c.l.b16 %v404
      %v593 = vunpack.c.l.b16 %v405
      %v594 = vunpack.c.l.b16 %v406
      %v595 = vunpack.c.l.b16 %v407
      %v596 = vpack.c.b16 %v593, %v592
      %v597 = vpack.c.b16 %v595, %v594
      %vm599 = vcmask 203776
      %v601 = vsel %vm599, %v552, 0
      %v604 = vsel %vm599, %v553, 0
      %v607 = vsel %vm599, %v554, 0
      %v610 = vsel %vm599, %v555, 0
      %v613 = vsel %vm599, %v556, 0
      %v616 = vsel %vm599, %v557, 0
      %v619 = vsel %vm599, %v558, 0
      %v622 = vsel %vm599, %v559, 0
      %v625 = vsel %vm599, %v560, 0
      %v628 = vsel %vm599, %v561, 0
      %v631 = vsel %vm599, %v562, 0
      %v634 = vsel %vm599, %v563, 0
      %v637 = vsel %vm599, %v564, 0
      %v640 = vsel %vm599, %v565, 0
      %v643 = vsel %vm599, %v566, 0
      %v646 = vsel %vm599, %v567, 0
      %v649 = vsel %vm599, %v568, 0
      %v652 = vsel %vm599, %v569, 0
      %v655 = vsel %vm599, %v570, 0
      %v658 = vsel %vm599, %v571, 0
      %v661 = vsel %vm599, %v572, 0
      %v664 = vsel %vm599, %v573, 0
      %v667 = vsel %vm599, %v574, 0
      %v670 = vsel %vm599, %v575, 0
      %v673 = vsel %vm599, %v576, 0
      %v676 = vsel %vm599, %v577, 0
      %v679 = vsel %vm599, %v578, 0
      %v682 = vsel %vm599, %v579, 0
      %v685 = vsel %vm599, %v580, 0
      %v688 = vsel %vm599, %v581, 0
      %v691 = vsel %vm599, %v582, 0
      %v694 = vsel %vm599, %v583, 0
      %v697 = vsel %vm599, %v584, 0
      %v700 = vsel %vm599, %v585, 0
      %v703 = vsel %vm599, %v586, 0
      %v706 = vsel %vm599, %v587, 0
      %vm708 = vcmask 1043456
      %vm709 = vcmask 1044480
      %v710 = vsel %vm708, 4294967295, 65535
      %v711 = vsel %vm709, %v710, 0
      %v713 = vand.u32 %v597, %v711
      %715 = vmatprep.subr.bf16.mxu0 0
      %716 = vmatpush1.bf16.msra.mxu0 %v596
      %717 = vmatprep.subr.bf16.mxu0 0
      %718 = vmatpush1.bf16.msra.mxu0 %v713
      %719 = vmatprep.subr.bf16.mxu0 0
      %720 = vmatpush1.bf16.msra.mxu0 0
      %721 = vmatprep.subr.bf16.mxu0 0
      %722 = vmatpush1.bf16.msra.mxu0 0
      %723 = vmatprep.subr.bf16.mxu0 0
      %724 = vmatpush1.bf16.msra.mxu0 0
      %725 = vmatprep.subr.bf16.mxu0 0
      %726 = vmatpush1.bf16.msra.mxu0 0
      %727 = vmatprep.subr.bf16.mxu0 0
      %728 = vmatpush1.bf16.msra.mxu0 0
      %729 = vmatprep.subr.bf16.mxu0 0
      %730 = vmatpush1.bf16.msra.mxu0 0
      %731 = vmatprep.subr.bf16.mxu0 0
      %732 = vmatpush1.bf16.msra.mxu0 0
      %733 = vmatprep.subr.bf16.mxu0 0
      %734 = vmatpush1.bf16.msra.mxu0 0
      %735 = vmatprep.subr.bf16.mxu0 0
      %736 = vmatpush1.bf16.msra.mxu0 0
      %737 = vmatprep.subr.bf16.mxu0 0
      %738 = vmatpush1.bf16.msra.mxu0 0
      %739 = vmatprep.subr.bf16.mxu0 0
      %740 = vmatpush1.bf16.msra.mxu0 0
      %741 = vmatprep.subr.bf16.mxu0 0
      %742 = vmatpush1.bf16.msra.mxu0 0
      %743 = vmatprep.subr.bf16.mxu0 0
      %744 = vmatpush1.bf16.msra.mxu0 0
      %745 = vmatprep.subr.bf16.mxu0 0
      %746 = vmatpush1.bf16.msra.mxu0 0
      %747 = vmatprep.mubr.bf16.mxu0 0
      %748 = vmatmul.mubr.bf16.gmra.mrb[0].mxu0 %v601
      %v749 = vpop.f32.mrb[0].mxu0
      %v750 = vadd.f32 0.0, %v749
      %v751 = vpop.f32.mrb[0].mxu0
      %v752 = vpop.f32.mrb[0].mxu0
      %v753 = vadd.f32 0.0, %v752
      %v754 = vpop.f32.mrb[0].mxu0
      %755 = vmatprep.mubr.bf16.mxu0 0
      %756 = vmatmul.mubr.bf16.gmra.mrb[0].mxu0 %v604
      %v757 = vpop.f32.mrb[0].mxu0
      %v758 = vadd.f32 0.0, %v757
      %v759 = vpop.f32.mrb[0].mxu0
      %v760 = vpop.f32.mrb[0].mxu0
      %v761 = vadd.f32 0.0, %v760
      %v762 = vpop.f32.mrb[0].mxu0
      %763 = vmatprep.mubr.bf16.mxu0 0
      %764 = vmatmul.mubr.bf16.gmra.mrb[0].mxu0 %v607
      %v765 = vpop.f32.mrb[0].mxu0
      %v766 = vadd.f32 0.0, %v765
      %v767 = vpop.f32.mrb[0].mxu0
      %v768 = vpop.f32.mrb[0].mxu0
      %v769 = vadd.f32 0.0, %v768
      %v770 = vpop.f32.mrb[0].mxu0
      %771 = vmatprep.mubr.bf16.mxu0 0
      %772 = vmatmul.mubr.bf16.gmra.mrb[0].mxu0 %v610
      %v773 = vpop.f32.mrb[0].mxu0
      %v774 = vadd.f32 0.0, %v773
      %v775 = vpop.f32.mrb[0].mxu0
      %v776 = vpop.f32.mrb[0].mxu0
      %v777 = vadd.f32 0.0, %v776
      %v778 = vpop.f32.mrb[0].mxu0
      %779 = vmatprep.mubr.bf16.mxu0 0
      %780 = vmatmul.mubr.bf16.gmra.mrb[0].mxu0 %v613
      %v781 = vpop.f32.mrb[0].mxu0
      %v782 = vadd.f32 0.0, %v781
      %v783 = vpop.f32.mrb[0].mxu0
      %v784 = vpop.f32.mrb[0].mxu0
      %v785 = vadd.f32 0.0, %v784
      %v786 = vpop.f32.mrb[0].mxu0
      %787 = vmatprep.mubr.bf16.mxu0 0
      %788 = vmatmul.mubr.bf16.gmra.mrb[0].mxu0 %v616
      %v789 = vpop.f32.mrb[0].mxu0
      %v790 = vadd.f32 0.0, %v789
      %v791 = vpop.f32.mrb[0].mxu0
      %v792 = vpop.f32.mrb[0].mxu0
      %v793 = vadd.f32 0.0, %v792
      %v794 = vpop.f32.mrb[0].mxu0
      %795 = vmatprep.mubr.bf16.mxu0 0
      %796 = vmatmul.mubr.bf16.gmra.mrb[0].mxu0 %v619
      %v797 = vpop.f32.mrb[0].mxu0
      %v798 = vadd.f32 0.0, %v797
      %v799 = vpop.f32.mrb[0].mxu0
      %v800 = vpop.f32.mrb[0].mxu0
      %v801 = vadd.f32 0.0, %v800
      %v802 = vpop.f32.mrb[0].mxu0
      %803 = vmatprep.mubr.bf16.mxu0 0
      %804 = vmatmul.mubr.bf16.gmra.mrb[0].mxu0 %v622
      %v805 = vpop.f32.mrb[0].mxu0
      %v806 = vadd.f32 0.0, %v805
      %v807 = vpop.f32.mrb[0].mxu0
      %v808 = vpop.f32.mrb[0].mxu0
      %v809 = vadd.f32 0.0, %v808
      %v810 = vpop.f32.mrb[0].mxu0
      %811 = vmatprep.mubr.bf16.mxu0 0
      %812 = vmatmul.mubr.bf16.gmra.mrb[0].mxu0 %v625
      %v813 = vpop.f32.mrb[0].mxu0
      %v814 = vadd.f32 0.0, %v813
      %v815 = vpop.f32.mrb[0].mxu0
      %v816 = vpop.f32.mrb[0].mxu0
      %v817 = vadd.f32 0.0, %v816
      %v818 = vpop.f32.mrb[0].mxu0
      %819 = vmatprep.mubr.bf16.mxu0 0
      %820 = vmatmul.mubr.bf16.gmra.mrb[0].mxu0 %v628
      %v821 = vpop.f32.mrb[0].mxu0
      %v822 = vadd.f32 0.0, %v821
      %v823 = vpop.f32.mrb[0].mxu0
      %v824 = vpop.f32.mrb[0].mxu0
      %v825 = vadd.f32 0.0, %v824
      %v826 = vpop.f32.mrb[0].mxu0
      %827 = vmatprep.mubr.bf16.mxu0 0
      %828 = vmatmul.mubr.bf16.gmra.mrb[0].mxu0 %v631
      %v829 = vpop.f32.mrb[0].mxu0
      %v830 = vadd.f32 0.0, %v829
      %v831 = vpop.f32.mrb[0].mxu0
      %v832 = vpop.f32.mrb[0].mxu0
      %v833 = vadd.f32 0.0, %v832
      %v834 = vpop.f32.mrb[0].mxu0
      %835 = vmatprep.mubr.bf16.mxu0 0
      %836 = vmatmul.mubr.bf16.gmra.mrb[0].mxu0 %v634
      %v837 = vpop.f32.mrb[0].mxu0
      %v838 = vadd.f32 0.0, %v837
      %v839 = vpop.f32.mrb[0].mxu0
      %v840 = vpop.f32.mrb[0].mxu0
      %v841 = vadd.f32 0.0, %v840
      %v842 = vpop.f32.mrb[0].mxu0
      %843 = vmatprep.mubr.bf16.mxu0 0
      %844 = vmatmul.mubr.bf16.gmra.mrb[0].mxu0 %v637
      %v845 = vpop.f32.mrb[0].mxu0
      %v846 = vadd.f32 0.0, %v845
      %v847 = vpop.f32.mrb[0].mxu0
      %v848 = vpop.f32.mrb[0].mxu0
      %v849 = vadd.f32 0.0, %v848
      %v850 = vpop.f32.mrb[0].mxu0
      %851 = vmatprep.mubr.bf16.mxu0 0
      %852 = vmatmul.mubr.bf16.gmra.mrb[0].mxu0 %v640
      %v853 = vpop.f32.mrb[0].mxu0
      %v854 = vadd.f32 0.0, %v853
      %v855 = vpop.f32.mrb[0].mxu0
      %v856 = vpop.f32.mrb[0].mxu0
      %v857 = vadd.f32 0.0, %v856
      %v858 = vpop.f32.mrb[0].mxu0
      %859 = vmatprep.mubr.bf16.mxu0 0
      %860 = vmatmul.mubr.bf16.gmra.mrb[0].mxu0 %v643
      %v861 = vpop.f32.mrb[0].mxu0
      %v862 = vadd.f32 0.0, %v861
      %v863 = vpop.f32.mrb[0].mxu0
      %v864 = vpop.f32.mrb[0].mxu0
      %v865 = vadd.f32 0.0, %v864
      %v866 = vpop.f32.mrb[0].mxu0
      %867 = vmatprep.mubr.bf16.mxu0 0
      %868 = vmatmul.mubr.bf16.gmra.mrb[0].mxu0 %v646
      %v869 = vpop.f32.mrb[0].mxu0
      %v870 = vadd.f32 0.0, %v869
      %v871 = vpop.f32.mrb[0].mxu0
      %v872 = vpop.f32.mrb[0].mxu0
      %v873 = vadd.f32 0.0, %v872
      %v874 = vpop.f32.mrb[0].mxu0
      %875 = vmatprep.mubr.bf16.mxu0 0
      %876 = vmatmul.mubr.bf16.gmra.mrb[0].mxu0 %v649
      %v877 = vpop.f32.mrb[0].mxu0
      %v878 = vadd.f32 0.0, %v877
      %v879 = vpop.f32.mrb[0].mxu0
      %v880 = vpop.f32.mrb[0].mxu0
      %v881 = vadd.f32 0.0, %v880
      %v882 = vpop.f32.mrb[0].mxu0
      %883 = vmatprep.mubr.bf16.mxu0 0
      %884 = vmatmul.mubr.bf16.gmra.mrb[0].mxu0 %v652
      %v885 = vpop.f32.mrb[0].mxu0
      %v886 = vadd.f32 0.0, %v885
      %v887 = vpop.f32.mrb[0].mxu0
      %v888 = vpop.f32.mrb[0].mxu0
      %v889 = vadd.f32 0.0, %v888
      %v890 = vpop.f32.mrb[0].mxu0
      %891 = vmatprep.mubr.bf16.mxu0 0
      %892 = vmatmul.mubr.bf16.gmra.mrb[0].mxu0 %v655
      %v893 = vpop.f32.mrb[0].mxu0
      %v894 = vadd.f32 0.0, %v893
      %v895 = vpop.f32.mrb[0].mxu0
      %v896 = vpop.f32.mrb[0].mxu0
      %v897 = vadd.f32 0.0, %v896
      %v898 = vpop.f32.mrb[0].mxu0
      %899 = vmatprep.mubr.bf16.mxu0 0
      %900 = vmatmul.mubr.bf16.gmra.mrb[0].mxu0 %v658
      %v901 = vpop.f32.mrb[0].mxu0
      %v902 = vadd.f32 0.0, %v901
      %v903 = vpop.f32.mrb[0].mxu0
      %v904 = vpop.f32.mrb[0].mxu0
      %v905 = vadd.f32 0.0, %v904
      %v906 = vpop.f32.mrb[0].mxu0
      %907 = vmatprep.mubr.bf16.mxu0 0
      %908 = vmatmul.mubr.bf16.gmra.mrb[0].mxu0 %v661
      %v909 = vpop.f32.mrb[0].mxu0
      %v910 = vadd.f32 0.0, %v909
      %v911 = vpop.f32.mrb[0].mxu0
      %v912 = vpop.f32.mrb[0].mxu0
      %v913 = vadd.f32 0.0, %v912
      %v914 = vpop.f32.mrb[0].mxu0
      %915 = vmatprep.mubr.bf16.mxu0 0
      %916 = vmatmul.mubr.bf16.gmra.mrb[0].mxu0 %v664
      %v917 = vpop.f32.mrb[0].mxu0
      %v918 = vadd.f32 0.0, %v917
      %v919 = vpop.f32.mrb[0].mxu0
      %v920 = vpop.f32.mrb[0].mxu0
      %v921 = vadd.f32 0.0, %v920
      %v922 = vpop.f32.mrb[0].mxu0
      %923 = vmatprep.mubr.bf16.mxu0 0
      %924 = vmatmul.mubr.bf16.gmra.mrb[0].mxu0 %v667
      %v925 = vpop.f32.mrb[0].mxu0
      %v926 = vadd.f32 0.0, %v925
      %v927 = vpop.f32.mrb[0].mxu0
      %v928 = vpop.f32.mrb[0].mxu0
      %v929 = vadd.f32 0.0, %v928
      %v930 = vpop.f32.mrb[0].mxu0
      %931 = vmatprep.mubr.bf16.mxu0 0
      %932 = vmatmul.mubr.bf16.gmra.mrb[0].mxu0 %v670
      %v933 = vpop.f32.mrb[0].mxu0
      %v934 = vadd.f32 0.0, %v933
      %v935 = vpop.f32.mrb[0].mxu0
      %v936 = vpop.f32.mrb[0].mxu0
      %v937 = vadd.f32 0.0, %v936
      %v938 = vpop.f32.mrb[0].mxu0
      %939 = vmatprep.mubr.bf16.mxu0 0
      %940 = vmatmul.mubr.bf16.gmra.mrb[0].mxu0 %v673
      %v941 = vpop.f32.mrb[0].mxu0
      %v942 = vadd.f32 0.0, %v941
      %v943 = vpop.f32.mrb[0].mxu0
      %v944 = vpop.f32.mrb[0].mxu0
      %v945 = vadd.f32 0.0, %v944
      %v946 = vpop.f32.mrb[0].mxu0
      %947 = vmatprep.mubr.bf16.mxu0 0
      %948 = vmatmul.mubr.bf16.gmra.mrb[0].mxu0 %v676
      %v949 = vpop.f32.mrb[0].mxu0
      %v950 = vadd.f32 0.0, %v949
      %v951 = vpop.f32.mrb[0].mxu0
      %v952 = vpop.f32.mrb[0].mxu0
      %v953 = vadd.f32 0.0, %v952
      %v954 = vpop.f32.mrb[0].mxu0
      %955 = vmatprep.mubr.bf16.mxu0 0
      %956 = vmatmul.mubr.bf16.gmra.mrb[0].mxu0 %v679
      %v957 = vpop.f32.mrb[0].mxu0
      %v958 = vadd.f32 0.0, %v957
      %v959 = vpop.f32.mrb[0].mxu0
      %v960 = vpop.f32.mrb[0].mxu0
      %v961 = vadd.f32 0.0, %v960
      %v962 = vpop.f32.mrb[0].mxu0
      %963 = vmatprep.mubr.bf16.mxu0 0
      %964 = vmatmul.mubr.bf16.gmra.mrb[0].mxu0 %v682
      %v965 = vpop.f32.mrb[0].mxu0
      %v966 = vadd.f32 0.0, %v965
      %v967 = vpop.f32.mrb[0].mxu0
      %v968 = vpop.f32.mrb[0].mxu0
      %v969 = vadd.f32 0.0, %v968
      %v970 = vpop.f32.mrb[0].mxu0
      %971 = vmatprep.mubr.bf16.mxu0 0
      %972 = vmatmul.mubr.bf16.gmra.mrb[0].mxu0 %v685
      %v973 = vpop.f32.mrb[0].mxu0
      %v974 = vadd.f32 0.0, %v973
      %v975 = vpop.f32.mrb[0].mxu0
      %v976 = vpop.f32.mrb[0].mxu0
      %v977 = vadd.f32 0.0, %v976
      %v978 = vpop.f32.mrb[0].mxu0
      %979 = vmatprep.mubr.bf16.mxu0 0
      %980 = vmatmul.mubr.bf16.gmra.mrb[0].mxu0 %v688
      %v981 = vpop.f32.mrb[0].mxu0
      %v982 = vadd.f32 0.0, %v981
      %v983 = vpop.f32.mrb[0].mxu0
      %v984 = vpop.f32.mrb[0].mxu0
      %v985 = vadd.f32 0.0, %v984
      %v986 = vpop.f32.mrb[0].mxu0
      %987 = vmatprep.mubr.bf16.mxu0 0
      %988 = vmatmul.mubr.bf16.gmra.mrb[0].mxu0 %v691
      %v989 = vpop.f32.mrb[0].mxu0
      %v990 = vadd.f32 0.0, %v989
      %v991 = vpop.f32.mrb[0].mxu0
      %v992 = vpop.f32.mrb[0].mxu0
      %v993 = vadd.f32 0.0, %v992
      %v994 = vpop.f32.mrb[0].mxu0
      %995 = vmatprep.mubr.bf16.mxu0 0
      %996 = vmatmul.mubr.bf16.gmra.mrb[0].mxu0 %v694
      %v997 = vpop.f32.mrb[0].mxu0
      %v998 = vadd.f32 0.0, %v997
      %v999 = vpop.f32.mrb[0].mxu0
      %v1000 = vpop.f32.mrb[0].mxu0
      %v1001 = vadd.f32 0.0, %v1000
      %v1002 = vpop.f32.mrb[0].mxu0
      %1003 = vmatprep.mubr.bf16.mxu0 0
      %1004 = vmatmul.mubr.bf16.gmra.mrb[0].mxu0 %v697
      %v1005 = vpop.f32.mrb[0].mxu0
      %v1006 = vadd.f32 0.0, %v1005
      %v1007 = vpop.f32.mrb[0].mxu0
      %v1008 = vpop.f32.mrb[0].mxu0
      %v1009 = vadd.f32 0.0, %v1008
      %v1010 = vpop.f32.mrb[0].mxu0
      %1011 = vmatprep.mubr.bf16.mxu0 0
      %1012 = vmatmul.mubr.bf16.gmra.mrb[0].mxu0 %v700
      %v1013 = vpop.f32.mrb[0].mxu0
      %v1014 = vadd.f32 0.0, %v1013
      %v1015 = vpop.f32.mrb[0].mxu0
      %v1016 = vpop.f32.mrb[0].mxu0
      %v1017 = vadd.f32 0.0, %v1016
      %v1018 = vpop.f32.mrb[0].mxu0
      %1019 = vmatprep.mubr.bf16.mxu0 0
      %1020 = vmatmul.mubr.bf16.gmra.mrb[0].mxu0 %v703
      %v1021 = vpop.f32.mrb[0].mxu0
      %v1022 = vadd.f32 0.0, %v1021
      %v1023 = vpop.f32.mrb[0].mxu0
      %v1024 = vpop.f32.mrb[0].mxu0
      %v1025 = vadd.f32 0.0, %v1024
      %v1026 = vpop.f32.mrb[0].mxu0
      %1027 = vmatprep.mubr.bf16.mxu0 0
      %1028 = vmatmul.mubr.bf16.gmra.mrb[0].mxu0 %v706
      %v1029 = vpop.f32.mrb[0].mxu0
      %v1030 = vadd.f32 0.0, %v1029
      %v1031 = vpop.f32.mrb[0].mxu0
      %v1032 = vpop.f32.mrb[0].mxu0
      %v1033 = vadd.f32 0.0, %v1032
      %v1034 = vpop.f32.mrb[0].mxu0
      %1035 = vdwg.mxu0
      %v1036 = vmax.f32 %v750, %v822
      %v1037 = vmax.f32 %v753, %v825
      %v1038 = vmax.f32 %v758, %v830
      %v1039 = vmax.f32 %v761, %v833
      %v1040 = vmax.f32 %v766, %v838
      %v1041 = vmax.f32 %v769, %v841
      %v1042 = vmax.f32 %v774, %v846
      %v1043 = vmax.f32 %v777, %v849
      %v1044 = vmax.f32 %v782, %v854
      %v1045 = vmax.f32 %v785, %v857
      %v1046 = vmax.f32 %v790, %v862
      %v1047 = vmax.f32 %v793, %v865
      %v1048 = vmax.f32 %v798, %v870
      %v1049 = vmax.f32 %v801, %v873
      %v1050 = vmax.f32 %v806, %v878
      %v1051 = vmax.f32 %v809, %v881
      %v1052 = vmax.f32 %v814, %v886
      %v1053 = vmax.f32 %v817, %v889
      %v1054 = vmax.f32 %v894, %v966
      %v1055 = vmax.f32 %v897, %v969
      %v1056 = vmax.f32 %v902, %v974
      %v1057 = vmax.f32 %v905, %v977
      %v1058 = vmax.f32 %v910, %v982
      %v1059 = vmax.f32 %v913, %v985
      %v1060 = vmax.f32 %v918, %v990
      %v1061 = vmax.f32 %v921, %v993
      %v1062 = vmax.f32 %v926, %v998
      %v1063 = vmax.f32 %v929, %v1001
      %v1064 = vmax.f32 %v934, %v1006
      %v1065 = vmax.f32 %v937, %v1009
      %v1066 = vmax.f32 %v942, %v1014
      %v1067 = vmax.f32 %v945, %v1017
      %v1068 = vmax.f32 %v950, %v1022
      %v1069 = vmax.f32 %v953, %v1025
      %v1070 = vmax.f32 %v958, %v1030
      %v1071 = vmax.f32 %v961, %v1033
      %v1072 = vmax.f32 %v1036, %v1054
      %v1073 = vmax.f32 %v1037, %v1055
      %v1074 = vmax.f32 %v1038, %v1056
      %v1075 = vmax.f32 %v1039, %v1057
      %v1076 = vmax.f32 %v1040, %v1058
      %v1077 = vmax.f32 %v1041, %v1059
      %v1078 = vmax.f32 %v1042, %v1060
      %v1079 = vmax.f32 %v1043, %v1061
      %v1080 = vmax.f32 %v1044, %v1062
      %v1081 = vmax.f32 %v1045, %v1063
      %v1082 = vmax.f32 %v1046, %v1064
      %v1083 = vmax.f32 %v1047, %v1065
      %v1084 = vmax.f32 %v1048, %v1066
      %v1085 = vmax.f32 %v1049, %v1067
      %v1086 = vmax.f32 %v1050, %v1068
      %v1087 = vmax.f32 %v1051, %v1069
      %v1088 = vmax.f32 %v1052, %v1070
      %v1089 = vmax.f32 %v1053, %v1071
      %v1090 = vld [vmem:[%s2] sm:$0x1]
      %v1092 = vlaneseq
      %v1093 = vshrl.u32 %v1092, 7
      %v1094 = vsub.s32 0, %v1093
      %v1095 = vrot.slane %v1090, %v1094
      %v1097 = vadd.f32 %v1072, %v1095
      %v1098 = vadd.f32 %v1073, %v1095
      %v1099 = vadd.f32 %v1074, %v1095
      %v1100 = vadd.f32 %v1075, %v1095
      %v1101 = vadd.f32 %v1076, %v1095
      %v1102 = vadd.f32 %v1077, %v1095
      %v1103 = vadd.f32 %v1078, %v1095
      %v1104 = vadd.f32 %v1079, %v1095
      %v1105 = vadd.f32 %v1080, %v1095
      %v1106 = vadd.f32 %v1081, %v1095
      %v1107 = vadd.f32 %v1082, %v1095
      %v1108 = vadd.f32 %v1083, %v1095
      %v1109 = vadd.f32 %v1084, %v1095
      %v1110 = vadd.f32 %v1085, %v1095
      %v1111 = vadd.f32 %v1086, %v1095
      %v1112 = vadd.f32 %v1087, %v1095
      %v1113 = vadd.f32 %v1088, %v1095
      %v1114 = vadd.f32 %v1089, %v1095
      %v1115 = vmax.f32 %v1097, 0.0
      %v1116 = vmax.f32 %v1098, 0.0
      %v1117 = vmax.f32 %v1099, 0.0
      %v1118 = vmax.f32 %v1100, 0.0
      %v1119 = vmax.f32 %v1101, 0.0
      %v1120 = vmax.f32 %v1102, 0.0
      %v1121 = vmax.f32 %v1103, 0.0
      %v1122 = vmax.f32 %v1104, 0.0
      %v1123 = vmax.f32 %v1105, 0.0
      %v1124 = vmax.f32 %v1106, 0.0
      %v1125 = vmax.f32 %v1107, 0.0
      %v1126 = vmax.f32 %v1108, 0.0
      %v1127 = vmax.f32 %v1109, 0.0
      %v1128 = vmax.f32 %v1110, 0.0
      %v1129 = vmax.f32 %v1111, 0.0
      %v1130 = vmax.f32 %v1112, 0.0
      %v1131 = vmax.f32 %v1113, 0.0
      %v1132 = vmax.f32 %v1114, 0.0
      %v1133 = vpack.c.bf16 %v1116, %v1115
      %v1134 = vpack.c.bf16 %v1118, %v1117
      %v1135 = vpack.c.bf16 %v1120, %v1119
      %v1136 = vpack.c.bf16 %v1122, %v1121
      %v1137 = vpack.c.bf16 %v1124, %v1123
      %v1138 = vpack.c.bf16 %v1126, %v1125
      %v1139 = vpack.c.bf16 %v1128, %v1127
      %v1140 = vpack.c.bf16 %v1130, %v1129
      %v1141 = vpack.c.bf16 %v1132, %v1131
      %v1151 = vcombine.high %v1133, %v1133
      %v1153 = vunpack.c.l.s4 1983009808
      %v1154 = vunpack.c.0.s8 %v1153
      %v1155 = vlaneseq
      %v1156 = vshrl.u32 %v1155, 7
      %v1157 = vsub.s32 %v1154, %v1156
      %v1158 = vrot.slane %v1133, %v1157
      %v1160 = vunpack.c.l.s4 1983009808
      %v1161 = vunpack.c.0.s8 %v1160
      %v1162 = vlaneseq
      %v1163 = vshrl.u32 %v1162, 7
      %v1164 = vsub.s32 %v1161, %v1163
      %v1165 = vrot.slane %v1151, %v1164
      %v1166 = vcombine.high %v1158, %v1158
      %v1167 = vcombine.high %v1165, %v1165
      %v1168 = vcombine.high %v1134, %v1134
      %v1170 = vunpack.c.l.s4 1983009808
      %v1171 = vunpack.c.0.s8 %v1170
      %v1172 = vlaneseq
      %v1173 = vshrl.u32 %v1172, 7
      %v1174 = vsub.s32 %v1171, %v1173
      %v1175 = vrot.slane %v1134, %v1174
      %v1177 = vunpack.c.l.s4 1983009808
      %v1178 = vunpack.c.0.s8 %v1177
      %v1179 = vlaneseq
      %v1180 = vshrl.u32 %v1179, 7
      %v1181 = vsub.s32 %v1178, %v1180
      %v1182 = vrot.slane %v1168, %v1181
      %v1183 = vcombine.high %v1175, %v1175
      %v1184 = vcombine.high %v1182, %v1182
      %v1185 = vcombine.high %v1135, %v1135
      %v1187 = vunpack.c.l.s4 1983009808
      %v1188 = vunpack.c.0.s8 %v1187
      %v1189 = vlaneseq
      %v1190 = vshrl.u32 %v1189, 7
      %v1191 = vsub.s32 %v1188, %v1190
      %v1192 = vrot.slane %v1135, %v1191
      %v1194 = vunpack.c.l.s4 1983009808
      %v1195 = vunpack.c.0.s8 %v1194
      %v1196 = vlaneseq
      %v1197 = vshrl.u32 %v1196, 7
      %v1198 = vsub.s32 %v1195, %v1197
      %v1199 = vrot.slane %v1185, %v1198
      %v1200 = vcombine.high %v1192, %v1192
      %v1201 = vcombine.high %v1199, %v1199
      %v1202 = vcombine.high %v1136, %v1136
      %v1204 = vunpack.c.l.s4 1983009808
      %v1205 = vunpack.c.0.s8 %v1204
      %v1206 = vlaneseq
      %v1207 = vshrl.u32 %v1206, 7
      %v1208 = vsub.s32 %v1205, %v1207
      %v1209 = vrot.slane %v1136, %v1208
      %v1211 = vunpack.c.l.s4 1983009808
      %v1212 = vunpack.c.0.s8 %v1211
      %v1213 = vlaneseq
      %v1214 = vshrl.u32 %v1213, 7
      %v1215 = vsub.s32 %v1212, %v1214
      %v1216 = vrot.slane %v1202, %v1215
      %v1217 = vcombine.high %v1209, %v1209
      %v1218 = vcombine.high %v1216, %v1216
      %v1219 = vcombine.high %v1137, %v1137
      %v1221 = vunpack.c.l.s4 1983009808
      %v1222 = vunpack.c.0.s8 %v1221
      %v1223 = vlaneseq
      %v1224 = vshrl.u32 %v1223, 7
      %v1225 = vsub.s32 %v1222, %v1224
      %v1226 = vrot.slane %v1137, %v1225
      %v1228 = vunpack.c.l.s4 1983009808
      %v1229 = vunpack.c.0.s8 %v1228
      %v1230 = vlaneseq
      %v1231 = vshrl.u32 %v1230, 7
      %v1232 = vsub.s32 %v1229, %v1231
      %v1233 = vrot.slane %v1219, %v1232
      %v1234 = vcombine.high %v1226, %v1226
      %v1235 = vcombine.high %v1233, %v1233
      %v1236 = vcombine.high %v1138, %v1138
      %v1238 = vunpack.c.l.s4 1983009808
      %v1239 = vunpack.c.0.s8 %v1238
      %v1240 = vlaneseq
      %v1241 = vshrl.u32 %v1240, 7
      %v1242 = vsub.s32 %v1239, %v1241
      %v1243 = vrot.slane %v1138, %v1242
      %v1245 = vunpack.c.l.s4 1983009808
      %v1246 = vunpack.c.0.s8 %v1245
      %v1247 = vlaneseq
      %v1248 = vshrl.u32 %v1247, 7
      %v1249 = vsub.s32 %v1246, %v1248
      %v1250 = vrot.slane %v1236, %v1249
      %v1251 = vcombine.high %v1243, %v1243
      %v1252 = vcombine.high %v1250, %v1250
      %v1253 = vcombine.high %v1139, %v1139
      %v1255 = vunpack.c.l.s4 1983009808
      %v1256 = vunpack.c.0.s8 %v1255
      %v1257 = vlaneseq
      %v1258 = vshrl.u32 %v1257, 7
      %v1259 = vsub.s32 %v1256, %v1258
      %v1260 = vrot.slane %v1139, %v1259
      %v1262 = vunpack.c.l.s4 1983009808
      %v1263 = vunpack.c.0.s8 %v1262
      %v1264 = vlaneseq
      %v1265 = vshrl.u32 %v1264, 7
      %v1266 = vsub.s32 %v1263, %v1265
      %v1267 = vrot.slane %v1253, %v1266
      %v1268 = vcombine.high %v1260, %v1260
      %v1269 = vcombine.high %v1267, %v1267
      %v1270 = vcombine.high %v1140, %v1140
      %v1272 = vunpack.c.l.s4 1983009808
      %v1273 = vunpack.c.0.s8 %v1272
      %v1274 = vlaneseq
      %v1275 = vshrl.u32 %v1274, 7
      %v1276 = vsub.s32 %v1273, %v1275
      %v1277 = vrot.slane %v1140, %v1276
      %v1279 = vunpack.c.l.s4 1983009808
      %v1280 = vunpack.c.0.s8 %v1279
      %v1281 = vlaneseq
      %v1282 = vshrl.u32 %v1281, 7
      %v1283 = vsub.s32 %v1280, %v1282
      %v1284 = vrot.slane %v1270, %v1283
      %v1285 = vcombine.high %v1277, %v1277
      %v1286 = vcombine.high %v1284, %v1284
      %v1287 = vcombine.high %v1141, %v1141
      %v1289 = vunpack.c.l.s4 1983009808
      %v1290 = vunpack.c.0.s8 %v1289
      %v1291 = vlaneseq
      %v1292 = vshrl.u32 %v1291, 7
      %v1293 = vsub.s32 %v1290, %v1292
      %v1294 = vrot.slane %v1141, %v1293
      %v1296 = vunpack.c.l.s4 1983009808
      %v1297 = vunpack.c.0.s8 %v1296
      %v1298 = vlaneseq
      %v1299 = vshrl.u32 %v1298, 7
      %v1300 = vsub.s32 %v1297, %v1299
      %v1301 = vrot.slane %v1287, %v1300
      %v1302 = vcombine.high %v1294, %v1294
      %v1303 = vcombine.high %v1301, %v1301
      %vm1304 = vsmask.f32 1280
      %vm1305 = vsmask.f32 3336
      %vm1306 = vmor %vm1304, %vm1305
      %vm1307 = vsmask.f32 5392
      %vm1308 = vmor %vm1306, %vm1307
      %vm1309 = vsmask.f32 7448
      %vm1310 = vmor %vm1308, %vm1309
      %v1312 = vshrl.u32 %v1158, 16
      %v1314 = vrot.slane %v1312, 6
      %v1315 = vshll.u32 %v1158, 16
      %v1317 = vrot.slane %v1315, 7
      %v1318 = vor.u32 %v1314, %v1317
      %v1319 = vrot.slane %v1318, 2
      %v1321 = vshll.u32 %v1166, 16
      %v1323 = vrot.slane %v1321, 7
      %v1324 = vsel %vm1310, %v1319, %v1323
      %v1325 = vshrl.u32 %v1166, 16
      %v1327 = vrot.slane %v1325, 6
      %v1328 = vor.u32 %v1327, %v1323
      %v1329 = vrot.slane %v1328, 2
      %v1331 = vshll.u32 %v1165, 16
      %v1333 = vrot.slane %v1331, 7
      %v1334 = vsel %vm1310, %v1329, %v1333
      %v1336 = vshrl.u32 %v1167, 16
      %v1338 = vrot.slane %v1336, 6
      %v1339 = vshll.u32 %v1167, 16
      %v1341 = vrot.slane %v1339, 7
      %v1342 = vor.u32 %v1338, %v1341
      %v1343 = vrot.slane %v1342, 2
      %v1345 = vshll.u32 %v1175, 16
      %v1347 = vrot.slane %v1345, 7
      %v1348 = vsel %vm1310, %v1343, %v1347
      %v1349 = vshrl.u32 %v1175, 16
      %v1351 = vrot.slane %v1349, 6
      %v1352 = vor.u32 %v1351, %v1347
      %v1353 = vrot.slane %v1352, 2
      %v1355 = vshll.u32 %v1183, 16
      %v1357 = vrot.slane %v1355, 7
      %v1358 = vsel %vm1310, %v1353, %v1357
      %v1360 = vshrl.u32 %v1182, 16
      %v1362 = vrot.slane %v1360, 6
      %v1363 = vshll.u32 %v1182, 16
      %v1365 = vrot.slane %v1363, 7
      %v1366 = vor.u32 %v1362, %v1365
      %v1367 = vrot.slane %v1366, 2
      %v1369 = vshll.u32 %v1184, 16
      %v1371 = vrot.slane %v1369, 7
      %v1372 = vsel %vm1310, %v1367, %v1371
      %v1373 = vshrl.u32 %v1184, 16
      %v1375 = vrot.slane %v1373, 6
      %v1376 = vor.u32 %v1375, %v1371
      %v1377 = vrot.slane %v1376, 2
      %v1379 = vshll.u32 %v1192, 16
      %v1381 = vrot.slane %v1379, 7
      %v1382 = vsel %vm1310, %v1377, %v1381
      %v1384 = vshrl.u32 %v1200, 16
      %v1386 = vrot.slane %v1384, 6
      %v1387 = vshll.u32 %v1200, 16
      %v1389 = vrot.slane %v1387, 7
      %v1390 = vor.u32 %v1386, %v1389
      %v1391 = vrot.slane %v1390, 2
      %v1393 = vshll.u32 %v1199, 16
      %v1395 = vrot.slane %v1393, 7
      %v1396 = vsel %vm1310, %v1391, %v1395
      %v1397 = vshrl.u32 %v1199, 16
      %v1399 = vrot.slane %v1397, 6
      %v1400 = vor.u32 %v1399, %v1395
      %v1401 = vrot.slane %v1400, 2
      %v1403 = vshll.u32 %v1201, 16
      %v1405 = vrot.slane %v1403, 7
      %v1406 = vsel %vm1310, %v1401, %v1405
      %v1408 = vshrl.u32 %v1209, 16
      %v1410 = vrot.slane %v1408, 6
      %v1411 = vshll.u32 %v1209, 16
      %v1413 = vrot.slane %v1411, 7
      %v1414 = vor.u32 %v1410, %v1413
      %v1415 = vrot.slane %v1414, 2
      %v1417 = vshll.u32 %v1217, 16
      %v1419 = vrot.slane %v1417, 7
      %v1420 = vsel %vm1310, %v1415, %v1419
      %v1421 = vshrl.u32 %v1217, 16
      %v1423 = vrot.slane %v1421, 6
      %v1424 = vor.u32 %v1423, %v1419
      %v1425 = vrot.slane %v1424, 2
      %v1427 = vshll.u32 %v1216, 16
      %v1429 = vrot.slane %v1427, 7
      %v1430 = vsel %vm1310, %v1425, %v1429
      %v1432 = vshrl.u32 %v1218, 16
      %v1434 = vrot.slane %v1432, 6
      %v1435 = vshll.u32 %v1218, 16
      %v1437 = vrot.slane %v1435, 7
      %v1438 = vor.u32 %v1434, %v1437
      %v1439 = vrot.slane %v1438, 2
      %v1441 = vshll.u32 %v1226, 16
      %v1443 = vrot.slane %v1441, 7
      %v1444 = vsel %vm1310, %v1439, %v1443
      %v1445 = vshrl.u32 %v1226, 16
      %v1447 = vrot.slane %v1445, 6
      %v1448 = vor.u32 %v1447, %v1443
      %v1449 = vrot.slane %v1448, 2
      %v1451 = vshll.u32 %v1234, 16
      %v1453 = vrot.slane %v1451, 7
      %v1454 = vsel %vm1310, %v1449, %v1453
      %v1456 = vshrl.u32 %v1233, 16
      %v1458 = vrot.slane %v1456, 6
      %v1459 = vshll.u32 %v1233, 16
      %v1461 = vrot.slane %v1459, 7
      %v1462 = vor.u32 %v1458, %v1461
      %v1463 = vrot.slane %v1462, 2
      %v1465 = vshll.u32 %v1235, 16
      %v1467 = vrot.slane %v1465, 7
      %v1468 = vsel %vm1310, %v1463, %v1467
      %v1469 = vshrl.u32 %v1235, 16
      %v1471 = vrot.slane %v1469, 6
      %v1472 = vor.u32 %v1471, %v1467
      %v1473 = vrot.slane %v1472, 2
      %v1475 = vshll.u32 %v1243, 16
      %v1477 = vrot.slane %v1475, 7
      %v1478 = vsel %vm1310, %v1473, %v1477
      %v1480 = vshrl.u32 %v1251, 16
      %v1482 = vrot.slane %v1480, 6
      %v1483 = vshll.u32 %v1251, 16
      %v1485 = vrot.slane %v1483, 7
      %v1486 = vor.u32 %v1482, %v1485
      %v1487 = vrot.slane %v1486, 2
      %v1489 = vshll.u32 %v1250, 16
      %v1491 = vrot.slane %v1489, 7
      %v1492 = vsel %vm1310, %v1487, %v1491
      %v1493 = vshrl.u32 %v1250, 16
      %v1495 = vrot.slane %v1493, 6
      %v1496 = vor.u32 %v1495, %v1491
      %v1497 = vrot.slane %v1496, 2
      %v1499 = vshll.u32 %v1252, 16
      %v1501 = vrot.slane %v1499, 7
      %v1502 = vsel %vm1310, %v1497, %v1501
      %vm1503 = vcmask 1040384
      %vm1504 = vcmask 1042434
      %vm1505 = vmor %vm1503, %vm1504
      %vm1506 = vcmask 1044484
      %vm1507 = vmor %vm1505, %vm1506
      %vm1508 = vcmask 1046534
      %vm1509 = vmor %vm1507, %vm1508
      %v1510 = vrot.slane %v1158, 7
      %v1511 = vrot.slane %v1510, 2
      %v1512 = vrot.slane %v1166, 7
      %v1513 = vsel %vm1509, %v1511, %v1512
      %v1514 = vrot.slane %v1512, 2
      %v1515 = vrot.slane %v1165, 7
      %v1516 = vsel %vm1509, %v1514, %v1515
      %v1517 = vrot.slane %v1167, 7
      %v1518 = vrot.slane %v1517, 2
      %v1519 = vrot.slane %v1175, 7
      %v1520 = vsel %vm1509, %v1518, %v1519
      %v1521 = vrot.slane %v1519, 2
      %v1522 = vrot.slane %v1183, 7
      %v1523 = vsel %vm1509, %v1521, %v1522
      %v1524 = vrot.slane %v1182, 7
      %v1525 = vrot.slane %v1524, 2
      %v1526 = vrot.slane %v1184, 7
      %v1527 = vsel %vm1509, %v1525, %v1526
      %v1528 = vrot.slane %v1526, 2
      %v1529 = vrot.slane %v1192, 7
      %v1530 = vsel %vm1509, %v1528, %v1529
      %v1531 = vrot.slane %v1200, 7
      %v1532 = vrot.slane %v1531, 2
      %v1533 = vrot.slane %v1199, 7
      %v1534 = vsel %vm1509, %v1532, %v1533
      %v1535 = vrot.slane %v1533, 2
      %v1536 = vrot.slane %v1201, 7
      %v1537 = vsel %vm1509, %v1535, %v1536
      %v1538 = vrot.slane %v1209, 7
      %v1539 = vrot.slane %v1538, 2
      %v1540 = vrot.slane %v1217, 7
      %v1541 = vsel %vm1509, %v1539, %v1540
      %v1542 = vrot.slane %v1540, 2
      %v1543 = vrot.slane %v1216, 7
      %v1544 = vsel %vm1509, %v1542, %v1543
      %v1545 = vrot.slane %v1218, 7
      %v1546 = vrot.slane %v1545, 2
      %v1547 = vrot.slane %v1226, 7
      %v1548 = vsel %vm1509, %v1546, %v1547
      %v1549 = vrot.slane %v1547, 2
      %v1550 = vrot.slane %v1234, 7
      %v1551 = vsel %vm1509, %v1549, %v1550
      %v1552 = vrot.slane %v1233, 7
      %v1553 = vrot.slane %v1552, 2
      %v1554 = vrot.slane %v1235, 7
      %v1555 = vsel %vm1509, %v1553, %v1554
      %v1556 = vrot.slane %v1554, 2
      %v1557 = vrot.slane %v1243, 7
      %v1558 = vsel %vm1509, %v1556, %v1557
      %v1559 = vrot.slane %v1251, 7
      %v1560 = vrot.slane %v1559, 2
      %v1561 = vrot.slane %v1250, 7
      %v1562 = vsel %vm1509, %v1560, %v1561
      %v1563 = vrot.slane %v1561, 2
      %v1564 = vrot.slane %v1252, 7
      %v1565 = vsel %vm1509, %v1563, %v1564
      %vm1566 = vsmask.f32 256
      %vm1567 = vsmask.f32 2312
      %vm1568 = vmor %vm1566, %vm1567
      %vm1569 = vsmask.f32 4368
      %vm1570 = vmor %vm1568, %vm1569
      %vm1571 = vsmask.f32 6424
      %vm1572 = vmor %vm1570, %vm1571
      %v1573 = vrot.slane %v1312, 7
      %v1574 = vrot.slane %v1573, 2
      %v1575 = vrot.slane %v1325, 7
      %v1576 = vor.u32 %v1575, %v1321
      %v1577 = vsel %vm1572, %v1574, %v1576
      %v1578 = vrot.slane %v1575, 2
      %v1579 = vshrl.u32 %v1165, 16
      %v1581 = vrot.slane %v1579, 7
      %v1582 = vor.u32 %v1581, %v1331
      %v1583 = vsel %vm1572, %v1578, %v1582
      %v1584 = vrot.slane %v1336, 7
      %v1585 = vrot.slane %v1584, 2
      %v1586 = vrot.slane %v1349, 7
      %v1587 = vor.u32 %v1586, %v1345
      %v1588 = vsel %vm1572, %v1585, %v1587
      %v1589 = vrot.slane %v1586, 2
      %v1590 = vshrl.u32 %v1183, 16
      %v1592 = vrot.slane %v1590, 7
      %v1593 = vor.u32 %v1592, %v1355
      %v1594 = vsel %vm1572, %v1589, %v1593
      %v1595 = vrot.slane %v1360, 7
      %v1596 = vrot.slane %v1595, 2
      %v1597 = vrot.slane %v1373, 7
      %v1598 = vor.u32 %v1597, %v1369
      %v1599 = vsel %vm1572, %v1596, %v1598
      %v1600 = vrot.slane %v1597, 2
      %v1601 = vshrl.u32 %v1192, 16
      %v1603 = vrot.slane %v1601, 7
      %v1604 = vor.u32 %v1603, %v1379
      %v1605 = vsel %vm1572, %v1600, %v1604
      %v1606 = vrot.slane %v1384, 7
      %v1607 = vrot.slane %v1606, 2
      %v1608 = vrot.slane %v1397, 7
      %v1609 = vor.u32 %v1608, %v1393
      %v1610 = vsel %vm1572, %v1607, %v1609
      %v1611 = vrot.slane %v1608, 2
      %v1612 = vshrl.u32 %v1201, 16
      %v1614 = vrot.slane %v1612, 7
      %v1615 = vor.u32 %v1614, %v1403
      %v1616 = vsel %vm1572, %v1611, %v1615
      %v1617 = vrot.slane %v1408, 7
      %v1618 = vrot.slane %v1617, 2
      %v1619 = vrot.slane %v1421, 7
      %v1620 = vor.u32 %v1619, %v1417
      %v1621 = vsel %vm1572, %v1618, %v1620
      %v1622 = vrot.slane %v1619, 2
      %v1623 = vshrl.u32 %v1216, 16
      %v1625 = vrot.slane %v1623, 7
      %v1626 = vor.u32 %v1625, %v1427
      %v1627 = vsel %vm1572, %v1622, %v1626
      %v1628 = vrot.slane %v1432, 7
      %v1629 = vrot.slane %v1628, 2
      %v1630 = vrot.slane %v1445, 7
      %v1631 = vor.u32 %v1630, %v1441
      %v1632 = vsel %vm1572, %v1629, %v1631
      %v1633 = vrot.slane %v1630, 2
      %v1634 = vshrl.u32 %v1234, 16
      %v1636 = vrot.slane %v1634, 7
      %v1637 = vor.u32 %v1636, %v1451
      %v1638 = vsel %vm1572, %v1633, %v1637
      %v1639 = vrot.slane %v1456, 7
      %v1640 = vrot.slane %v1639, 2
      %v1641 = vrot.slane %v1469, 7
      %v1642 = vor.u32 %v1641, %v1465
      %v1643 = vsel %vm1572, %v1640, %v1642
      %v1644 = vrot.slane %v1641, 2
      %v1645 = vshrl.u32 %v1243, 16
      %v1647 = vrot.slane %v1645, 7
      %v1648 = vor.u32 %v1647, %v1475
      %v1649 = vsel %vm1572, %v1644, %v1648
      %v1650 = vrot.slane %v1480, 7
      %v1651 = vrot.slane %v1650, 2
      %v1652 = vrot.slane %v1493, 7
      %v1653 = vor.u32 %v1652, %v1489
      %v1654 = vsel %vm1572, %v1651, %v1653
      %v1655 = vrot.slane %v1652, 2
      %v1656 = vshrl.u32 %v1252, 16
      %v1658 = vrot.slane %v1656, 7
      %v1659 = vor.u32 %v1658, %v1499
      %v1660 = vsel %vm1572, %v1655, %v1659
      %v1662 = vshrl.u32 %v1260, 16
      %v1664 = vrot.slane %v1662, 6
      %v1665 = vshll.u32 %v1260, 16
      %v1667 = vrot.slane %v1665, 7
      %v1668 = vor.u32 %v1664, %v1667
      %v1669 = vrot.slane %v1668, 2
      %v1671 = vshll.u32 %v1268, 16
      %v1673 = vrot.slane %v1671, 7
      %v1674 = vsel %vm1310, %v1669, %v1673
      %v1675 = vshrl.u32 %v1268, 16
      %v1677 = vrot.slane %v1675, 6
      %v1678 = vor.u32 %v1677, %v1673
      %v1679 = vrot.slane %v1678, 2
      %v1681 = vshll.u32 %v1267, 16
      %v1683 = vrot.slane %v1681, 7
      %v1684 = vsel %vm1310, %v1679, %v1683
      %v1685 = vrot.slane %v1260, 7
      %v1686 = vrot.slane %v1685, 2
      %v1687 = vrot.slane %v1268, 7
      %v1688 = vsel %vm1509, %v1686, %v1687
      %v1689 = vrot.slane %v1687, 2
      %v1690 = vrot.slane %v1267, 7
      %v1691 = vsel %vm1509, %v1689, %v1690
      %v1692 = vrot.slane %v1662, 7
      %v1693 = vrot.slane %v1692, 2
      %v1694 = vrot.slane %v1675, 7
      %v1695 = vor.u32 %v1694, %v1671
      %v1696 = vsel %vm1572, %v1693, %v1695
      %v1697 = vrot.slane %v1694, 2
      %v1698 = vshrl.u32 %v1267, 16
      %v1700 = vrot.slane %v1698, 7
      %v1701 = vor.u32 %v1700, %v1681
      %v1702 = vsel %vm1572, %v1697, %v1701
      %v1704 = vshrl.u32 %v1269, 16
      %v1706 = vrot.slane %v1704, 6
      %v1707 = vshll.u32 %v1269, 16
      %v1709 = vrot.slane %v1707, 7
      %v1710 = vor.u32 %v1706, %v1709
      %v1711 = vrot.slane %v1710, 2
      %v1713 = vshll.u32 %v1277, 16
      %v1715 = vrot.slane %v1713, 7
      %v1716 = vsel %vm1310, %v1711, %v1715
      %v1717 = vshrl.u32 %v1277, 16
      %v1719 = vrot.slane %v1717, 6
      %v1720 = vor.u32 %v1719, %v1715
      %v1721 = vrot.slane %v1720, 2
      %v1723 = vshll.u32 %v1285, 16
      %v1725 = vrot.slane %v1723, 7
      %v1726 = vsel %vm1310, %v1721, %v1725
      %v1727 = vrot.slane %v1269, 7
      %v1728 = vrot.slane %v1727, 2
      %v1729 = vrot.slane %v1277, 7
      %v1730 = vsel %vm1509, %v1728, %v1729
      %v1731 = vrot.slane %v1729, 2
      %v1732 = vrot.slane %v1285, 7
      %v1733 = vsel %vm1509, %v1731, %v1732
      %v1734 = vrot.slane %v1704, 7
      %v1735 = vrot.slane %v1734, 2
      %v1736 = vrot.slane %v1717, 7
      %v1737 = vor.u32 %v1736, %v1713
      %v1738 = vsel %vm1572, %v1735, %v1737
      %v1739 = vrot.slane %v1736, 2
      %v1740 = vshrl.u32 %v1285, 16
      %v1742 = vrot.slane %v1740, 7
      %v1743 = vor.u32 %v1742, %v1723
      %v1744 = vsel %vm1572, %v1739, %v1743
      %v1746 = vshrl.u32 %v1284, 16
      %v1748 = vrot.slane %v1746, 6
      %v1749 = vshll.u32 %v1284, 16
      %v1751 = vrot.slane %v1749, 7
      %v1752 = vor.u32 %v1748, %v1751
      %v1753 = vrot.slane %v1752, 2
      %v1755 = vshll.u32 %v1286, 16
      %v1757 = vrot.slane %v1755, 7
      %v1758 = vsel %vm1310, %v1753, %v1757
      %v1759 = vshrl.u32 %v1286, 16
      %v1761 = vrot.slane %v1759, 6
      %v1762 = vor.u32 %v1761, %v1757
      %v1763 = vrot.slane %v1762, 2
      %v1765 = vshll.u32 %v1294, 16
      %v1767 = vrot.slane %v1765, 7
      %v1768 = vsel %vm1310, %v1763, %v1767
      %v1769 = vrot.slane %v1284, 7
      %v1770 = vrot.slane %v1769, 2
      %v1771 = vrot.slane %v1286, 7
      %v1772 = vsel %vm1509, %v1770, %v1771
      %v1773 = vrot.slane %v1771, 2
      %v1774 = vrot.slane %v1294, 7
      %v1775 = vsel %vm1509, %v1773, %v1774
      %v1776 = vrot.slane %v1746, 7
      %v1777 = vrot.slane %v1776, 2
      %v1778 = vrot.slane %v1759, 7
      %v1779 = vor.u32 %v1778, %v1755
      %v1780 = vsel %vm1572, %v1777, %v1779
      %v1781 = vrot.slane %v1778, 2
      %v1782 = vshrl.u32 %v1294, 16
      %v1784 = vrot.slane %v1782, 7
      %v1785 = vor.u32 %v1784, %v1765
      %v1786 = vsel %vm1572, %v1781, %v1785
      %v1788 = vshrl.u32 %v1302, 16
      %v1790 = vrot.slane %v1788, 6
      %v1791 = vshll.u32 %v1302, 16
      %v1793 = vrot.slane %v1791, 7
      %v1794 = vor.u32 %v1790, %v1793
      %v1795 = vrot.slane %v1794, 2
      %v1797 = vshll.u32 %v1301, 16
      %v1799 = vrot.slane %v1797, 7
      %v1800 = vsel %vm1310, %v1795, %v1799
      %v1801 = vshrl.u32 %v1301, 16
      %v1803 = vrot.slane %v1801, 6
      %v1804 = vor.u32 %v1803, %v1799
      %v1805 = vrot.slane %v1804, 2
      %v1807 = vshll.u32 %v1303, 16
      %v1809 = vrot.slane %v1807, 7
      %v1810 = vsel %vm1310, %v1805, %v1809
      %v1811 = vrot.slane %v1302, 7
      %v1812 = vrot.slane %v1811, 2
      %v1813 = vrot.slane %v1301, 7
      %v1814 = vsel %vm1509, %v1812, %v1813
      %v1815 = vrot.slane %v1813, 2
      %v1816 = vrot.slane %v1303, 7
      %v1817 = vsel %vm1509, %v1815, %v1816
      %v1818 = vrot.slane %v1788, 7
      %v1819 = vrot.slane %v1818, 2
      %v1820 = vrot.slane %v1801, 7
      %v1821 = vor.u32 %v1820, %v1797
      %v1822 = vsel %vm1572, %v1819, %v1821
      %v1823 = vrot.slane %v1820, 2
      %v1824 = vshrl.u32 %v1303, 16
      %v1826 = vrot.slane %v1824, 7
      %v1827 = vor.u32 %v1826, %v1807
      %v1828 = vsel %vm1572, %v1823, %v1827
      %v1829 = vcombine.low %v1158, %v1166
      %v1830 = vcombine.low %v1167, %v1175
      %v1832 = vunpack.c.l.s4 1983009808
      %v1833 = vunpack.c.0.s8 %v1832
      %v1834 = vlaneseq
      %v1835 = vshrl.u32 %v1834, 7
      %v1836 = vsub.s32 %v1833, %v1835
      %v1837 = vrot.slane %v1829, %v1836
      %v1839 = vunpack.c.l.s4 1983009808
      %v1840 = vunpack.c.0.s8 %v1839
      %v1841 = vlaneseq
      %v1842 = vshrl.u32 %v1841, 7
      %v1843 = vsub.s32 %v1840, %v1842
      %v1844 = vrot.slane %v1830, %v1843
      %v1845 = vcombine.low %v1837, %v1844
      %v1846 = vcombine.low %v1182, %v1184
      %v1847 = vcombine.low %v1200, %v1199
      %v1849 = vunpack.c.l.s4 1983009808
      %v1850 = vunpack.c.0.s8 %v1849
      %v1851 = vlaneseq
      %v1852 = vshrl.u32 %v1851, 7
      %v1853 = vsub.s32 %v1850, %v1852
      %v1854 = vrot.slane %v1846, %v1853
      %v1856 = vunpack.c.l.s4 1983009808
      %v1857 = vunpack.c.0.s8 %v1856
      %v1858 = vlaneseq
      %v1859 = vshrl.u32 %v1858, 7
      %v1860 = vsub.s32 %v1857, %v1859
      %v1861 = vrot.slane %v1847, %v1860
      %v1862 = vcombine.low %v1854, %v1861
      %v1863 = vcombine.low %v1209, %v1217
      %v1864 = vcombine.low %v1218, %v1226
      %v1866 = vunpack.c.l.s4 1983009808
      %v1867 = vunpack.c.0.s8 %v1866
      %v1868 = vlaneseq
      %v1869 = vshrl.u32 %v1868, 7
      %v1870 = vsub.s32 %v1867, %v1869
      %v1871 = vrot.slane %v1863, %v1870
      %v1873 = vunpack.c.l.s4 1983009808
      %v1874 = vunpack.c.0.s8 %v1873
      %v1875 = vlaneseq
      %v1876 = vshrl.u32 %v1875, 7
      %v1877 = vsub.s32 %v1874, %v1876
      %v1878 = vrot.slane %v1864, %v1877
      %v1879 = vcombine.low %v1871, %v1878
      %v1880 = vcombine.low %v1233, %v1235
      %v1881 = vcombine.low %v1251, %v1250
      %v1883 = vunpack.c.l.s4 1983009808
      %v1884 = vunpack.c.0.s8 %v1883
      %v1885 = vlaneseq
      %v1886 = vshrl.u32 %v1885, 7
      %v1887 = vsub.s32 %v1884, %v1886
      %v1888 = vrot.slane %v1880, %v1887
      %v1890 = vunpack.c.l.s4 1983009808
      %v1891 = vunpack.c.0.s8 %v1890
      %v1892 = vlaneseq
      %v1893 = vshrl.u32 %v1892, 7
      %v1894 = vsub.s32 %v1891, %v1893
      %v1895 = vrot.slane %v1881, %v1894
      %v1896 = vcombine.low %v1888, %v1895
      %v1901 = vcombine.low %v1324, %v1334
      %v1902 = vcombine.low %v1348, %v1358
      %v1904 = vunpack.c.l.s4 1983009808
      %v1905 = vunpack.c.0.s8 %v1904
      %v1906 = vlaneseq
      %v1907 = vshrl.u32 %v1906, 7
      %v1908 = vsub.s32 %v1905, %v1907
      %v1909 = vrot.slane %v1901, %v1908
      %v1911 = vunpack.c.l.s4 1983009808
      %v1912 = vunpack.c.0.s8 %v1911
      %v1913 = vlaneseq
      %v1914 = vshrl.u32 %v1913, 7
      %v1915 = vsub.s32 %v1912, %v1914
      %v1916 = vrot.slane %v1902, %v1915
      %v1917 = vcombine.low %v1909, %v1916
      %v1918 = vcombine.low %v1372, %v1382
      %v1919 = vcombine.low %v1396, %v1406
      %v1921 = vunpack.c.l.s4 1983009808
      %v1922 = vunpack.c.0.s8 %v1921
      %v1923 = vlaneseq
      %v1924 = vshrl.u32 %v1923, 7
      %v1925 = vsub.s32 %v1922, %v1924
      %v1926 = vrot.slane %v1918, %v1925
      %v1928 = vunpack.c.l.s4 1983009808
      %v1929 = vunpack.c.0.s8 %v1928
      %v1930 = vlaneseq
      %v1931 = vshrl.u32 %v1930, 7
      %v1932 = vsub.s32 %v1929, %v1931
      %v1933 = vrot.slane %v1919, %v1932
      %v1934 = vcombine.low %v1926, %v1933
      %v1935 = vcombine.low %v1420, %v1430
      %v1936 = vcombine.low %v1444, %v1454
      %v1938 = vunpack.c.l.s4 1983009808
      %v1939 = vunpack.c.0.s8 %v1938
      %v1940 = vlaneseq
      %v1941 = vshrl.u32 %v1940, 7
      %v1942 = vsub.s32 %v1939, %v1941
      %v1943 = vrot.slane %v1935, %v1942
      %v1945 = vunpack.c.l.s4 1983009808
      %v1946 = vunpack.c.0.s8 %v1945
      %v1947 = vlaneseq
      %v1948 = vshrl.u32 %v1947, 7
      %v1949 = vsub.s32 %v1946, %v1948
      %v1950 = vrot.slane %v1936, %v1949
      %v1951 = vcombine.low %v1943, %v1950
      %v1952 = vcombine.low %v1468, %v1478
      %v1953 = vcombine.low %v1492, %v1502
      %v1955 = vunpack.c.l.s4 1983009808
      %v1956 = vunpack.c.0.s8 %v1955
      %v1957 = vlaneseq
      %v1958 = vshrl.u32 %v1957, 7
      %v1959 = vsub.s32 %v1956, %v1958
      %v1960 = vrot.slane %v1952, %v1959
      %v1962 = vunpack.c.l.s4 1983009808
      %v1963 = vunpack.c.0.s8 %v1962
      %v1964 = vlaneseq
      %v1965 = vshrl.u32 %v1964, 7
      %v1966 = vsub.s32 %v1963, %v1965
      %v1967 = vrot.slane %v1953, %v1966
      %v1968 = vcombine.low %v1960, %v1967
      %v1973 = vcombine.low %v1513, %v1516
      %v1974 = vcombine.low %v1520, %v1523
      %v1976 = vunpack.c.l.s4 1983009808
      %v1977 = vunpack.c.0.s8 %v1976
      %v1978 = vlaneseq
      %v1979 = vshrl.u32 %v1978, 7
      %v1980 = vsub.s32 %v1977, %v1979
      %v1981 = vrot.slane %v1973, %v1980
      %v1983 = vunpack.c.l.s4 1983009808
      %v1984 = vunpack.c.0.s8 %v1983
      %v1985 = vlaneseq
      %v1986 = vshrl.u32 %v1985, 7
      %v1987 = vsub.s32 %v1984, %v1986
      %v1988 = vrot.slane %v1974, %v1987
      %v1989 = vcombine.low %v1981, %v1988
      %v1990 = vcombine.low %v1527, %v1530
      %v1991 = vcombine.low %v1534, %v1537
      %v1993 = vunpack.c.l.s4 1983009808
      %v1994 = vunpack.c.0.s8 %v1993
      %v1995 = vlaneseq
      %v1996 = vshrl.u32 %v1995, 7
      %v1997 = vsub.s32 %v1994, %v1996
      %v1998 = vrot.slane %v1990, %v1997
      %v2000 = vunpack.c.l.s4 1983009808
      %v2001 = vunpack.c.0.s8 %v2000
      %v2002 = vlaneseq
      %v2003 = vshrl.u32 %v2002, 7
      %v2004 = vsub.s32 %v2001, %v2003
      %v2005 = vrot.slane %v1991, %v2004
      %v2006 = vcombine.low %v1998, %v2005
      %v2007 = vcombine.low %v1541, %v1544
      %v2008 = vcombine.low %v1548, %v1551
      %v2010 = vunpack.c.l.s4 1983009808
      %v2011 = vunpack.c.0.s8 %v2010
      %v2012 = vlaneseq
      %v2013 = vshrl.u32 %v2012, 7
      %v2014 = vsub.s32 %v2011, %v2013
      %v2015 = vrot.slane %v2007, %v2014
      %v2017 = vunpack.c.l.s4 1983009808
      %v2018 = vunpack.c.0.s8 %v2017
      %v2019 = vlaneseq
      %v2020 = vshrl.u32 %v2019, 7
      %v2021 = vsub.s32 %v2018, %v2020
      %v2022 = vrot.slane %v2008, %v2021
      %v2023 = vcombine.low %v2015, %v2022
      %v2024 = vcombine.low %v1555, %v1558
      %v2025 = vcombine.low %v1562, %v1565
      %v2027 = vunpack.c.l.s4 1983009808
      %v2028 = vunpack.c.0.s8 %v2027
      %v2029 = vlaneseq
      %v2030 = vshrl.u32 %v2029, 7
      %v2031 = vsub.s32 %v2028, %v2030
      %v2032 = vrot.slane %v2024, %v2031
      %v2034 = vunpack.c.l.s4 1983009808
      %v2035 = vunpack.c.0.s8 %v2034
      %v2036 = vlaneseq
      %v2037 = vshrl.u32 %v2036, 7
      %v2038 = vsub.s32 %v2035, %v2037
      %v2039 = vrot.slane %v2025, %v2038
      %v2040 = vcombine.low %v2032, %v2039
      %v2045 = vcombine.low %v1577, %v1583
      %v2046 = vcombine.low %v1588, %v1594
      %v2048 = vunpack.c.l.s4 1983009808
      %v2049 = vunpack.c.0.s8 %v2048
      %v2050 = vlaneseq
      %v2051 = vshrl.u32 %v2050, 7
      %v2052 = vsub.s32 %v2049, %v2051
      %v2053 = vrot.slane %v2045, %v2052
      %v2055 = vunpack.c.l.s4 1983009808
      %v2056 = vunpack.c.0.s8 %v2055
      %v2057 = vlaneseq
      %v2058 = vshrl.u32 %v2057, 7
      %v2059 = vsub.s32 %v2056, %v2058
      %v2060 = vrot.slane %v2046, %v2059
      %v2061 = vcombine.low %v2053, %v2060
      %v2062 = vcombine.low %v1599, %v1605
      %v2063 = vcombine.low %v1610, %v1616
      %v2065 = vunpack.c.l.s4 1983009808
      %v2066 = vunpack.c.0.s8 %v2065
      %v2067 = vlaneseq
      %v2068 = vshrl.u32 %v2067, 7
      %v2069 = vsub.s32 %v2066, %v2068
      %v2070 = vrot.slane %v2062, %v2069
      %v2072 = vunpack.c.l.s4 1983009808
      %v2073 = vunpack.c.0.s8 %v2072
      %v2074 = vlaneseq
      %v2075 = vshrl.u32 %v2074, 7
      %v2076 = vsub.s32 %v2073, %v2075
      %v2077 = vrot.slane %v2063, %v2076
      %v2078 = vcombine.low %v2070, %v2077
      %v2079 = vcombine.low %v1621, %v1627
      %v2080 = vcombine.low %v1632, %v1638
      %v2082 = vunpack.c.l.s4 1983009808
      %v2083 = vunpack.c.0.s8 %v2082
      %v2084 = vlaneseq
      %v2085 = vshrl.u32 %v2084, 7
      %v2086 = vsub.s32 %v2083, %v2085
      %v2087 = vrot.slane %v2079, %v2086
      %v2089 = vunpack.c.l.s4 1983009808
      %v2090 = vunpack.c.0.s8 %v2089
      %v2091 = vlaneseq
      %v2092 = vshrl.u32 %v2091, 7
      %v2093 = vsub.s32 %v2090, %v2092
      %v2094 = vrot.slane %v2080, %v2093
      %v2095 = vcombine.low %v2087, %v2094
      %v2096 = vcombine.low %v1643, %v1649
      %v2097 = vcombine.low %v1654, %v1660
      %v2099 = vunpack.c.l.s4 1983009808
      %v2100 = vunpack.c.0.s8 %v2099
      %v2101 = vlaneseq
      %v2102 = vshrl.u32 %v2101, 7
      %v2103 = vsub.s32 %v2100, %v2102
      %v2104 = vrot.slane %v2096, %v2103
      %v2106 = vunpack.c.l.s4 1983009808
      %v2107 = vunpack.c.0.s8 %v2106
      %v2108 = vlaneseq
      %v2109 = vshrl.u32 %v2108, 7
      %v2110 = vsub.s32 %v2107, %v2109
      %v2111 = vrot.slane %v2097, %v2110
      %v2112 = vcombine.low %v2104, %v2111
      %v2117 = vcombine.low %v1166, %v1165
      %v2118 = vcombine.low %v1175, %v1183
      %v2120 = vunpack.c.l.s4 1983009808
      %v2121 = vunpack.c.0.s8 %v2120
      %v2122 = vlaneseq
      %v2123 = vshrl.u32 %v2122, 7
      %v2124 = vsub.s32 %v2121, %v2123
      %v2125 = vrot.slane %v2117, %v2124
      %v2127 = vunpack.c.l.s4 1983009808
      %v2128 = vunpack.c.0.s8 %v2127
      %v2129 = vlaneseq
      %v2130 = vshrl.u32 %v2129, 7
      %v2131 = vsub.s32 %v2128, %v2130
      %v2132 = vrot.slane %v2118, %v2131
      %v2133 = vcombine.low %v2125, %v2132
      %v2134 = vcombine.low %v1184, %v1192
      %v2135 = vcombine.low %v1199, %v1201
      %v2137 = vunpack.c.l.s4 1983009808
      %v2138 = vunpack.c.0.s8 %v2137
      %v2139 = vlaneseq
      %v2140 = vshrl.u32 %v2139, 7
      %v2141 = vsub.s32 %v2138, %v2140
      %v2142 = vrot.slane %v2134, %v2141
      %v2144 = vunpack.c.l.s4 1983009808
      %v2145 = vunpack.c.0.s8 %v2144
      %v2146 = vlaneseq
      %v2147 = vshrl.u32 %v2146, 7
      %v2148 = vsub.s32 %v2145, %v2147
      %v2149 = vrot.slane %v2135, %v2148
      %v2150 = vcombine.low %v2142, %v2149
      %v2151 = vcombine.low %v1217, %v1216
      %v2152 = vcombine.low %v1226, %v1234
      %v2154 = vunpack.c.l.s4 1983009808
      %v2155 = vunpack.c.0.s8 %v2154
      %v2156 = vlaneseq
      %v2157 = vshrl.u32 %v2156, 7
      %v2158 = vsub.s32 %v2155, %v2157
      %v2159 = vrot.slane %v2151, %v2158
      %v2161 = vunpack.c.l.s4 1983009808
      %v2162 = vunpack.c.0.s8 %v2161
      %v2163 = vlaneseq
      %v2164 = vshrl.u32 %v2163, 7
      %v2165 = vsub.s32 %v2162, %v2164
      %v2166 = vrot.slane %v2152, %v2165
      %v2167 = vcombine.low %v2159, %v2166
      %v2168 = vcombine.low %v1235, %v1243
      %v2169 = vcombine.low %v1250, %v1252
      %v2171 = vunpack.c.l.s4 1983009808
      %v2172 = vunpack.c.0.s8 %v2171
      %v2173 = vlaneseq
      %v2174 = vshrl.u32 %v2173, 7
      %v2175 = vsub.s32 %v2172, %v2174
      %v2176 = vrot.slane %v2168, %v2175
      %v2178 = vunpack.c.l.s4 1983009808
      %v2179 = vunpack.c.0.s8 %v2178
      %v2180 = vlaneseq
      %v2181 = vshrl.u32 %v2180, 7
      %v2182 = vsub.s32 %v2179, %v2181
      %v2183 = vrot.slane %v2169, %v2182
      %v2184 = vcombine.low %v2176, %v2183
      %v2189 = vcombine.low %v1844, %v1854
      %v2190 = vcombine.low %v1861, %v1871
      %v2191 = vcombine.low %v1878, %v1888
      %v2192 = vcombine.low %v1260, %v1268
      %v2194 = vunpack.c.l.s4 1983009808
      %v2195 = vunpack.c.0.s8 %v2194
      %v2196 = vlaneseq
      %v2197 = vshrl.u32 %v2196, 7
      %v2198 = vsub.s32 %v2195, %v2197
      %v2199 = vrot.slane %v2192, %v2198
      %v2200 = vcombine.low %v1895, %v2199
      %v2205 = vcombine.low %v1916, %v1926
      %v2206 = vcombine.low %v1933, %v1943
      %v2207 = vcombine.low %v1950, %v1960
      %v2208 = vcombine.low %v1674, %v1684
      %v2210 = vunpack.c.l.s4 1983009808
      %v2211 = vunpack.c.0.s8 %v2210
      %v2212 = vlaneseq
      %v2213 = vshrl.u32 %v2212, 7
      %v2214 = vsub.s32 %v2211, %v2213
      %v2215 = vrot.slane %v2208, %v2214
      %v2216 = vcombine.low %v1967, %v2215
      %v2221 = vcombine.low %v1988, %v1998
      %v2222 = vcombine.low %v2005, %v2015
      %v2223 = vcombine.low %v2022, %v2032
      %v2224 = vcombine.low %v1688, %v1691
      %v2226 = vunpack.c.l.s4 1983009808
      %v2227 = vunpack.c.0.s8 %v2226
      %v2228 = vlaneseq
      %v2229 = vshrl.u32 %v2228, 7
      %v2230 = vsub.s32 %v2227, %v2229
      %v2231 = vrot.slane %v2224, %v2230
      %v2232 = vcombine.low %v2039, %v2231
      %v2237 = vcombine.low %v2060, %v2070
      %v2238 = vcombine.low %v2077, %v2087
      %v2239 = vcombine.low %v2094, %v2104
      %v2240 = vcombine.low %v1696, %v1702
      %v2242 = vunpack.c.l.s4 1983009808
      %v2243 = vunpack.c.0.s8 %v2242
      %v2244 = vlaneseq
      %v2245 = vshrl.u32 %v2244, 7
      %v2246 = vsub.s32 %v2243, %v2245
      %v2247 = vrot.slane %v2240, %v2246
      %v2248 = vcombine.low %v2111, %v2247
      %v2253 = vcombine.low %v2132, %v2142
      %v2254 = vcombine.low %v2149, %v2159
      %v2255 = vcombine.low %v2166, %v2176
      %v2256 = vcombine.low %v1268, %v1267
      %v2258 = vunpack.c.l.s4 1983009808
      %v2259 = vunpack.c.0.s8 %v2258
      %v2260 = vlaneseq
      %v2261 = vshrl.u32 %v2260, 7
      %v2262 = vsub.s32 %v2259, %v2261
      %v2263 = vrot.slane %v2256, %v2262
      %v2264 = vcombine.low %v2183, %v2263
      %v2269 = vcombine.low %v1269, %v1277
      %v2271 = vunpack.c.l.s4 1983009808
      %v2272 = vunpack.c.0.s8 %v2271
      %v2273 = vlaneseq
      %v2274 = vshrl.u32 %v2273, 7
      %v2275 = vsub.s32 %v2272, %v2274
      %v2276 = vrot.slane %v2269, %v2275
      %v2277 = vcombine.low %v2199, %v2276
      %v2279 = vcombine.low %v1716, %v1726
      %v2281 = vunpack.c.l.s4 1983009808
      %v2282 = vunpack.c.0.s8 %v2281
      %v2283 = vlaneseq
      %v2284 = vshrl.u32 %v2283, 7
      %v2285 = vsub.s32 %v2282, %v2284
      %v2286 = vrot.slane %v2279, %v2285
      %v2287 = vcombine.low %v2215, %v2286
      %v2289 = vcombine.low %v1730, %v1733
      %v2291 = vunpack.c.l.s4 1983009808
      %v2292 = vunpack.c.0.s8 %v2291
      %v2293 = vlaneseq
      %v2294 = vshrl.u32 %v2293, 7
      %v2295 = vsub.s32 %v2292, %v2294
      %v2296 = vrot.slane %v2289, %v2295
      %v2297 = vcombine.low %v2231, %v2296
      %v2299 = vcombine.low %v1738, %v1744
      %v2301 = vunpack.c.l.s4 1983009808
      %v2302 = vunpack.c.0.s8 %v2301
      %v2303 = vlaneseq
      %v2304 = vshrl.u32 %v2303, 7
      %v2305 = vsub.s32 %v2302, %v2304
      %v2306 = vrot.slane %v2299, %v2305
      %v2307 = vcombine.low %v2247, %v2306
      %v2309 = vcombine.low %v1277, %v1285
      %v2311 = vunpack.c.l.s4 1983009808
      %v2312 = vunpack.c.0.s8 %v2311
      %v2313 = vlaneseq
      %v2314 = vshrl.u32 %v2313, 7
      %v2315 = vsub.s32 %v2312, %v2314
      %v2316 = vrot.slane %v2309, %v2315
      %v2317 = vcombine.low %v2263, %v2316
      %v2319 = vcombine.low %v1284, %v1286
      %v2321 = vunpack.c.l.s4 1983009808
      %v2322 = vunpack.c.0.s8 %v2321
      %v2323 = vlaneseq
      %v2324 = vshrl.u32 %v2323, 7
      %v2325 = vsub.s32 %v2322, %v2324
      %v2326 = vrot.slane %v2319, %v2325
      %v2327 = vcombine.low %v2276, %v2326
      %v2329 = vcombine.low %v1758, %v1768
      %v2331 = vunpack.c.l.s4 1983009808
      %v2332 = vunpack.c.0.s8 %v2331
      %v2333 = vlaneseq
      %v2334 = vshrl.u32 %v2333, 7
      %v2335 = vsub.s32 %v2332, %v2334
      %v2336 = vrot.slane %v2329, %v2335
      %v2337 = vcombine.low %v2286, %v2336
      %v2339 = vcombine.low %v1772, %v1775
      %v2341 = vunpack.c.l.s4 1983009808
      %v2342 = vunpack.c.0.s8 %v2341
      %v2343 = vlaneseq
      %v2344 = vshrl.u32 %v2343, 7
      %v2345 = vsub.s32 %v2342, %v2344
      %v2346 = vrot.slane %v2339, %v2345
      %v2347 = vcombine.low %v2296, %v2346
      %v2349 = vcombine.low %v1780, %v1786
      %v2351 = vunpack.c.l.s4 1983009808
      %v2352 = vunpack.c.0.s8 %v2351
      %v2353 = vlaneseq
      %v2354 = vshrl.u32 %v2353, 7
      %v2355 = vsub.s32 %v2352, %v2354
      %v2356 = vrot.slane %v2349, %v2355
      %v2357 = vcombine.low %v2306, %v2356
      %v2359 = vcombine.low %v1286, %v1294
      %v2361 = vunpack.c.l.s4 1983009808
      %v2362 = vunpack.c.0.s8 %v2361
      %v2363 = vlaneseq
      %v2364 = vshrl.u32 %v2363, 7
      %v2365 = vsub.s32 %v2362, %v2364
      %v2366 = vrot.slane %v2359, %v2365
      %v2367 = vcombine.low %v2316, %v2366
      %v2369 = vcombine.low %v1302, %v1301
      %v2371 = vunpack.c.l.s4 1983009808
      %v2372 = vunpack.c.0.s8 %v2371
      %v2373 = vlaneseq
      %v2374 = vshrl.u32 %v2373, 7
      %v2375 = vsub.s32 %v2372, %v2374
      %v2376 = vrot.slane %v2369, %v2375
      %v2377 = vcombine.low %v2326, %v2376
      %v2379 = vcombine.low %v1800, %v1810
      %v2381 = vunpack.c.l.s4 1983009808
      %v2382 = vunpack.c.0.s8 %v2381
      %v2383 = vlaneseq
      %v2384 = vshrl.u32 %v2383, 7
      %v2385 = vsub.s32 %v2382, %v2384
      %v2386 = vrot.slane %v2379, %v2385
      %v2387 = vcombine.low %v2336, %v2386
      %v2389 = vcombine.low %v1814, %v1817
      %v2391 = vunpack.c.l.s4 1983009808
      %v2392 = vunpack.c.0.s8 %v2391
      %v2393 = vlaneseq
      %v2394 = vshrl.u32 %v2393, 7
      %v2395 = vsub.s32 %v2392, %v2394
      %v2396 = vrot.slane %v2389, %v2395
      %v2397 = vcombine.low %v2346, %v2396
      %v2399 = vcombine.low %v1822, %v1828
      %v2401 = vunpack.c.l.s4 1983009808
      %v2402 = vunpack.c.0.s8 %v2401
      %v2403 = vlaneseq
      %v2404 = vshrl.u32 %v2403, 7
      %v2405 = vsub.s32 %v2402, %v2404
      %v2406 = vrot.slane %v2399, %v2405
      %v2407 = vcombine.low %v2356, %v2406
      %v2409 = vcombine.low %v1301, %v1303
      %v2411 = vunpack.c.l.s4 1983009808
      %v2412 = vunpack.c.0.s8 %v2411
      %v2413 = vlaneseq
      %v2414 = vshrl.u32 %v2413, 7
      %v2415 = vsub.s32 %v2412, %v2414
      %v2416 = vrot.slane %v2409, %v2415
      %v2417 = vcombine.low %v2366, %v2416
      %v2419 = vld [vmem:[%s3] sm:$0xf]
      %v2420 = vld [vmem:[%s3 + $0x4] sm:$0xf]
      %v2421 = vld [vmem:[%s3 + $0x8] sm:$0xf]
      %v2422 = vld [vmem:[%s3 + $0xc] sm:$0xf]
      %v2423 = vld [vmem:[%s3 + $0x10] sm:$0xf]
      %v2424 = vld [vmem:[%s3 + $0x14] sm:$0xf]
      %v2425 = vld [vmem:[%s3 + $0x18] sm:$0xf]
      %v2426 = vld [vmem:[%s3 + $0x1c] sm:$0xf]
      %v2427 = vld [vmem:[%s3 + $0x20] sm:$0xf]
      %v2428 = vld [vmem:[%s3 + $0x24] sm:$0xf]
      %v2429 = vld [vmem:[%s3 + $0x28] sm:$0xf]
      %v2430 = vld [vmem:[%s3 + $0x2c] sm:$0xf]
      %v2431 = vld [vmem:[%s3 + $0x30] sm:$0xf]
      %v2432 = vld [vmem:[%s3 + $0x34] sm:$0xf]
      %v2433 = vld [vmem:[%s3 + $0x38] sm:$0xf]
      %v2434 = vld [vmem:[%s3 + $0x3c] sm:$0xf]
      %v2435 = vld [vmem:[%s3 + $0x40] sm:$0xf]
      %v2436 = vld [vmem:[%s3 + $0x44] sm:$0xf]
      %v2437 = vld [vmem:[%s3 + $0x48] sm:$0xf]
      %v2438 = vld [vmem:[%s3 + $0x4c] sm:$0xf]
      %v2439 = vld [vmem:[%s3 + $0x50] sm:$0xf]
      %v2440 = vld [vmem:[%s3 + $0x54] sm:$0xf]
      %v2441 = vld [vmem:[%s3 + $0x58] sm:$0xf]
      %v2442 = vld [vmem:[%s3 + $0x5c] sm:$0xf]
      %v2443 = vld [vmem:[%s3 + $0x60] sm:$0xf]
      %v2444 = vld [vmem:[%s3 + $0x64] sm:$0xf]
      %v2445 = vld [vmem:[%s3 + $0x68] sm:$0xf]
      %v2446 = vld [vmem:[%s3 + $0x6c] sm:$0xf]
      %v2447 = vld [vmem:[%s3 + $0x70] sm:$0xf]
      %v2448 = vld [vmem:[%s3 + $0x74] sm:$0xf]
      %v2449 = vld [vmem:[%s3 + $0x78] sm:$0xf]
      %v2450 = vld [vmem:[%s3 + $0x7c] sm:$0xf]
      %v2451 = vld [vmem:[%s3 + $0x80] sm:$0xf]
      %v2452 = vld [vmem:[%s3 + $0x84] sm:$0xf]
      %v2453 = vld [vmem:[%s3 + $0x88] sm:$0xf]
      %v2454 = vld [vmem:[%s3 + $0x8c] sm:$0xf]
      %v2455 = vld [vmem:[%s3 + $0x90] sm:$0xf]
      %v2456 = vld [vmem:[%s3 + $0x94] sm:$0xf]
      %v2457 = vld [vmem:[%s3 + $0x98] sm:$0xf]
      %v2458 = vld [vmem:[%s3 + $0x9c] sm:$0xf]
      %v2459 = vld [vmem:[%s3 + $0xa0] sm:$0xf]
      %v2460 = vld [vmem:[%s3 + $0xa4] sm:$0xf]
      %v2461 = vld [vmem:[%s3 + $0xa8] sm:$0xf]
      %v2462 = vld [vmem:[%s3 + $0xac] sm:$0xf]
      %v2463 = vld [vmem:[%s3 + $0xb0] sm:$0xf]
      %v2464 = vld [vmem:[%s3 + $0xb4] sm:$0xf]
      %v2465 = vld [vmem:[%s3 + $0xb8] sm:$0xf]
      %v2466 = vld [vmem:[%s3 + $0xbc] sm:$0xf]
      %v2467 = vld [vmem:[%s3 + $0xc0] sm:$0xf]
      %v2468 = vld [vmem:[%s3 + $0xc4] sm:$0xf]
      %v2469 = vld [vmem:[%s3 + $0xc8] sm:$0xf]
      %v2470 = vld [vmem:[%s3 + $0xcc] sm:$0xf]
      %v2471 = vld [vmem:[%s3 + $0xd0] sm:$0xf]
      %v2472 = vld [vmem:[%s3 + $0xd4] sm:$0xf]
      %v2473 = vld [vmem:[%s3 + $0xd8] sm:$0xf]
      %v2474 = vld [vmem:[%s3 + $0xdc] sm:$0xf]
      %v2475 = vld [vmem:[%s3 + $0xe0] sm:$0xf]
      %v2476 = vld [vmem:[%s3 + $0xe4] sm:$0xf]
      %v2477 = vld [vmem:[%s3 + $0xe8] sm:$0xf]
      %v2478 = vld [vmem:[%s3 + $0xec] sm:$0xf]
      %v2479 = vld [vmem:[%s3 + $0xf0] sm:$0xf]
      %v2480 = vld [vmem:[%s3 + $0xf4] sm:$0xf]
      %v2481 = vld [vmem:[%s3 + $0xf8] sm:$0xf]
      %v2482 = vld [vmem:[%s3 + $0xfc] sm:$0xf]
      %v2483 = vld [vmem:[%s3 + $0x100] sm:$0xf]
      %v2484 = vld [vmem:[%s3 + $0x104] sm:$0xf]
      %v2485 = vld [vmem:[%s3 + $0x108] sm:$0xf]
      %v2486 = vld [vmem:[%s3 + $0x10c] sm:$0xf]
      %v2487 = vld [vmem:[%s3 + $0x110] sm:$0xf]
      %v2488 = vld [vmem:[%s3 + $0x114] sm:$0xf]
      %v2489 = vld [vmem:[%s3 + $0x118] sm:$0xf]
      %v2490 = vld [vmem:[%s3 + $0x11c] sm:$0xf]
      %v2491 = vld [vmem:[%s3 + $0x120] sm:$0xf]
      %v2492 = vld [vmem:[%s3 + $0x124] sm:$0xf]
      %v2493 = vld [vmem:[%s3 + $0x128] sm:$0xf]
      %v2494 = vld [vmem:[%s3 + $0x12c] sm:$0xf]
      %v2495 = vld [vmem:[%s3 + $0x130] sm:$0xf]
      %v2496 = vld [vmem:[%s3 + $0x134] sm:$0xf]
      %v2497 = vld [vmem:[%s3 + $0x138] sm:$0xf]
      %v2498 = vld [vmem:[%s3 + $0x13c] sm:$0xf]
      %v2499 = vld [vmem:[%s3 + $0x140] sm:$0xf]
      %v2500 = vld [vmem:[%s3 + $0x144] sm:$0xf]
      %v2501 = vld [vmem:[%s3 + $0x148] sm:$0xf]
      %v2502 = vld [vmem:[%s3 + $0x14c] sm:$0xf]
      %v2503 = vld [vmem:[%s3 + $0x150] sm:$0xf]
      %v2504 = vld [vmem:[%s3 + $0x154] sm:$0xf]
      %v2505 = vld [vmem:[%s3 + $0x158] sm:$0xf]
      %v2506 = vld [vmem:[%s3 + $0x15c] sm:$0xf]
      %v2507 = vld [vmem:[%s3 + $0x160] sm:$0xf]
      %v2508 = vld [vmem:[%s3 + $0x164] sm:$0xf]
      %v2509 = vld [vmem:[%s3 + $0x168] sm:$0xf]
      %v2510 = vld [vmem:[%s3 + $0x16c] sm:$0xf]
      %v2511 = vld [vmem:[%s3 + $0x170] sm:$0xf]
      %v2512 = vld [vmem:[%s3 + $0x174] sm:$0xf]
      %v2513 = vld [vmem:[%s3 + $0x178] sm:$0xf]
      %v2514 = vld [vmem:[%s3 + $0x17c] sm:$0xf]
      %v2515 = vld [vmem:[%s3 + $0x180] sm:$0xf]
      %v2516 = vld [vmem:[%s3 + $0x184] sm:$0xf]
      %v2517 = vld [vmem:[%s3 + $0x188] sm:$0xf]
      %v2518 = vld [vmem:[%s3 + $0x18c] sm:$0xf]
      %v2519 = vld [vmem:[%s3 + $0x190] sm:$0xf]
      %v2520 = vld [vmem:[%s3 + $0x194] sm:$0xf]
      %v2521 = vld [vmem:[%s3 + $0x198] sm:$0xf]
      %v2522 = vld [vmem:[%s3 + $0x19c] sm:$0xf]
      %v2523 = vld [vmem:[%s3 + $0x1a0] sm:$0xf]
      %v2524 = vld [vmem:[%s3 + $0x1a4] sm:$0xf]
      %v2525 = vld [vmem:[%s3 + $0x1a8] sm:$0xf]
      %v2526 = vld [vmem:[%s3 + $0x1ac] sm:$0xf]
      %v2527 = vld [vmem:[%s3 + $0x1b0] sm:$0xf]
      %v2528 = vld [vmem:[%s3 + $0x1b4] sm:$0xf]
      %v2529 = vld [vmem:[%s3 + $0x1b8] sm:$0xf]
      %v2530 = vld [vmem:[%s3 + $0x1bc] sm:$0xf]
      %v2531 = vld [vmem:[%s3 + $0x1c0] sm:$0xf]
      %v2532 = vld [vmem:[%s3 + $0x1c4] sm:$0xf]
      %v2533 = vld [vmem:[%s3 + $0x1c8] sm:$0xf]
      %v2534 = vld [vmem:[%s3 + $0x1cc] sm:$0xf]
      %v2535 = vld [vmem:[%s3 + $0x1d0] sm:$0xf]
      %v2536 = vld [vmem:[%s3 + $0x1d4] sm:$0xf]
      %v2537 = vld [vmem:[%s3 + $0x1d8] sm:$0xf]
      %v2538 = vld [vmem:[%s3 + $0x1dc] sm:$0xf]
      %v2539 = vld [vmem:[%s3 + $0x1e0] sm:$0xf]
      %v2540 = vld [vmem:[%s3 + $0x1e4] sm:$0xf]
      %v2541 = vld [vmem:[%s3 + $0x1e8] sm:$0xf]
      %v2542 = vld [vmem:[%s3 + $0x1ec] sm:$0xf]
      %v2543 = vld [vmem:[%s3 + $0x1f0] sm:$0xf]
      %v2544 = vld [vmem:[%s3 + $0x1f4] sm:$0xf]
      %v2545 = vld [vmem:[%s3 + $0x1f8] sm:$0xf]
      %v2546 = vld [vmem:[%s3 + $0x1fc] sm:$0xf]
      %v2547 = vld [vmem:[%s3 + $0x200] sm:$0xf]
      %v2548 = vld [vmem:[%s3 + $0x204] sm:$0xf]
      %v2549 = vld [vmem:[%s3 + $0x208] sm:$0xf]
      %v2550 = vld [vmem:[%s3 + $0x20c] sm:$0xf]
      %v2551 = vld [vmem:[%s3 + $0x210] sm:$0xf]
      %v2552 = vld [vmem:[%s3 + $0x214] sm:$0xf]
      %v2553 = vld [vmem:[%s3 + $0x218] sm:$0xf]
      %v2554 = vld [vmem:[%s3 + $0x21c] sm:$0xf]
      %v2555 = vld [vmem:[%s3 + $0x220] sm:$0xf]
      %v2556 = vld [vmem:[%s3 + $0x224] sm:$0xf]
      %v2557 = vld [vmem:[%s3 + $0x228] sm:$0xf]
      %v2558 = vld [vmem:[%s3 + $0x22c] sm:$0xf]
      %v2559 = vld [vmem:[%s3 + $0x230] sm:$0xf]
      %v2560 = vld [vmem:[%s3 + $0x234] sm:$0xf]
      %v2561 = vld [vmem:[%s3 + $0x238] sm:$0xf]
      %v2562 = vld [vmem:[%s3 + $0x23c] sm:$0xf]
      %v2563 = vld [vmem:[%s3 + $0x240] sm:$0xf]
      %v2564 = vld [vmem:[%s3 + $0x244] sm:$0xf]
      %v2565 = vld [vmem:[%s3 + $0x248] sm:$0xf]
      %v2566 = vld [vmem:[%s3 + $0x24c] sm:$0xf]
      %v2567 = vld [vmem:[%s3 + $0x250] sm:$0xf]
      %v2568 = vld [vmem:[%s3 + $0x254] sm:$0xf]
      %v2569 = vld [vmem:[%s3 + $0x258] sm:$0xf]
      %v2570 = vld [vmem:[%s3 + $0x25c] sm:$0xf]
      %v2571 = vld [vmem:[%s3 + $0x260] sm:$0xf]
      %v2572 = vld [vmem:[%s3 + $0x264] sm:$0xf]
      %v2573 = vld [vmem:[%s3 + $0x268] sm:$0xf]
      %v2574 = vld [vmem:[%s3 + $0x26c] sm:$0xf]
      %v2575 = vld [vmem:[%s3 + $0x270] sm:$0xf]
      %v2576 = vld [vmem:[%s3 + $0x274] sm:$0xf]
      %v2577 = vld [vmem:[%s3 + $0x278] sm:$0xf]
      %v2578 = vld [vmem:[%s3 + $0x27c] sm:$0xf]
      %v2579 = vld [vmem:[%s3 + $0x280] sm:$0xf]
      %v2580 = vld [vmem:[%s3 + $0x284] sm:$0xf]
      %v2581 = vld [vmem:[%s3 + $0x288] sm:$0xf]
      %v2582 = vld [vmem:[%s3 + $0x28c] sm:$0xf]
      %v2583 = vld [vmem:[%s3 + $0x290] sm:$0xf]
      %v2584 = vld [vmem:[%s3 + $0x294] sm:$0xf]
      %v2585 = vld [vmem:[%s3 + $0x298] sm:$0xf]
      %v2586 = vld [vmem:[%s3 + $0x29c] sm:$0xf]
      %v2587 = vld [vmem:[%s3 + $0x2a0] sm:$0xf]
      %v2588 = vld [vmem:[%s3 + $0x2a4] sm:$0xf]
      %v2589 = vld [vmem:[%s3 + $0x2a8] sm:$0xf]
      %v2590 = vld [vmem:[%s3 + $0x2ac] sm:$0xf]
      %v2591 = vld [vmem:[%s3 + $0x2b0] sm:$0xf]
      %v2592 = vld [vmem:[%s3 + $0x2b4] sm:$0xf]
      %v2593 = vld [vmem:[%s3 + $0x2b8] sm:$0xf]
      %v2594 = vld [vmem:[%s3 + $0x2bc] sm:$0xf]
      %v2595 = vld [vmem:[%s3 + $0x2c0] sm:$0xf]
      %v2596 = vld [vmem:[%s3 + $0x2c4] sm:$0xf]
      %v2597 = vld [vmem:[%s3 + $0x2c8] sm:$0xf]
      %v2598 = vld [vmem:[%s3 + $0x2cc] sm:$0xf]
      %v2599 = vld [vmem:[%s3 + $0x2d0] sm:$0xf]
      %v2600 = vld [vmem:[%s3 + $0x2d4] sm:$0xf]
      %v2601 = vld [vmem:[%s3 + $0x2d8] sm:$0xf]
      %v2602 = vld [vmem:[%s3 + $0x2dc] sm:$0xf]
      %v2603 = vld [vmem:[%s3 + $0x2e0] sm:$0xf]
      %v2604 = vld [vmem:[%s3 + $0x2e4] sm:$0xf]
      %v2605 = vld [vmem:[%s3 + $0x2e8] sm:$0xf]
      %v2606 = vld [vmem:[%s3 + $0x2ec] sm:$0xf]
      %v2607 = vld [vmem:[%s3 + $0x2f0] sm:$0xf]
      %v2608 = vld [vmem:[%s3 + $0x2f4] sm:$0xf]
      %v2609 = vld [vmem:[%s3 + $0x2f8] sm:$0xf]
      %v2610 = vld [vmem:[%s3 + $0x2fc] sm:$0xf]
      %v2611 = vld [vmem:[%s3 + $0x300] sm:$0xf]
      %v2612 = vld [vmem:[%s3 + $0x304] sm:$0xf]
      %v2613 = vld [vmem:[%s3 + $0x308] sm:$0xf]
      %v2614 = vld [vmem:[%s3 + $0x30c] sm:$0xf]
      %v2615 = vld [vmem:[%s3 + $0x310] sm:$0xf]
      %v2616 = vld [vmem:[%s3 + $0x314] sm:$0xf]
      %v2617 = vld [vmem:[%s3 + $0x318] sm:$0xf]
      %v2618 = vld [vmem:[%s3 + $0x31c] sm:$0xf]
      %v2619 = vld [vmem:[%s3 + $0x320] sm:$0xf]
      %v2620 = vld [vmem:[%s3 + $0x324] sm:$0xf]
      %v2621 = vld [vmem:[%s3 + $0x328] sm:$0xf]
      %v2622 = vld [vmem:[%s3 + $0x32c] sm:$0xf]
      %v2623 = vld [vmem:[%s3 + $0x330] sm:$0xf]
      %v2624 = vld [vmem:[%s3 + $0x334] sm:$0xf]
      %v2625 = vld [vmem:[%s3 + $0x338] sm:$0xf]
      %v2626 = vld [vmem:[%s3 + $0x33c] sm:$0xf]
      %v2627 = vld [vmem:[%s3 + $0x340] sm:$0xf]
      %v2628 = vld [vmem:[%s3 + $0x344] sm:$0xf]
      %v2629 = vld [vmem:[%s3 + $0x348] sm:$0xf]
      %v2630 = vld [vmem:[%s3 + $0x34c] sm:$0xf]
      %v2631 = vld [vmem:[%s3 + $0x350] sm:$0xf]
      %v2632 = vld [vmem:[%s3 + $0x354] sm:$0xf]
      %v2633 = vld [vmem:[%s3 + $0x358] sm:$0xf]
      %v2634 = vld [vmem:[%s3 + $0x35c] sm:$0xf]
      %v2635 = vld [vmem:[%s3 + $0x360] sm:$0xf]
      %v2636 = vld [vmem:[%s3 + $0x364] sm:$0xf]
      %v2637 = vld [vmem:[%s3 + $0x368] sm:$0xf]
      %v2638 = vld [vmem:[%s3 + $0x36c] sm:$0xf]
      %v2639 = vld [vmem:[%s3 + $0x370] sm:$0xf]
      %v2640 = vld [vmem:[%s3 + $0x374] sm:$0xf]
      %v2641 = vld [vmem:[%s3 + $0x378] sm:$0xf]
      %v2642 = vld [vmem:[%s3 + $0x37c] sm:$0xf]
      %v2643 = vld [vmem:[%s3 + $0x380] sm:$0xf]
      %v2644 = vld [vmem:[%s3 + $0x384] sm:$0xf]
      %v2645 = vld [vmem:[%s3 + $0x388] sm:$0xf]
      %v2646 = vld [vmem:[%s3 + $0x38c] sm:$0xf]
      %v2647 = vld [vmem:[%s3 + $0x390] sm:$0xf]
      %v2648 = vld [vmem:[%s3 + $0x394] sm:$0xf]
      %v2649 = vld [vmem:[%s3 + $0x398] sm:$0xf]
      %v2650 = vld [vmem:[%s3 + $0x39c] sm:$0xf]
      %v2651 = vld [vmem:[%s3 + $0x3a0] sm:$0xf]
      %v2652 = vld [vmem:[%s3 + $0x3a4] sm:$0xf]
      %v2653 = vld [vmem:[%s3 + $0x3a8] sm:$0xf]
      %v2654 = vld [vmem:[%s3 + $0x3ac] sm:$0xf]
      %v2655 = vld [vmem:[%s3 + $0x3b0] sm:$0xf]
      %v2656 = vld [vmem:[%s3 + $0x3b4] sm:$0xf]
      %v2657 = vld [vmem:[%s3 + $0x3b8] sm:$0xf]
      %v2658 = vld [vmem:[%s3 + $0x3bc] sm:$0xf]
      %v2659 = vld [vmem:[%s3 + $0x3c0] sm:$0xf]
      %v2660 = vld [vmem:[%s3 + $0x3c4] sm:$0xf]
      %v2661 = vld [vmem:[%s3 + $0x3c8] sm:$0xf]
      %v2662 = vld [vmem:[%s3 + $0x3cc] sm:$0xf]
      %v2663 = vld [vmem:[%s3 + $0x3d0] sm:$0xf]
      %v2664 = vld [vmem:[%s3 + $0x3d4] sm:$0xf]
      %v2665 = vld [vmem:[%s3 + $0x3d8] sm:$0xf]
      %v2666 = vld [vmem:[%s3 + $0x3dc] sm:$0xf]
      %v2667 = vld [vmem:[%s3 + $0x3e0] sm:$0xf]
      %v2668 = vld [vmem:[%s3 + $0x3e4] sm:$0xf]
      %v2669 = vld [vmem:[%s3 + $0x3e8] sm:$0xf]
      %v2670 = vld [vmem:[%s3 + $0x3ec] sm:$0xf]
      %v2671 = vld [vmem:[%s3 + $0x3f0] sm:$0xf]
      %v2672 = vld [vmem:[%s3 + $0x3f4] sm:$0xf]
      %v2673 = vld [vmem:[%s3 + $0x3f8] sm:$0xf]
      %v2674 = vld [vmem:[%s3 + $0x3fc] sm:$0xf]
      %v2675 = vld [vmem:[%s3 + $0x400] sm:$0xf]
      %v2676 = vld [vmem:[%s3 + $0x404] sm:$0xf]
      %v2677 = vld [vmem:[%s3 + $0x408] sm:$0xf]
      %v2678 = vld [vmem:[%s3 + $0x40c] sm:$0xf]
      %v2679 = vld [vmem:[%s3 + $0x410] sm:$0xf]
      %v2680 = vld [vmem:[%s3 + $0x414] sm:$0xf]
      %v2681 = vld [vmem:[%s3 + $0x418] sm:$0xf]
      %v2682 = vld [vmem:[%s3 + $0x41c] sm:$0xf]
      %v2683 = vld [vmem:[%s3 + $0x420] sm:$0xf]
      %v2684 = vld [vmem:[%s3 + $0x424] sm:$0xf]
      %v2685 = vld [vmem:[%s3 + $0x428] sm:$0xf]
      %v2686 = vld [vmem:[%s3 + $0x42c] sm:$0xf]
      %v2687 = vld [vmem:[%s3 + $0x430] sm:$0xf]
      %v2688 = vld [vmem:[%s3 + $0x434] sm:$0xf]
      %v2689 = vld [vmem:[%s3 + $0x438] sm:$0xf]
      %v2690 = vld [vmem:[%s3 + $0x43c] sm:$0xf]
      %v2691 = vld [vmem:[%s3 + $0x440] sm:$0xf]
      %v2692 = vld [vmem:[%s3 + $0x444] sm:$0xf]
      %v2693 = vld [vmem:[%s3 + $0x448] sm:$0xf]
      %v2694 = vld [vmem:[%s3 + $0x44c] sm:$0xf]
      %v2695 = vld [vmem:[%s3 + $0x450] sm:$0xf]
      %v2696 = vld [vmem:[%s3 + $0x454] sm:$0xf]
      %v2697 = vld [vmem:[%s3 + $0x458] sm:$0xf]
      %v2698 = vld [vmem:[%s3 + $0x45c] sm:$0xf]
      %v2699 = vld [vmem:[%s3 + $0x460] sm:$0xf]
      %v2700 = vld [vmem:[%s3 + $0x464] sm:$0xf]
      %v2701 = vld [vmem:[%s3 + $0x468] sm:$0xf]
      %v2702 = vld [vmem:[%s3 + $0x46c] sm:$0xf]
      %v2703 = vld [vmem:[%s3 + $0x470] sm:$0xf]
      %v2704 = vld [vmem:[%s3 + $0x474] sm:$0xf]
      %v2705 = vld [vmem:[%s3 + $0x478] sm:$0xf]
      %v2706 = vld [vmem:[%s3 + $0x47c] sm:$0xf]
      %v2707 = vld [vmem:[%s3 + $0x480] sm:$0xf]
      %v2708 = vld [vmem:[%s3 + $0x484] sm:$0xf]
      %v2709 = vld [vmem:[%s3 + $0x488] sm:$0xf]
      %v2710 = vld [vmem:[%s3 + $0x48c] sm:$0xf]
      %v2711 = vld [vmem:[%s3 + $0x490] sm:$0xf]
      %v2712 = vld [vmem:[%s3 + $0x494] sm:$0xf]
      %v2713 = vld [vmem:[%s3 + $0x498] sm:$0xf]
      %v2714 = vld [vmem:[%s3 + $0x49c] sm:$0xf]
      %v2715 = vld [vmem:[%s3 + $0x4a0] sm:$0xf]
      %v2716 = vld [vmem:[%s3 + $0x4a4] sm:$0xf]
      %v2717 = vld [vmem:[%s3 + $0x4a8] sm:$0xf]
      %v2718 = vld [vmem:[%s3 + $0x4ac] sm:$0xf]
      %v2719 = vld [vmem:[%s3 + $0x4b0] sm:$0xf]
      %v2720 = vld [vmem:[%s3 + $0x4b4] sm:$0xf]
      %v2721 = vld [vmem:[%s3 + $0x4b8] sm:$0xf]
      %v2722 = vld [vmem:[%s3 + $0x4bc] sm:$0xf]
      %v2723 = vld [vmem:[%s3 + $0x4c0] sm:$0xf]
      %v2724 = vld [vmem:[%s3 + $0x4c4] sm:$0xf]
      %v2725 = vld [vmem:[%s3 + $0x4c8] sm:$0xf]
      %v2726 = vld [vmem:[%s3 + $0x4cc] sm:$0xf]
      %v2727 = vld [vmem:[%s3 + $0x4d0] sm:$0xf]
      %v2728 = vld [vmem:[%s3 + $0x4d4] sm:$0xf]
      %v2729 = vld [vmem:[%s3 + $0x4d8] sm:$0xf]
      %v2730 = vld [vmem:[%s3 + $0x4dc] sm:$0xf]
      %v2731 = vld [vmem:[%s3 + $0x4e0] sm:$0xf]
      %v2732 = vld [vmem:[%s3 + $0x4e4] sm:$0xf]
      %v2733 = vld [vmem:[%s3 + $0x4e8] sm:$0xf]
      %v2734 = vld [vmem:[%s3 + $0x4ec] sm:$0xf]
      %v2735 = vld [vmem:[%s3 + $0x4f0] sm:$0xf]
      %v2736 = vld [vmem:[%s3 + $0x4f4] sm:$0xf]
      %v2737 = vld [vmem:[%s3 + $0x4f8] sm:$0xf]
      %v2738 = vld [vmem:[%s3 + $0x4fc] sm:$0xf]
      %v2739 = vld [vmem:[%s3 + $0x500] sm:$0xf]
      %v2740 = vld [vmem:[%s3 + $0x504] sm:$0xf]
      %v2741 = vld [vmem:[%s3 + $0x508] sm:$0xf]
      %v2742 = vld [vmem:[%s3 + $0x50c] sm:$0xf]
      %v2743 = vld [vmem:[%s3 + $0x510] sm:$0xf]
      %v2744 = vld [vmem:[%s3 + $0x514] sm:$0xf]
      %v2745 = vld [vmem:[%s3 + $0x518] sm:$0xf]
      %v2746 = vld [vmem:[%s3 + $0x51c] sm:$0xf]
      %v2747 = vld [vmem:[%s3 + $0x520] sm:$0xf]
      %v2748 = vld [vmem:[%s3 + $0x524] sm:$0xf]
      %v2749 = vld [vmem:[%s3 + $0x528] sm:$0xf]
      %v2750 = vld [vmem:[%s3 + $0x52c] sm:$0xf]
      %v2751 = vld [vmem:[%s3 + $0x530] sm:$0xf]
      %v2752 = vld [vmem:[%s3 + $0x534] sm:$0xf]
      %v2753 = vld [vmem:[%s3 + $0x538] sm:$0xf]
      %v2754 = vld [vmem:[%s3 + $0x53c] sm:$0xf]
      %v2755 = vld [vmem:[%s3 + $0x540] sm:$0xf]
      %v2756 = vld [vmem:[%s3 + $0x544] sm:$0xf]
      %v2757 = vld [vmem:[%s3 + $0x548] sm:$0xf]
      %v2758 = vld [vmem:[%s3 + $0x54c] sm:$0xf]
      %v2759 = vld [vmem:[%s3 + $0x550] sm:$0xf]
      %v2760 = vld [vmem:[%s3 + $0x554] sm:$0xf]
      %v2761 = vld [vmem:[%s3 + $0x558] sm:$0xf]
      %v2762 = vld [vmem:[%s3 + $0x55c] sm:$0xf]
      %v2763 = vld [vmem:[%s3 + $0x560] sm:$0xf]
      %v2764 = vld [vmem:[%s3 + $0x564] sm:$0xf]
      %v2765 = vld [vmem:[%s3 + $0x568] sm:$0xf]
      %v2766 = vld [vmem:[%s3 + $0x56c] sm:$0xf]
      %v2767 = vld [vmem:[%s3 + $0x570] sm:$0xf]
      %v2768 = vld [vmem:[%s3 + $0x574] sm:$0xf]
      %v2769 = vld [vmem:[%s3 + $0x578] sm:$0xf]
      %v2770 = vld [vmem:[%s3 + $0x57c] sm:$0xf]
      %v2771 = vld [vmem:[%s3 + $0x580] sm:$0xf]
      %v2772 = vld [vmem:[%s3 + $0x584] sm:$0xf]
      %v2773 = vld [vmem:[%s3 + $0x588] sm:$0xf]
      %v2774 = vld [vmem:[%s3 + $0x58c] sm:$0xf]
      %v2775 = vld [vmem:[%s3 + $0x590] sm:$0xf]
      %v2776 = vld [vmem:[%s3 + $0x594] sm:$0xf]
      %v2777 = vld [vmem:[%s3 + $0x598] sm:$0xf]
      %v2778 = vld [vmem:[%s3 + $0x59c] sm:$0xf]
      %v2779 = vld [vmem:[%s3 + $0x5a0] sm:$0xf]
      %v2780 = vld [vmem:[%s3 + $0x5a4] sm:$0xf]
      %v2781 = vld [vmem:[%s3 + $0x5a8] sm:$0xf]
      %v2782 = vld [vmem:[%s3 + $0x5ac] sm:$0xf]
      %v2783 = vld [vmem:[%s3 + $0x5b0] sm:$0xf]
      %v2784 = vld [vmem:[%s3 + $0x5b4] sm:$0xf]
      %v2785 = vld [vmem:[%s3 + $0x5b8] sm:$0xf]
      %v2786 = vld [vmem:[%s3 + $0x5bc] sm:$0xf]
      %v2787 = vld [vmem:[%s3 + $0x5c0] sm:$0xf]
      %v2788 = vld [vmem:[%s3 + $0x5c4] sm:$0xf]
      %v2789 = vld [vmem:[%s3 + $0x5c8] sm:$0xf]
      %v2790 = vld [vmem:[%s3 + $0x5cc] sm:$0xf]
      %v2791 = vld [vmem:[%s3 + $0x5d0] sm:$0xf]
      %v2792 = vld [vmem:[%s3 + $0x5d4] sm:$0xf]
      %v2793 = vld [vmem:[%s3 + $0x5d8] sm:$0xf]
      %v2794 = vld [vmem:[%s3 + $0x5dc] sm:$0xf]
      %v2795 = vld [vmem:[%s3 + $0x5e0] sm:$0xf]
      %v2796 = vld [vmem:[%s3 + $0x5e4] sm:$0xf]
      %v2797 = vld [vmem:[%s3 + $0x5e8] sm:$0xf]
      %v2798 = vld [vmem:[%s3 + $0x5ec] sm:$0xf]
      %v2799 = vld [vmem:[%s3 + $0x5f0] sm:$0xf]
      %v2800 = vld [vmem:[%s3 + $0x5f4] sm:$0xf]
      %v2801 = vld [vmem:[%s3 + $0x5f8] sm:$0xf]
      %v2802 = vld [vmem:[%s3 + $0x5fc] sm:$0xf]
      %v2803 = vld [vmem:[%s3 + $0x600] sm:$0xf]
      %v2804 = vld [vmem:[%s3 + $0x604] sm:$0xf]
      %v2805 = vld [vmem:[%s3 + $0x608] sm:$0xf]
      %v2806 = vld [vmem:[%s3 + $0x60c] sm:$0xf]
      %v2807 = vld [vmem:[%s3 + $0x610] sm:$0xf]
      %v2808 = vld [vmem:[%s3 + $0x614] sm:$0xf]
      %v2809 = vld [vmem:[%s3 + $0x618] sm:$0xf]
      %v2810 = vld [vmem:[%s3 + $0x61c] sm:$0xf]
      %v2811 = vld [vmem:[%s3 + $0x620] sm:$0xf]
      %v2812 = vld [vmem:[%s3 + $0x624] sm:$0xf]
      %v2813 = vld [vmem:[%s3 + $0x628] sm:$0xf]
      %v2814 = vld [vmem:[%s3 + $0x62c] sm:$0xf]
      %v2815 = vld [vmem:[%s3 + $0x630] sm:$0xf]
      %v2816 = vld [vmem:[%s3 + $0x634] sm:$0xf]
      %v2817 = vld [vmem:[%s3 + $0x638] sm:$0xf]
      %v2818 = vld [vmem:[%s3 + $0x63c] sm:$0xf]
      %v3219 = vunpack.c.l.b16 %v2419
      %v3220 = vunpack.c.l.b16 %v2420
      %v3221 = vunpack.c.l.b16 %v2421
      %v3222 = vunpack.c.l.b16 %v2422
      %v3223 = vunpack.c.l.b16 %v2423
      %v3224 = vunpack.c.l.b16 %v2424
      %v3225 = vunpack.c.l.b16 %v2425
      %v3226 = vunpack.c.l.b16 %v2426
      %v3227 = vunpack.c.l.b16 %v2427
      %v3228 = vunpack.c.l.b16 %v2428
      %v3229 = vunpack.c.l.b16 %v2429
      %v3230 = vunpack.c.l.b16 %v2430
      %v3231 = vunpack.c.l.b16 %v2431
      %v3232 = vunpack.c.l.b16 %v2432
      %v3233 = vunpack.c.l.b16 %v2433
      %v3234 = vunpack.c.l.b16 %v2434
      %v3235 = vunpack.c.l.b16 %v2435
      %v3236 = vunpack.c.l.b16 %v2436
      %v3237 = vunpack.c.l.b16 %v2437
      %v3238 = vunpack.c.l.b16 %v2438
      %v3239 = vunpack.c.l.b16 %v2439
      %v3240 = vunpack.c.l.b16 %v2440
      %v3241 = vunpack.c.l.b16 %v2441
      %v3242 = vunpack.c.l.b16 %v2442
      %v3243 = vunpack.c.l.b16 %v2443
      %v3244 = vunpack.c.l.b16 %v2444
      %v3245 = vunpack.c.l.b16 %v2445
      %v3246 = vunpack.c.l.b16 %v2446
      %v3247 = vunpack.c.l.b16 %v2447
      %v3248 = vunpack.c.l.b16 %v2448
      %v3249 = vunpack.c.l.b16 %v2449
      %v3250 = vunpack.c.l.b16 %v2450
      %v3251 = vunpack.c.l.b16 %v2451
      %v3252 = vunpack.c.l.b16 %v2452
      %v3253 = vunpack.c.l.b16 %v2453
      %v3254 = vunpack.c.l.b16 %v2454
      %v3255 = vunpack.c.l.b16 %v2455
      %v3256 = vunpack.c.l.b16 %v2456
      %v3257 = vunpack.c.l.b16 %v2457
      %v3258 = vunpack.c.l.b16 %v2458
      %v3259 = vunpack.c.l.b16 %v2459
      %v3260 = vunpack.c.l.b16 %v2460
      %v3261 = vunpack.c.l.b16 %v2461
      %v3262 = vunpack.c.l.b16 %v2462
      %v3263 = vunpack.c.l.b16 %v2463
      %v3264 = vunpack.c.l.b16 %v2464
      %v3265 = vunpack.c.l.b16 %v2465
      %v3266 = vunpack.c.l.b16 %v2466
      %v3267 = vunpack.c.l.b16 %v2467
      %v3268 = vunpack.c.l.b16 %v2468
      %v3269 = vunpack.c.l.b16 %v2469
      %v3270 = vunpack.c.l.b16 %v2470
      %v3271 = vunpack.c.l.b16 %v2471
      %v3272 = vunpack.c.l.b16 %v2472
      %v3273 = vunpack.c.l.b16 %v2473
      %v3274 = vunpack.c.l.b16 %v2474
      %v3275 = vunpack.c.l.b16 %v2475
      %v3276 = vunpack.c.l.b16 %v2476
      %v3277 = vunpack.c.l.b16 %v2477
      %v3278 = vunpack.c.l.b16 %v2478
      %v3279 = vunpack.c.l.b16 %v2479
      %v3280 = vunpack.c.l.b16 %v2480
      %v3281 = vunpack.c.l.b16 %v2481
      %v3282 = vunpack.c.l.b16 %v2482
      %v3283 = vunpack.c.l.b16 %v2483
      %v3284 = vunpack.c.l.b16 %v2484
      %v3285 = vunpack.c.l.b16 %v2485
      %v3286 = vunpack.c.l.b16 %v2486
      %v3287 = vunpack.c.l.b16 %v2487
      %v3288 = vunpack.c.l.b16 %v2488
      %v3289 = vunpack.c.l.b16 %v2489
      %v3290 = vunpack.c.l.b16 %v2490
      %v3291 = vunpack.c.l.b16 %v2491
      %v3292 = vunpack.c.l.b16 %v2492
      %v3293 = vunpack.c.l.b16 %v2493
      %v3294 = vunpack.c.l.b16 %v2494
      %v3295 = vunpack.c.l.b16 %v2495
      %v3296 = vunpack.c.l.b16 %v2496
      %v3297 = vunpack.c.l.b16 %v2497
      %v3298 = vunpack.c.l.b16 %v2498
      %v3299 = vunpack.c.l.b16 %v2499
      %v3300 = vunpack.c.l.b16 %v2500
      %v3301 = vunpack.c.l.b16 %v2501
      %v3302 = vunpack.c.l.b16 %v2502
      %v3303 = vunpack.c.l.b16 %v2503
      %v3304 = vunpack.c.l.b16 %v2504
      %v3305 = vunpack.c.l.b16 %v2505
      %v3306 = vunpack.c.l.b16 %v2506
      %v3307 = vunpack.c.l.b16 %v2507
      %v3308 = vunpack.c.l.b16 %v2508
      %v3309 = vunpack.c.l.b16 %v2509
      %v3310 = vunpack.c.l.b16 %v2510
      %v3311 = vunpack.c.l.b16 %v2511
      %v3312 = vunpack.c.l.b16 %v2512
      %v3313 = vunpack.c.l.b16 %v2513
      %v3314 = vunpack.c.l.b16 %v2514
      %v3315 = vunpack.c.l.b16 %v2515
      %v3316 = vunpack.c.l.b16 %v2516
      %v3317 = vunpack.c.l.b16 %v2517
      %v3318 = vunpack.c.l.b16 %v2518
      %v3319 = vunpack.c.l.b16 %v2519
      %v3320 = vunpack.c.l.b16 %v2520
      %v3321 = vunpack.c.l.b16 %v2521
      %v3322 = vunpack.c.l.b16 %v2522
      %v3323 = vunpack.c.l.b16 %v2523
      %v3324 = vunpack.c.l.b16 %v2524
      %v3325 = vunpack.c.l.b16 %v2525
      %v3326 = vunpack.c.l.b16 %v2526
      %v3327 = vunpack.c.l.b16 %v2527
      %v3328 = vunpack.c.l.b16 %v2528
      %v3329 = vunpack.c.l.b16 %v2529
      %v3330 = vunpack.c.l.b16 %v2530
      %v3331 = vunpack.c.l.b16 %v2531
      %v3332 = vunpack.c.l.b16 %v2532
      %v3333 = vunpack.c.l.b16 %v2533
      %v3334 = vunpack.c.l.b16 %v2534
      %v3335 = vunpack.c.l.b16 %v2535
      %v3336 = vunpack.c.l.b16 %v2536
      %v3337 = vunpack.c.l.b16 %v2537
      %v3338 = vunpack.c.l.b16 %v2538
      %v3339 = vunpack.c.l.b16 %v2539
      %v3340 = vunpack.c.l.b16 %v2540
      %v3341 = vunpack.c.l.b16 %v2541
      %v3342 = vunpack.c.l.b16 %v2542
      %v3343 = vunpack.c.l.b16 %v2543
      %v3344 = vunpack.c.l.b16 %v2544
      %v3345 = vunpack.c.l.b16 %v2545
      %v3346 = vunpack.c.l.b16 %v2546
      %v3347 = vunpack.c.l.b16 %v2547
      %v3348 = vunpack.c.l.b16 %v2548
      %v3349 = vunpack.c.l.b16 %v2549
      %v3350 = vunpack.c.l.b16 %v2550
      %v3351 = vunpack.c.l.b16 %v2551
      %v3352 = vunpack.c.l.b16 %v2552
      %v3353 = vunpack.c.l.b16 %v2553
      %v3354 = vunpack.c.l.b16 %v2554
      %v3355 = vunpack.c.l.b16 %v2555
      %v3356 = vunpack.c.l.b16 %v2556
      %v3357 = vunpack.c.l.b16 %v2557
      %v3358 = vunpack.c.l.b16 %v2558
      %v3359 = vunpack.c.l.b16 %v2559
      %v3360 = vunpack.c.l.b16 %v2560
      %v3361 = vunpack.c.l.b16 %v2561
      %v3362 = vunpack.c.l.b16 %v2562
      %v3363 = vunpack.c.l.b16 %v2563
      %v3364 = vunpack.c.l.b16 %v2564
      %v3365 = vunpack.c.l.b16 %v2565
      %v3366 = vunpack.c.l.b16 %v2566
      %v3367 = vunpack.c.l.b16 %v2567
      %v3368 = vunpack.c.l.b16 %v2568
      %v3369 = vunpack.c.l.b16 %v2569
      %v3370 = vunpack.c.l.b16 %v2570
      %v3371 = vunpack.c.l.b16 %v2571
      %v3372 = vunpack.c.l.b16 %v2572
      %v3373 = vunpack.c.l.b16 %v2573
      %v3374 = vunpack.c.l.b16 %v2574
      %v3375 = vunpack.c.l.b16 %v2575
      %v3376 = vunpack.c.l.b16 %v2576
      %v3377 = vunpack.c.l.b16 %v2577
      %v3378 = vunpack.c.l.b16 %v2578
      %v3379 = vunpack.c.l.b16 %v2579
      %v3380 = vunpack.c.l.b16 %v2580
      %v3381 = vunpack.c.l.b16 %v2581
      %v3382 = vunpack.c.l.b16 %v2582
      %v3383 = vunpack.c.l.b16 %v2583
      %v3384 = vunpack.c.l.b16 %v2584
      %v3385 = vunpack.c.l.b16 %v2585
      %v3386 = vunpack.c.l.b16 %v2586
      %v3387 = vunpack.c.l.b16 %v2587
      %v3388 = vunpack.c.l.b16 %v2588
      %v3389 = vunpack.c.l.b16 %v2589
      %v3390 = vunpack.c.l.b16 %v2590
      %v3391 = vunpack.c.l.b16 %v2591
      %v3392 = vunpack.c.l.b16 %v2592
      %v3393 = vunpack.c.l.b16 %v2593
      %v3394 = vunpack.c.l.b16 %v2594
      %v3395 = vunpack.c.l.b16 %v2595
      %v3396 = vunpack.c.l.b16 %v2596
      %v3397 = vunpack.c.l.b16 %v2597
      %v3398 = vunpack.c.l.b16 %v2598
      %v3399 = vunpack.c.l.b16 %v2599
      %v3400 = vunpack.c.l.b16 %v2600
      %v3401 = vunpack.c.l.b16 %v2601
      %v3402 = vunpack.c.l.b16 %v2602
      %v3403 = vunpack.c.l.b16 %v2603
      %v3404 = vunpack.c.l.b16 %v2604
      %v3405 = vunpack.c.l.b16 %v2605
      %v3406 = vunpack.c.l.b16 %v2606
      %v3407 = vunpack.c.l.b16 %v2607
      %v3408 = vunpack.c.l.b16 %v2608
      %v3409 = vunpack.c.l.b16 %v2609
      %v3410 = vunpack.c.l.b16 %v2610
      %v3411 = vunpack.c.l.b16 %v2611
      %v3412 = vunpack.c.l.b16 %v2612
      %v3413 = vunpack.c.l.b16 %v2613
      %v3414 = vunpack.c.l.b16 %v2614
      %v3415 = vunpack.c.l.b16 %v2615
      %v3416 = vunpack.c.l.b16 %v2616
      %v3417 = vunpack.c.l.b16 %v2617
      %v3418 = vunpack.c.l.b16 %v2618
      %v3419 = vunpack.c.l.b16 %v2619
      %v3420 = vunpack.c.l.b16 %v2620
      %v3421 = vunpack.c.l.b16 %v2621
      %v3422 = vunpack.c.l.b16 %v2622
      %v3423 = vunpack.c.l.b16 %v2623
      %v3424 = vunpack.c.l.b16 %v2624
      %v3425 = vunpack.c.l.b16 %v2625
      %v3426 = vunpack.c.l.b16 %v2626
      %v3427 = vunpack.c.l.b16 %v2627
      %v3428 = vunpack.c.l.b16 %v2628
      %v3429 = vunpack.c.l.b16 %v2629
      %v3430 = vunpack.c.l.b16 %v2630
      %v3431 = vunpack.c.l.b16 %v2631
      %v3432 = vunpack.c.l.b16 %v2632
      %v3433 = vunpack.c.l.b16 %v2633
      %v3434 = vunpack.c.l.b16 %v2634
      %v3435 = vunpack.c.l.b16 %v2635
      %v3436 = vunpack.c.l.b16 %v2636
      %v3437 = vunpack.c.l.b16 %v2637
      %v3438 = vunpack.c.l.b16 %v2638
      %v3439 = vunpack.c.l.b16 %v2639
      %v3440 = vunpack.c.l.b16 %v2640
      %v3441 = vunpack.c.l.b16 %v2641
      %v3442 = vunpack.c.l.b16 %v2642
      %v3443 = vunpack.c.l.b16 %v2643
      %v3444 = vunpack.c.l.b16 %v2644
      %v3445 = vunpack.c.l.b16 %v2645
      %v3446 = vunpack.c.l.b16 %v2646
      %v3447 = vunpack.c.l.b16 %v2647
      %v3448 = vunpack.c.l.b16 %v2648
      %v3449 = vunpack.c.l.b16 %v2649
      %v3450 = vunpack.c.l.b16 %v2650
      %v3451 = vunpack.c.l.b16 %v2651
      %v3452 = vunpack.c.l.b16 %v2652
      %v3453 = vunpack.c.l.b16 %v2653
      %v3454 = vunpack.c.l.b16 %v2654
      %v3455 = vunpack.c.l.b16 %v2655
      %v3456 = vunpack.c.l.b16 %v2656
      %v3457 = vunpack.c.l.b16 %v2657
      %v3458 = vunpack.c.l.b16 %v2658
      %v3459 = vunpack.c.l.b16 %v2659
      %v3460 = vunpack.c.l.b16 %v2660
      %v3461 = vunpack.c.l.b16 %v2661
      %v3462 = vunpack.c.l.b16 %v2662
      %v3463 = vunpack.c.l.b16 %v2663
      %v3464 = vunpack.c.l.b16 %v2664
      %v3465 = vunpack.c.l.b16 %v2665
      %v3466 = vunpack.c.l.b16 %v2666
      %v3467 = vunpack.c.l.b16 %v2667
      %v3468 = vunpack.c.l.b16 %v2668
      %v3469 = vunpack.c.l.b16 %v2669
      %v3470 = vunpack.c.l.b16 %v2670
      %v3471 = vunpack.c.l.b16 %v2671
      %v3472 = vunpack.c.l.b16 %v2672
      %v3473 = vunpack.c.l.b16 %v2673
      %v3474 = vunpack.c.l.b16 %v2674
      %v3475 = vunpack.c.l.b16 %v2675
      %v3476 = vunpack.c.l.b16 %v2676
      %v3477 = vunpack.c.l.b16 %v2677
      %v3478 = vunpack.c.l.b16 %v2678
      %v3479 = vunpack.c.l.b16 %v2679
      %v3480 = vunpack.c.l.b16 %v2680
      %v3481 = vunpack.c.l.b16 %v2681
      %v3482 = vunpack.c.l.b16 %v2682
      %v3483 = vunpack.c.l.b16 %v2683
      %v3484 = vunpack.c.l.b16 %v2684
      %v3485 = vunpack.c.l.b16 %v2685
      %v3486 = vunpack.c.l.b16 %v2686
      %v3487 = vunpack.c.l.b16 %v2687
      %v3488 = vunpack.c.l.b16 %v2688
      %v3489 = vunpack.c.l.b16 %v2689
      %v3490 = vunpack.c.l.b16 %v2690
      %v3491 = vunpack.c.l.b16 %v2691
      %v3492 = vunpack.c.l.b16 %v2692
      %v3493 = vunpack.c.l.b16 %v2693
      %v3494 = vunpack.c.l.b16 %v2694
      %v3495 = vunpack.c.l.b16 %v2695
      %v3496 = vunpack.c.l.b16 %v2696
      %v3497 = vunpack.c.l.b16 %v2697
      %v3498 = vunpack.c.l.b16 %v2698
      %v3499 = vunpack.c.l.b16 %v2699
      %v3500 = vunpack.c.l.b16 %v2700
      %v3501 = vunpack.c.l.b16 %v2701
      %v3502 = vunpack.c.l.b16 %v2702
      %v3503 = vunpack.c.l.b16 %v2703
      %v3504 = vunpack.c.l.b16 %v2704
      %v3505 = vunpack.c.l.b16 %v2705
      %v3506 = vunpack.c.l.b16 %v2706
      %v3507 = vunpack.c.l.b16 %v2707
      %v3508 = vunpack.c.l.b16 %v2708
      %v3509 = vunpack.c.l.b16 %v2709
      %v3510 = vunpack.c.l.b16 %v2710
      %v3511 = vunpack.c.l.b16 %v2711
      %v3512 = vunpack.c.l.b16 %v2712
      %v3513 = vunpack.c.l.b16 %v2713
      %v3514 = vunpack.c.l.b16 %v2714
      %v3515 = vunpack.c.l.b16 %v2715
      %v3516 = vunpack.c.l.b16 %v2716
      %v3517 = vunpack.c.l.b16 %v2717
      %v3518 = vunpack.c.l.b16 %v2718
      %v3519 = vunpack.c.l.b16 %v2719
      %v3520 = vunpack.c.l.b16 %v2720
      %v3521 = vunpack.c.l.b16 %v2721
      %v3522 = vunpack.c.l.b16 %v2722
      %v3523 = vunpack.c.l.b16 %v2723
      %v3524 = vunpack.c.l.b16 %v2724
      %v3525 = vunpack.c.l.b16 %v2725
      %v3526 = vunpack.c.l.b16 %v2726
      %v3527 = vunpack.c.l.b16 %v2727
      %v3528 = vunpack.c.l.b16 %v2728
      %v3529 = vunpack.c.l.b16 %v2729
      %v3530 = vunpack.c.l.b16 %v2730
      %v3531 = vunpack.c.l.b16 %v2731
      %v3532 = vunpack.c.l.b16 %v2732
      %v3533 = vunpack.c.l.b16 %v2733
      %v3534 = vunpack.c.l.b16 %v2734
      %v3535 = vunpack.c.l.b16 %v2735
      %v3536 = vunpack.c.l.b16 %v2736
      %v3537 = vunpack.c.l.b16 %v2737
      %v3538 = vunpack.c.l.b16 %v2738
      %v3539 = vunpack.c.l.b16 %v2739
      %v3540 = vunpack.c.l.b16 %v2740
      %v3541 = vunpack.c.l.b16 %v2741
      %v3542 = vunpack.c.l.b16 %v2742
      %v3543 = vunpack.c.l.b16 %v2743
      %v3544 = vunpack.c.l.b16 %v2744
      %v3545 = vunpack.c.l.b16 %v2745
      %v3546 = vunpack.c.l.b16 %v2746
      %v3547 = vunpack.c.l.b16 %v2747
      %v3548 = vunpack.c.l.b16 %v2748
      %v3549 = vunpack.c.l.b16 %v2749
      %v3550 = vunpack.c.l.b16 %v2750
      %v3551 = vunpack.c.l.b16 %v2751
      %v3552 = vunpack.c.l.b16 %v2752
      %v3553 = vunpack.c.l.b16 %v2753
      %v3554 = vunpack.c.l.b16 %v2754
      %v3555 = vunpack.c.l.b16 %v2755
      %v3556 = vunpack.c.l.b16 %v2756
      %v3557 = vunpack.c.l.b16 %v2757
      %v3558 = vunpack.c.l.b16 %v2758
      %v3559 = vunpack.c.l.b16 %v2759
      %v3560 = vunpack.c.l.b16 %v2760
      %v3561 = vunpack.c.l.b16 %v2761
      %v3562 = vunpack.c.l.b16 %v2762
      %v3563 = vunpack.c.l.b16 %v2763
      %v3564 = vunpack.c.l.b16 %v2764
      %v3565 = vunpack.c.l.b16 %v2765
      %v3566 = vunpack.c.l.b16 %v2766
      %v3567 = vunpack.c.l.b16 %v2767
      %v3568 = vunpack.c.l.b16 %v2768
      %v3569 = vunpack.c.l.b16 %v2769
      %v3570 = vunpack.c.l.b16 %v2770
      %v3571 = vunpack.c.l.b16 %v2771
      %v3572 = vunpack.c.l.b16 %v2772
      %v3573 = vunpack.c.l.b16 %v2773
      %v3574 = vunpack.c.l.b16 %v2774
      %v3575 = vunpack.c.l.b16 %v2775
      %v3576 = vunpack.c.l.b16 %v2776
      %v3577 = vunpack.c.l.b16 %v2777
      %v3578 = vunpack.c.l.b16 %v2778
      %v3579 = vunpack.c.l.b16 %v2779
      %v3580 = vunpack.c.l.b16 %v2780
      %v3581 = vunpack.c.l.b16 %v2781
      %v3582 = vunpack.c.l.b16 %v2782
      %v3583 = vunpack.c.l.b16 %v2783
      %v3584 = vunpack.c.l.b16 %v2784
      %v3585 = vunpack.c.l.b16 %v2785
      %v3586 = vunpack.c.l.b16 %v2786
      %v3587 = vunpack.c.l.b16 %v2787
      %v3588 = vunpack.c.l.b16 %v2788
      %v3589 = vunpack.c.l.b16 %v2789
      %v3590 = vunpack.c.l.b16 %v2790
      %v3591 = vunpack.c.l.b16 %v2791
      %v3592 = vunpack.c.l.b16 %v2792
      %v3593 = vunpack.c.l.b16 %v2793
      %v3594 = vunpack.c.l.b16 %v2794
      %v3595 = vunpack.c.l.b16 %v2795
      %v3596 = vunpack.c.l.b16 %v2796
      %v3597 = vunpack.c.l.b16 %v2797
      %v3598 = vunpack.c.l.b16 %v2798
      %v3599 = vunpack.c.l.b16 %v2799
      %v3600 = vunpack.c.l.b16 %v2800
      %v3601 = vunpack.c.l.b16 %v2801
      %v3602 = vunpack.c.l.b16 %v2802
      %v3603 = vunpack.c.l.b16 %v2803
      %v3604 = vunpack.c.l.b16 %v2804
      %v3605 = vunpack.c.l.b16 %v2805
      %v3606 = vunpack.c.l.b16 %v2806
      %v3607 = vunpack.c.l.b16 %v2807
      %v3608 = vunpack.c.l.b16 %v2808
      %v3609 = vunpack.c.l.b16 %v2809
      %v3610 = vunpack.c.l.b16 %v2810
      %v3611 = vunpack.c.l.b16 %v2811
      %v3612 = vunpack.c.l.b16 %v2812
      %v3613 = vunpack.c.l.b16 %v2813
      %v3614 = vunpack.c.l.b16 %v2814
      %v3615 = vunpack.c.l.b16 %v2815
      %v3616 = vunpack.c.l.b16 %v2816
      %v3617 = vunpack.c.l.b16 %v2817
      %v3618 = vunpack.c.l.b16 %v2818
      %v3619 = vpack.c.b16 %v3220, %v3219
      %v3620 = vpack.c.b16 %v3222, %v3221
      %v3621 = vpack.c.b16 %v3224, %v3223
      %v3622 = vpack.c.b16 %v3226, %v3225
      %v3623 = vpack.c.b16 %v3228, %v3227
      %v3624 = vpack.c.b16 %v3230, %v3229
      %v3625 = vpack.c.b16 %v3232, %v3231
      %v3626 = vpack.c.b16 %v3234, %v3233
      %v3627 = vpack.c.b16 %v3236, %v3235
      %v3628 = vpack.c.b16 %v3238, %v3237
      %v3629 = vpack.c.b16 %v3240, %v3239
      %v3630 = vpack.c.b16 %v3242, %v3241
      %v3631 = vpack.c.b16 %v3244, %v3243
      %v3632 = vpack.c.b16 %v3246, %v3245
      %v3633 = vpack.c.b16 %v3248, %v3247
      %v3634 = vpack.c.b16 %v3250, %v3249
      %v3635 = vpack.c.b16 %v3252, %v3251
      %v3636 = vpack.c.b16 %v3254, %v3253
      %v3637 = vpack.c.b16 %v3256, %v3255
      %v3638 = vpack.c.b16 %v3258, %v3257
      %v3639 = vpack.c.b16 %v3260, %v3259
      %v3640 = vpack.c.b16 %v3262, %v3261
      %v3641 = vpack.c.b16 %v3264, %v3263
      %v3642 = vpack.c.b16 %v3266, %v3265
      %v3643 = vpack.c.b16 %v3268, %v3267
      %v3644 = vpack.c.b16 %v3270, %v3269
      %v3645 = vpack.c.b16 %v3272, %v3271
      %v3646 = vpack.c.b16 %v3274, %v3273
      %v3647 = vpack.c.b16 %v3276, %v3275
      %v3648 = vpack.c.b16 %v3278, %v3277
      %v3649 = vpack.c.b16 %v3280, %v3279
      %v3650 = vpack.c.b16 %v3282, %v3281
      %v3651 = vpack.c.b16 %v3284, %v3283
      %v3652 = vpack.c.b16 %v3286, %v3285
      %v3653 = vpack.c.b16 %v3288, %v3287
      %v3654 = vpack.c.b16 %v3290, %v3289
      %v3655 = vpack.c.b16 %v3292, %v3291
      %v3656 = vpack.c.b16 %v3294, %v3293
      %v3657 = vpack.c.b16 %v3296, %v3295
      %v3658 = vpack.c.b16 %v3298, %v3297
      %v3659 = vpack.c.b16 %v3300, %v3299
      %v3660 = vpack.c.b16 %v3302, %v3301
      %v3661 = vpack.c.b16 %v3304, %v3303
      %v3662 = vpack.c.b16 %v3306, %v3305
      %v3663 = vpack.c.b16 %v3308, %v3307
      %v3664 = vpack.c.b16 %v3310, %v3309
      %v3665 = vpack.c.b16 %v3312, %v3311
      %v3666 = vpack.c.b16 %v3314, %v3313
      %v3667 = vpack.c.b16 %v3316, %v3315
      %v3668 = vpack.c.b16 %v3318, %v3317
      %v3669 = vpack.c.b16 %v3320, %v3319
      %v3670 = vpack.c.b16 %v3322, %v3321
      %v3671 = vpack.c.b16 %v3324, %v3323
      %v3672 = vpack.c.b16 %v3326, %v3325
      %v3673 = vpack.c.b16 %v3328, %v3327
      %v3674 = vpack.c.b16 %v3330, %v3329
      %v3675 = vpack.c.b16 %v3332, %v3331
      %v3676 = vpack.c.b16 %v3334, %v3333
      %v3677 = vpack.c.b16 %v3336, %v3335
      %v3678 = vpack.c.b16 %v3338, %v3337
      %v3679 = vpack.c.b16 %v3340, %v3339
      %v3680 = vpack.c.b16 %v3342, %v3341
      %v3681 = vpack.c.b16 %v3344, %v3343
      %v3682 = vpack.c.b16 %v3346, %v3345
      %v3683 = vpack.c.b16 %v3348, %v3347
      %v3684 = vpack.c.b16 %v3350, %v3349
      %v3685 = vpack.c.b16 %v3352, %v3351
      %v3686 = vpack.c.b16 %v3354, %v3353
      %v3687 = vpack.c.b16 %v3356, %v3355
      %v3688 = vpack.c.b16 %v3358, %v3357
      %v3689 = vpack.c.b16 %v3360, %v3359
      %v3690 = vpack.c.b16 %v3362, %v3361
      %v3691 = vpack.c.b16 %v3364, %v3363
      %v3692 = vpack.c.b16 %v3366, %v3365
      %v3693 = vpack.c.b16 %v3368, %v3367
      %v3694 = vpack.c.b16 %v3370, %v3369
      %v3695 = vpack.c.b16 %v3372, %v3371
      %v3696 = vpack.c.b16 %v3374, %v3373
      %v3697 = vpack.c.b16 %v3376, %v3375
      %v3698 = vpack.c.b16 %v3378, %v3377
      %v3699 = vpack.c.b16 %v3380, %v3379
      %v3700 = vpack.c.b16 %v3382, %v3381
      %v3701 = vpack.c.b16 %v3384, %v3383
      %v3702 = vpack.c.b16 %v3386, %v3385
      %v3703 = vpack.c.b16 %v3388, %v3387
      %v3704 = vpack.c.b16 %v3390, %v3389
      %v3705 = vpack.c.b16 %v3392, %v3391
      %v3706 = vpack.c.b16 %v3394, %v3393
      %v3707 = vpack.c.b16 %v3396, %v3395
      %v3708 = vpack.c.b16 %v3398, %v3397
      %v3709 = vpack.c.b16 %v3400, %v3399
      %v3710 = vpack.c.b16 %v3402, %v3401
      %v3711 = vpack.c.b16 %v3404, %v3403
      %v3712 = vpack.c.b16 %v3406, %v3405
      %v3713 = vpack.c.b16 %v3408, %v3407
      %v3714 = vpack.c.b16 %v3410, %v3409
      %v3715 = vpack.c.b16 %v3412, %v3411
      %v3716 = vpack.c.b16 %v3414, %v3413
      %v3717 = vpack.c.b16 %v3416, %v3415
      %v3718 = vpack.c.b16 %v3418, %v3417
      %v3719 = vpack.c.b16 %v3420, %v3419
      %v3720 = vpack.c.b16 %v3422, %v3421
      %v3721 = vpack.c.b16 %v3424, %v3423
      %v3722 = vpack.c.b16 %v3426, %v3425
      %v3723 = vpack.c.b16 %v3428, %v3427
      %v3724 = vpack.c.b16 %v3430, %v3429
      %v3725 = vpack.c.b16 %v3432, %v3431
      %v3726 = vpack.c.b16 %v3434, %v3433
      %v3727 = vpack.c.b16 %v3436, %v3435
      %v3728 = vpack.c.b16 %v3438, %v3437
      %v3729 = vpack.c.b16 %v3440, %v3439
      %v3730 = vpack.c.b16 %v3442, %v3441
      %v3731 = vpack.c.b16 %v3444, %v3443
      %v3732 = vpack.c.b16 %v3446, %v3445
      %v3733 = vpack.c.b16 %v3448, %v3447
      %v3734 = vpack.c.b16 %v3450, %v3449
      %v3735 = vpack.c.b16 %v3452, %v3451
      %v3736 = vpack.c.b16 %v3454, %v3453
      %v3737 = vpack.c.b16 %v3456, %v3455
      %v3738 = vpack.c.b16 %v3458, %v3457
      %v3739 = vpack.c.b16 %v3460, %v3459
      %v3740 = vpack.c.b16 %v3462, %v3461
      %v3741 = vpack.c.b16 %v3464, %v3463
      %v3742 = vpack.c.b16 %v3466, %v3465
      %v3743 = vpack.c.b16 %v3468, %v3467
      %v3744 = vpack.c.b16 %v3470, %v3469
      %v3745 = vpack.c.b16 %v3472, %v3471
      %v3746 = vpack.c.b16 %v3474, %v3473
      %v3747 = vpack.c.b16 %v3476, %v3475
      %v3748 = vpack.c.b16 %v3478, %v3477
      %v3749 = vpack.c.b16 %v3480, %v3479
      %v3750 = vpack.c.b16 %v3482, %v3481
      %v3751 = vpack.c.b16 %v3484, %v3483
      %v3752 = vpack.c.b16 %v3486, %v3485
      %v3753 = vpack.c.b16 %v3488, %v3487
      %v3754 = vpack.c.b16 %v3490, %v3489
      %v3755 = vpack.c.b16 %v3492, %v3491
      %v3756 = vpack.c.b16 %v3494, %v3493
      %v3757 = vpack.c.b16 %v3496, %v3495
      %v3758 = vpack.c.b16 %v3498, %v3497
      %v3759 = vpack.c.b16 %v3500, %v3499
      %v3760 = vpack.c.b16 %v3502, %v3501
      %v3761 = vpack.c.b16 %v3504, %v3503
      %v3762 = vpack.c.b16 %v3506, %v3505
      %v3763 = vpack.c.b16 %v3508, %v3507
      %v3764 = vpack.c.b16 %v3510, %v3509
      %v3765 = vpack.c.b16 %v3512, %v3511
      %v3766 = vpack.c.b16 %v3514, %v3513
      %v3767 = vpack.c.b16 %v3516, %v3515
      %v3768 = vpack.c.b16 %v3518, %v3517
      %v3769 = vpack.c.b16 %v3520, %v3519
      %v3770 = vpack.c.b16 %v3522, %v3521
      %v3771 = vpack.c.b16 %v3524, %v3523
      %v3772 = vpack.c.b16 %v3526, %v3525
      %v3773 = vpack.c.b16 %v3528, %v3527
      %v3774 = vpack.c.b16 %v3530, %v3529
      %v3775 = vpack.c.b16 %v3532, %v3531
      %v3776 = vpack.c.b16 %v3534, %v3533
      %v3777 = vpack.c.b16 %v3536, %v3535
      %v3778 = vpack.c.b16 %v3538, %v3537
      %v3779 = vpack.c.b16 %v3540, %v3539
      %v3780 = vpack.c.b16 %v3542, %v3541
      %v3781 = vpack.c.b16 %v3544, %v3543
      %v3782 = vpack.c.b16 %v3546, %v3545
      %v3783 = vpack.c.b16 %v3548, %v3547
      %v3784 = vpack.c.b16 %v3550, %v3549
      %v3785 = vpack.c.b16 %v3552, %v3551
      %v3786 = vpack.c.b16 %v3554, %v3553
      %v3787 = vpack.c.b16 %v3556, %v3555
      %v3788 = vpack.c.b16 %v3558, %v3557
      %v3789 = vpack.c.b16 %v3560, %v3559
      %v3790 = vpack.c.b16 %v3562, %v3561
      %v3791 = vpack.c.b16 %v3564, %v3563
      %v3792 = vpack.c.b16 %v3566, %v3565
      %v3793 = vpack.c.b16 %v3568, %v3567
      %v3794 = vpack.c.b16 %v3570, %v3569
      %v3795 = vpack.c.b16 %v3572, %v3571
      %v3796 = vpack.c.b16 %v3574, %v3573
      %v3797 = vpack.c.b16 %v3576, %v3575
      %v3798 = vpack.c.b16 %v3578, %v3577
      %v3799 = vpack.c.b16 %v3580, %v3579
      %v3800 = vpack.c.b16 %v3582, %v3581
      %v3801 = vpack.c.b16 %v3584, %v3583
      %v3802 = vpack.c.b16 %v3586, %v3585
      %v3803 = vpack.c.b16 %v3588, %v3587
      %v3804 = vpack.c.b16 %v3590, %v3589
      %v3805 = vpack.c.b16 %v3592, %v3591
      %v3806 = vpack.c.b16 %v3594, %v3593
      %v3807 = vpack.c.b16 %v3596, %v3595
      %v3808 = vpack.c.b16 %v3598, %v3597
      %v3809 = vpack.c.b16 %v3600, %v3599
      %v3810 = vpack.c.b16 %v3602, %v3601
      %v3811 = vpack.c.b16 %v3604, %v3603
      %v3812 = vpack.c.b16 %v3606, %v3605
      %v3813 = vpack.c.b16 %v3608, %v3607
      %v3814 = vpack.c.b16 %v3610, %v3609
      %v3815 = vpack.c.b16 %v3612, %v3611
      %v3816 = vpack.c.b16 %v3614, %v3613
      %v3817 = vpack.c.b16 %v3616, %v3615
      %v3818 = vpack.c.b16 %v3618, %v3617
      %4019 = vmatprep.subr.bf16.mxu0 0
      %4020 = vmatpush1.bf16.msra.mxu0 %v3619
      %4021 = vmatprep.subr.bf16.mxu0 0
      %4022 = vmatpush1.bf16.msra.mxu0 %v3620
      %4023 = vmatprep.subr.bf16.mxu0 0
      %4024 = vmatpush1.bf16.msra.mxu0 %v3621
      %4025 = vmatprep.subr.bf16.mxu0 0
      %4026 = vmatpush1.bf16.msra.mxu0 %v3622
      %4027 = vmatprep.subr.bf16.mxu0 0
      %4028 = vmatpush1.bf16.msra.mxu0 %v3623
      %4029 = vmatprep.subr.bf16.mxu0 0
      %4030 = vmatpush1.bf16.msra.mxu0 %v3624
      %4031 = vmatprep.subr.bf16.mxu0 0
      %4032 = vmatpush1.bf16.msra.mxu0 %v3625
      %4033 = vmatprep.subr.bf16.mxu0 0
      %4034 = vmatpush1.bf16.msra.mxu0 %v3626
      %4035 = vmatprep.subr.bf16.mxu0 0
      %4036 = vmatpush1.bf16.msra.mxu0 %v3627
      %4037 = vmatprep.subr.bf16.mxu0 0
      %4038 = vmatpush1.bf16.msra.mxu0 %v3628
      %4039 = vmatprep.subr.bf16.mxu0 0
      %4040 = vmatpush1.bf16.msra.mxu0 %v3629
      %4041 = vmatprep.subr.bf16.mxu0 0
      %4042 = vmatpush1.bf16.msra.mxu0 %v3630
      %4043 = vmatprep.subr.bf16.mxu0 0
      %4044 = vmatpush1.bf16.msra.mxu0 %v3631
      %4045 = vmatprep.subr.bf16.mxu0 0
      %4046 = vmatpush1.bf16.msra.mxu0 %v3632
      %4047 = vmatprep.subr.bf16.mxu0 0
      %4048 = vmatpush1.bf16.msra.mxu0 %v3633
      %4049 = vmatprep.subr.bf16.mxu0 0
      %4050 = vmatpush1.bf16.msra.mxu0 %v3634
      %4051 = vmatprep.mubr.bf16.mxu0 %v1917
      %4052 = vmatmul.mubr.bf16.gmra.mrb[0].mxu0 %v1845
      %v4053 = vpop.f32.mrb[0].mxu0
      %v4054 = vadd.f32 0.0, %v4053
      %v4055 = vpop.f32.mrb[0].mxu0
      %v4056 = vpop.f32.mrb[0].mxu0
      %v4057 = vadd.f32 0.0, %v4056
      %v4058 = vpop.f32.mrb[0].mxu0
      %4059 = vmatprep.mubr.bf16.mxu0 %v1934
      %4060 = vmatmul.mubr.bf16.gmra.mrb[0].mxu0 %v1862
      %v4061 = vpop.f32.mrb[0].mxu0
      %v4062 = vadd.f32 0.0, %v4061
      %v4063 = vpop.f32.mrb[0].mxu0
      %v4064 = vpop.f32.mrb[0].mxu0
      %v4065 = vadd.f32 0.0, %v4064
      %v4066 = vpop.f32.mrb[0].mxu0
      %4067 = vmatprep.mubr.bf16.mxu0 %v1951
      %4068 = vmatmul.mubr.bf16.gmra.mrb[0].mxu0 %v1879
      %v4069 = vpop.f32.mrb[0].mxu0
      %v4070 = vadd.f32 0.0, %v4069
      %v4071 = vpop.f32.mrb[0].mxu0
      %v4072 = vpop.f32.mrb[0].mxu0
      %v4073 = vadd.f32 0.0, %v4072
      %v4074 = vpop.f32.mrb[0].mxu0
      %4075 = vmatprep.mubr.bf16.mxu0 %v1968
      %4076 = vmatmul.mubr.bf16.gmra.mrb[0].mxu0 %v1896
      %v4077 = vpop.f32.mrb[0].mxu0
      %v4078 = vadd.f32 0.0, %v4077
      %v4079 = vpop.f32.mrb[0].mxu0
      %v4080 = vpop.f32.mrb[0].mxu0
      %v4081 = vadd.f32 0.0, %v4080
      %v4082 = vpop.f32.mrb[0].mxu0
      %4083 = vdwg.mxu0
      %4084 = vmatprep.subr.bf16.mxu0 0
      %4085 = vmatpush1.bf16.msra.mxu0 %v3635
      %4086 = vmatprep.subr.bf16.mxu0 0
      %4087 = vmatpush1.bf16.msra.mxu0 %v3636
      %4088 = vmatprep.subr.bf16.mxu0 0
      %4089 = vmatpush1.bf16.msra.mxu0 %v3637
      %4090 = vmatprep.subr.bf16.mxu0 0
      %4091 = vmatpush1.bf16.msra.mxu0 %v3638
      %4092 = vmatprep.subr.bf16.mxu0 0
      %4093 = vmatpush1.bf16.msra.mxu0 %v3639
      %4094 = vmatprep.subr.bf16.mxu0 0
      %4095 = vmatpush1.bf16.msra.mxu0 %v3640
      %4096 = vmatprep.subr.bf16.mxu0 0
      %4097 = vmatpush1.bf16.msra.mxu0 %v3641
      %4098 = vmatprep.subr.bf16.mxu0 0
      %4099 = vmatpush1.bf16.msra.mxu0 %v3642
      %4100 = vmatprep.subr.bf16.mxu0 0
      %4101 = vmatpush1.bf16.msra.mxu0 %v3643
      %4102 = vmatprep.subr.bf16.mxu0 0
      %4103 = vmatpush1.bf16.msra.mxu0 %v3644
      %4104 = vmatprep.subr.bf16.mxu0 0
      %4105 = vmatpush1.bf16.msra.mxu0 %v3645
      %4106 = vmatprep.subr.bf16.mxu0 0
      %4107 = vmatpush1.bf16.msra.mxu0 %v3646
      %4108 = vmatprep.subr.bf16.mxu0 0
      %4109 = vmatpush1.bf16.msra.mxu0 %v3647
      %4110 = vmatprep.subr.bf16.mxu0 0
      %4111 = vmatpush1.bf16.msra.mxu0 %v3648
      %4112 = vmatprep.subr.bf16.mxu0 0
      %4113 = vmatpush1.bf16.msra.mxu0 %v3649
      %4114 = vmatprep.subr.bf16.mxu0 0
      %4115 = vmatpush1.bf16.msra.mxu0 %v3650
      %4116 = vmatprep.mubr.bf16.mxu0 %v2061
      %4117 = vmatmul.mubr.bf16.gmra.mrb[0].mxu0 %v1989
      %v4118 = vpop.f32.mrb[0].mxu0
      %v4119 = vadd.f32 %v4054, %v4118
      %v4120 = vpop.f32.mrb[0].mxu0
      %v4121 = vpop.f32.mrb[0].mxu0
      %v4122 = vadd.f32 %v4057, %v4121
      %v4123 = vpop.f32.mrb[0].mxu0
      %4124 = vmatprep.mubr.bf16.mxu0 %v2078
      %4125 = vmatmul.mubr.bf16.gmra.mrb[0].mxu0 %v2006
      %v4126 = vpop.f32.mrb[0].mxu0
      %v4127 = vadd.f32 %v4062, %v4126
      %v4128 = vpop.f32.mrb[0].mxu0
      %v4129 = vpop.f32.mrb[0].mxu0
      %v4130 = vadd.f32 %v4065, %v4129
      %v4131 = vpop.f32.mrb[0].mxu0
      %4132 = vmatprep.mubr.bf16.mxu0 %v2095
      %4133 = vmatmul.mubr.bf16.gmra.mrb[0].mxu0 %v2023
      %v4134 = vpop.f32.mrb[0].mxu0
      %v4135 = vadd.f32 %v4070, %v4134
      %v4136 = vpop.f32.mrb[0].mxu0
      %v4137 = vpop.f32.mrb[0].mxu0
      %v4138 = vadd.f32 %v4073, %v4137
      %v4139 = vpop.f32.mrb[0].mxu0
      %4140 = vmatprep.mubr.bf16.mxu0 %v2112
      %4141 = vmatmul.mubr.bf16.gmra.mrb[0].mxu0 %v2040
      %v4142 = vpop.f32.mrb[0].mxu0
      %v4143 = vadd.f32 %v4078, %v4142
      %v4144 = vpop.f32.mrb[0].mxu0
      %v4145 = vpop.f32.mrb[0].mxu0
      %v4146 = vadd.f32 %v4081, %v4145
      %v4147 = vpop.f32.mrb[0].mxu0
      %4148 = vdwg.mxu0
      %4149 = vmatprep.subr.bf16.mxu0 0
      %4150 = vmatpush1.bf16.msra.mxu0 %v3651
      %4151 = vmatprep.subr.bf16.mxu0 0
      %4152 = vmatpush1.bf16.msra.mxu0 %v3652
      %4153 = vmatprep.subr.bf16.mxu0 0
      %4154 = vmatpush1.bf16.msra.mxu0 %v3653
      %4155 = vmatprep.subr.bf16.mxu0 0
      %4156 = vmatpush1.bf16.msra.mxu0 %v3654
      %4157 = vmatprep.subr.bf16.mxu0 0
      %4158 = vmatpush1.bf16.msra.mxu0 %v3655
      %4159 = vmatprep.subr.bf16.mxu0 0
      %4160 = vmatpush1.bf16.msra.mxu0 %v3656
      %4161 = vmatprep.subr.bf16.mxu0 0
      %4162 = vmatpush1.bf16.msra.mxu0 %v3657
      %4163 = vmatprep.subr.bf16.mxu0 0
      %4164 = vmatpush1.bf16.msra.mxu0 %v3658
      %4165 = vmatprep.subr.bf16.mxu0 0
      %4166 = vmatpush1.bf16.msra.mxu0 %v3659
      %4167 = vmatprep.subr.bf16.mxu0 0
      %4168 = vmatpush1.bf16.msra.mxu0 %v3660
      %4169 = vmatprep.subr.bf16.mxu0 0
      %4170 = vmatpush1.bf16.msra.mxu0 %v3661
      %4171 = vmatprep.subr.bf16.mxu0 0
      %4172 = vmatpush1.bf16.msra.mxu0 %v3662
      %4173 = vmatprep.subr.bf16.mxu0 0
      %4174 = vmatpush1.bf16.msra.mxu0 %v3663
      %4175 = vmatprep.subr.bf16.mxu0 0
      %4176 = vmatpush1.bf16.msra.mxu0 %v3664
      %4177 = vmatprep.subr.bf16.mxu0 0
      %4178 = vmatpush1.bf16.msra.mxu0 %v3665
      %4179 = vmatprep.subr.bf16.mxu0 0
      %4180 = vmatpush1.bf16.msra.mxu0 %v3666
      %4181 = vmatprep.mubr.bf16.mxu0 %v2189
      %4182 = vmatmul.mubr.bf16.gmra.mrb[0].mxu0 %v2133
      %v4183 = vpop.f32.mrb[0].mxu0
      %v4184 = vadd.f32 %v4119, %v4183
      %v4185 = vpop.f32.mrb[0].mxu0
      %v4186 = vpop.f32.mrb[0].mxu0
      %v4187 = vadd.f32 %v4122, %v4186
      %v4188 = vpop.f32.mrb[0].mxu0
      %4189 = vmatprep.mubr.bf16.mxu0 %v2190
      %4190 = vmatmul.mubr.bf16.gmra.mrb[0].mxu0 %v2150
      %v4191 = vpop.f32.mrb[0].mxu0
      %v4192 = vadd.f32 %v4127, %v4191
      %v4193 = vpop.f32.mrb[0].mxu0
      %v4194 = vpop.f32.mrb[0].mxu0
      %v4195 = vadd.f32 %v4130, %v4194
      %v4196 = vpop.f32.mrb[0].mxu0
      %4197 = vmatprep.mubr.bf16.mxu0 %v2191
      %4198 = vmatmul.mubr.bf16.gmra.mrb[0].mxu0 %v2167
      %v4199 = vpop.f32.mrb[0].mxu0
      %v4200 = vadd.f32 %v4135, %v4199
      %v4201 = vpop.f32.mrb[0].mxu0
      %v4202 = vpop.f32.mrb[0].mxu0
      %v4203 = vadd.f32 %v4138, %v4202
      %v4204 = vpop.f32.mrb[0].mxu0
      %4205 = vmatprep.mubr.bf16.mxu0 %v2200
      %4206 = vmatmul.mubr.bf16.gmra.mrb[0].mxu0 %v2184
      %v4207 = vpop.f32.mrb[0].mxu0
      %v4208 = vadd.f32 %v4143, %v4207
      %v4209 = vpop.f32.mrb[0].mxu0
      %v4210 = vpop.f32.mrb[0].mxu0
      %v4211 = vadd.f32 %v4146, %v4210
      %v4212 = vpop.f32.mrb[0].mxu0
      %4213 = vdwg.mxu0
      %4214 = vmatprep.subr.bf16.mxu0 0
      %4215 = vmatpush1.bf16.msra.mxu0 %v3667
      %4216 = vmatprep.subr.bf16.mxu0 0
      %4217 = vmatpush1.bf16.msra.mxu0 %v3668
      %4218 = vmatprep.subr.bf16.mxu0 0
      %4219 = vmatpush1.bf16.msra.mxu0 %v3669
      %4220 = vmatprep.subr.bf16.mxu0 0
      %4221 = vmatpush1.bf16.msra.mxu0 %v3670
      %4222 = vmatprep.subr.bf16.mxu0 0
      %4223 = vmatpush1.bf16.msra.mxu0 %v3671
      %4224 = vmatprep.subr.bf16.mxu0 0
      %4225 = vmatpush1.bf16.msra.mxu0 %v3672
      %4226 = vmatprep.subr.bf16.mxu0 0
      %4227 = vmatpush1.bf16.msra.mxu0 %v3673
      %4228 = vmatprep.subr.bf16.mxu0 0
      %4229 = vmatpush1.bf16.msra.mxu0 %v3674
      %4230 = vmatprep.subr.bf16.mxu0 0
      %4231 = vmatpush1.bf16.msra.mxu0 %v3675
      %4232 = vmatprep.subr.bf16.mxu0 0
      %4233 = vmatpush1.bf16.msra.mxu0 %v3676
      %4234 = vmatprep.subr.bf16.mxu0 0
      %4235 = vmatpush1.bf16.msra.mxu0 %v3677
      %4236 = vmatprep.subr.bf16.mxu0 0
      %4237 = vmatpush1.bf16.msra.mxu0 %v3678
      %4238 = vmatprep.subr.bf16.mxu0 0
      %4239 = vmatpush1.bf16.msra.mxu0 %v3679
      %4240 = vmatprep.subr.bf16.mxu0 0
      %4241 = vmatpush1.bf16.msra.mxu0 %v3680
      %4242 = vmatprep.subr.bf16.mxu0 0
      %4243 = vmatpush1.bf16.msra.mxu0 %v3681
      %4244 = vmatprep.subr.bf16.mxu0 0
      %4245 = vmatpush1.bf16.msra.mxu0 %v3682
      %4246 = vmatprep.mubr.bf16.mxu0 %v2221
      %4247 = vmatmul.mubr.bf16.gmra.mrb[0].mxu0 %v2205
      %v4248 = vpop.f32.mrb[0].mxu0
      %v4249 = vadd.f32 %v4184, %v4248
      %v4250 = vpop.f32.mrb[0].mxu0
      %v4251 = vpop.f32.mrb[0].mxu0
      %v4252 = vadd.f32 %v4187, %v4251
      %v4253 = vpop.f32.mrb[0].mxu0
      %4254 = vmatprep.mubr.bf16.mxu0 %v2222
      %4255 = vmatmul.mubr.bf16.gmra.mrb[0].mxu0 %v2206
      %v4256 = vpop.f32.mrb[0].mxu0
      %v4257 = vadd.f32 %v4192, %v4256
      %v4258 = vpop.f32.mrb[0].mxu0
      %v4259 = vpop.f32.mrb[0].mxu0
      %v4260 = vadd.f32 %v4195, %v4259
      %v4261 = vpop.f32.mrb[0].mxu0
      %4262 = vmatprep.mubr.bf16.mxu0 %v2223
      %4263 = vmatmul.mubr.bf16.gmra.mrb[0].mxu0 %v2207
      %v4264 = vpop.f32.mrb[0].mxu0
      %v4265 = vadd.f32 %v4200, %v4264
      %v4266 = vpop.f32.mrb[0].mxu0
      %v4267 = vpop.f32.mrb[0].mxu0
      %v4268 = vadd.f32 %v4203, %v4267
      %v4269 = vpop.f32.mrb[0].mxu0
      %4270 = vmatprep.mubr.bf16.mxu0 %v2232
      %4271 = vmatmul.mubr.bf16.gmra.mrb[0].mxu0 %v2216
      %v4272 = vpop.f32.mrb[0].mxu0
      %v4273 = vadd.f32 %v4208, %v4272
      %v4274 = vpop.f32.mrb[0].mxu0
      %v4275 = vpop.f32.mrb[0].mxu0
      %v4276 = vadd.f32 %v4211, %v4275
      %v4277 = vpop.f32.mrb[0].mxu0
      %4278 = vdwg.mxu0
      %4279 = vmatprep.subr.bf16.mxu0 0
      %4280 = vmatpush1.bf16.msra.mxu0 %v3683
      %4281 = vmatprep.subr.bf16.mxu0 0
      %4282 = vmatpush1.bf16.msra.mxu0 %v3684
      %4283 = vmatprep.subr.bf16.mxu0 0
      %4284 = vmatpush1.bf16.msra.mxu0 %v3685
      %4285 = vmatprep.subr.bf16.mxu0 0
      %4286 = vmatpush1.bf16.msra.mxu0 %v3686
      %4287 = vmatprep.subr.bf16.mxu0 0
      %4288 = vmatpush1.bf16.msra.mxu0 %v3687
      %4289 = vmatprep.subr.bf16.mxu0 0
      %4290 = vmatpush1.bf16.msra.mxu0 %v3688
      %4291 = vmatprep.subr.bf16.mxu0 0
      %4292 = vmatpush1.bf16.msra.mxu0 %v3689
      %4293 = vmatprep.subr.bf16.mxu0 0
      %4294 = vmatpush1.bf16.msra.mxu0 %v3690
      %4295 = vmatprep.subr.bf16.mxu0 0
      %4296 = vmatpush1.bf16.msra.mxu0 %v3691
      %4297 = vmatprep.subr.bf16.mxu0 0
      %4298 = vmatpush1.bf16.msra.mxu0 %v3692
      %4299 = vmatprep.subr.bf16.mxu0 0
      %4300 = vmatpush1.bf16.msra.mxu0 %v3693
      %4301 = vmatprep.subr.bf16.mxu0 0
      %4302 = vmatpush1.bf16.msra.mxu0 %v3694
      %4303 = vmatprep.subr.bf16.mxu0 0
      %4304 = vmatpush1.bf16.msra.mxu0 %v3695
      %4305 = vmatprep.subr.bf16.mxu0 0
      %4306 = vmatpush1.bf16.msra.mxu0 %v3696
      %4307 = vmatprep.subr.bf16.mxu0 0
      %4308 = vmatpush1.bf16.msra.mxu0 %v3697
      %4309 = vmatprep.subr.bf16.mxu0 0
      %4310 = vmatpush1.bf16.msra.mxu0 %v3698
      %4311 = vmatprep.mubr.bf16.mxu0 %v2253
      %4312 = vmatmul.mubr.bf16.gmra.mrb[0].mxu0 %v2237
      %v4313 = vpop.f32.mrb[0].mxu0
      %v4314 = vadd.f32 %v4249, %v4313
      %v4315 = vpop.f32.mrb[0].mxu0
      %v4316 = vpop.f32.mrb[0].mxu0
      %v4317 = vadd.f32 %v4252, %v4316
      %v4318 = vpop.f32.mrb[0].mxu0
      %4319 = vmatprep.mubr.bf16.mxu0 %v2254
      %4320 = vmatmul.mubr.bf16.gmra.mrb[0].mxu0 %v2238
      %v4321 = vpop.f32.mrb[0].mxu0
      %v4322 = vadd.f32 %v4257, %v4321
      %v4323 = vpop.f32.mrb[0].mxu0
      %v4324 = vpop.f32.mrb[0].mxu0
      %v4325 = vadd.f32 %v4260, %v4324
      %v4326 = vpop.f32.mrb[0].mxu0
      %4327 = vmatprep.mubr.bf16.mxu0 %v2255
      %4328 = vmatmul.mubr.bf16.gmra.mrb[0].mxu0 %v2239
      %v4329 = vpop.f32.mrb[0].mxu0
      %v4330 = vadd.f32 %v4265, %v4329
      %v4331 = vpop.f32.mrb[0].mxu0
      %v4332 = vpop.f32.mrb[0].mxu0
      %v4333 = vadd.f32 %v4268, %v4332
      %v4334 = vpop.f32.mrb[0].mxu0
      %4335 = vmatprep.mubr.bf16.mxu0 %v2264
      %4336 = vmatmul.mubr.bf16.gmra.mrb[0].mxu0 %v2248
      %v4337 = vpop.f32.mrb[0].mxu0
      %v4338 = vadd.f32 %v4273, %v4337
      %v4339 = vpop.f32.mrb[0].mxu0
      %v4340 = vpop.f32.mrb[0].mxu0
      %v4341 = vadd.f32 %v4276, %v4340
      %v4342 = vpop.f32.mrb[0].mxu0
      %4343 = vdwg.mxu0
      %4344 = vmatprep.subr.bf16.mxu0 0
      %4345 = vmatpush1.bf16.msra.mxu0 %v3699
      %4346 = vmatprep.subr.bf16.mxu0 0
      %4347 = vmatpush1.bf16.msra.mxu0 %v3700
      %4348 = vmatprep.subr.bf16.mxu0 0
      %4349 = vmatpush1.bf16.msra.mxu0 %v3701
      %4350 = vmatprep.subr.bf16.mxu0 0
      %4351 = vmatpush1.bf16.msra.mxu0 %v3702
      %4352 = vmatprep.subr.bf16.mxu0 0
      %4353 = vmatpush1.bf16.msra.mxu0 %v3703
      %4354 = vmatprep.subr.bf16.mxu0 0
      %4355 = vmatpush1.bf16.msra.mxu0 %v3704
      %4356 = vmatprep.subr.bf16.mxu0 0
      %4357 = vmatpush1.bf16.msra.mxu0 %v3705
      %4358 = vmatprep.subr.bf16.mxu0 0
      %4359 = vmatpush1.bf16.msra.mxu0 %v3706
      %4360 = vmatprep.subr.bf16.mxu0 0
      %4361 = vmatpush1.bf16.msra.mxu0 %v3707
      %4362 = vmatprep.subr.bf16.mxu0 0
      %4363 = vmatpush1.bf16.msra.mxu0 %v3708
      %4364 = vmatprep.subr.bf16.mxu0 0
      %4365 = vmatpush1.bf16.msra.mxu0 %v3709
      %4366 = vmatprep.subr.bf16.mxu0 0
      %4367 = vmatpush1.bf16.msra.mxu0 %v3710
      %4368 = vmatprep.subr.bf16.mxu0 0
      %4369 = vmatpush1.bf16.msra.mxu0 %v3711
      %4370 = vmatprep.subr.bf16.mxu0 0
      %4371 = vmatpush1.bf16.msra.mxu0 %v3712
      %4372 = vmatprep.subr.bf16.mxu0 0
      %4373 = vmatpush1.bf16.msra.mxu0 %v3713
      %4374 = vmatprep.subr.bf16.mxu0 0
      %4375 = vmatpush1.bf16.msra.mxu0 %v3714
      %4376 = vmatprep.mubr.bf16.mxu0 %v1934
      %4377 = vmatmul.mubr.bf16.gmra.mrb[0].mxu0 %v1862
      %v4378 = vpop.f32.mrb[0].mxu0
      %v4379 = vadd.f32 %v4314, %v4378
      %v4380 = vpop.f32.mrb[0].mxu0
      %v4381 = vpop.f32.mrb[0].mxu0
      %v4382 = vadd.f32 %v4317, %v4381
      %v4383 = vpop.f32.mrb[0].mxu0
      %4384 = vmatprep.mubr.bf16.mxu0 %v1951
      %4385 = vmatmul.mubr.bf16.gmra.mrb[0].mxu0 %v1879
      %v4386 = vpop.f32.mrb[0].mxu0
      %v4387 = vadd.f32 %v4322, %v4386
      %v4388 = vpop.f32.mrb[0].mxu0
      %v4389 = vpop.f32.mrb[0].mxu0
      %v4390 = vadd.f32 %v4325, %v4389
      %v4391 = vpop.f32.mrb[0].mxu0
      %4392 = vmatprep.mubr.bf16.mxu0 %v1968
      %4393 = vmatmul.mubr.bf16.gmra.mrb[0].mxu0 %v1896
      %v4394 = vpop.f32.mrb[0].mxu0
      %v4395 = vadd.f32 %v4330, %v4394
      %v4396 = vpop.f32.mrb[0].mxu0
      %v4397 = vpop.f32.mrb[0].mxu0
      %v4398 = vadd.f32 %v4333, %v4397
      %v4399 = vpop.f32.mrb[0].mxu0
      %4400 = vmatprep.mubr.bf16.mxu0 %v2287
      %4401 = vmatmul.mubr.bf16.gmra.mrb[0].mxu0 %v2277
      %v4402 = vpop.f32.mrb[0].mxu0
      %v4403 = vadd.f32 %v4338, %v4402
      %v4404 = vpop.f32.mrb[0].mxu0
      %v4405 = vpop.f32.mrb[0].mxu0
      %v4406 = vadd.f32 %v4341, %v4405
      %v4407 = vpop.f32.mrb[0].mxu0
      %4408 = vdwg.mxu0
      %4409 = vmatprep.subr.bf16.mxu0 0
      %4410 = vmatpush1.bf16.msra.mxu0 %v3715
      %4411 = vmatprep.subr.bf16.mxu0 0
      %4412 = vmatpush1.bf16.msra.mxu0 %v3716
      %4413 = vmatprep.subr.bf16.mxu0 0
      %4414 = vmatpush1.bf16.msra.mxu0 %v3717
      %4415 = vmatprep.subr.bf16.mxu0 0
      %4416 = vmatpush1.bf16.msra.mxu0 %v3718
      %4417 = vmatprep.subr.bf16.mxu0 0
      %4418 = vmatpush1.bf16.msra.mxu0 %v3719
      %4419 = vmatprep.subr.bf16.mxu0 0
      %4420 = vmatpush1.bf16.msra.mxu0 %v3720
      %4421 = vmatprep.subr.bf16.mxu0 0
      %4422 = vmatpush1.bf16.msra.mxu0 %v3721
      %4423 = vmatprep.subr.bf16.mxu0 0
      %4424 = vmatpush1.bf16.msra.mxu0 %v3722
      %4425 = vmatprep.subr.bf16.mxu0 0
      %4426 = vmatpush1.bf16.msra.mxu0 %v3723
      %4427 = vmatprep.subr.bf16.mxu0 0
      %4428 = vmatpush1.bf16.msra.mxu0 %v3724
      %4429 = vmatprep.subr.bf16.mxu0 0
      %4430 = vmatpush1.bf16.msra.mxu0 %v3725
      %4431 = vmatprep.subr.bf16.mxu0 0
      %4432 = vmatpush1.bf16.msra.mxu0 %v3726
      %4433 = vmatprep.subr.bf16.mxu0 0
      %4434 = vmatpush1.bf16.msra.mxu0 %v3727
      %4435 = vmatprep.subr.bf16.mxu0 0
      %4436 = vmatpush1.bf16.msra.mxu0 %v3728
      %4437 = vmatprep.subr.bf16.mxu0 0
      %4438 = vmatpush1.bf16.msra.mxu0 %v3729
      %4439 = vmatprep.subr.bf16.mxu0 0
      %4440 = vmatpush1.bf16.msra.mxu0 %v3730
      %4441 = vmatprep.mubr.bf16.mxu0 %v2078
      %4442 = vmatmul.mubr.bf16.gmra.mrb[0].mxu0 %v2006
      %v4443 = vpop.f32.mrb[0].mxu0
      %v4444 = vadd.f32 %v4379, %v4443
      %v4445 = vpop.f32.mrb[0].mxu0
      %v4446 = vpop.f32.mrb[0].mxu0
      %v4447 = vadd.f32 %v4382, %v4446
      %v4448 = vpop.f32.mrb[0].mxu0
      %4449 = vmatprep.mubr.bf16.mxu0 %v2095
      %4450 = vmatmul.mubr.bf16.gmra.mrb[0].mxu0 %v2023
      %v4451 = vpop.f32.mrb[0].mxu0
      %v4452 = vadd.f32 %v4387, %v4451
      %v4453 = vpop.f32.mrb[0].mxu0
      %v4454 = vpop.f32.mrb[0].mxu0
      %v4455 = vadd.f32 %v4390, %v4454
      %v4456 = vpop.f32.mrb[0].mxu0
      %4457 = vmatprep.mubr.bf16.mxu0 %v2112
      %4458 = vmatmul.mubr.bf16.gmra.mrb[0].mxu0 %v2040
      %v4459 = vpop.f32.mrb[0].mxu0
      %v4460 = vadd.f32 %v4395, %v4459
      %v4461 = vpop.f32.mrb[0].mxu0
      %v4462 = vpop.f32.mrb[0].mxu0
      %v4463 = vadd.f32 %v4398, %v4462
      %v4464 = vpop.f32.mrb[0].mxu0
      %4465 = vmatprep.mubr.bf16.mxu0 %v2307
      %4466 = vmatmul.mubr.bf16.gmra.mrb[0].mxu0 %v2297
      %v4467 = vpop.f32.mrb[0].mxu0
      %v4468 = vadd.f32 %v4403, %v4467
      %v4469 = vpop.f32.mrb[0].mxu0
      %v4470 = vpop.f32.mrb[0].mxu0
      %v4471 = vadd.f32 %v4406, %v4470
      %v4472 = vpop.f32.mrb[0].mxu0
      %4473 = vdwg.mxu0
      %4474 = vmatprep.subr.bf16.mxu0 0
      %4475 = vmatpush1.bf16.msra.mxu0 %v3731
      %4476 = vmatprep.subr.bf16.mxu0 0
      %4477 = vmatpush1.bf16.msra.mxu0 %v3732
      %4478 = vmatprep.subr.bf16.mxu0 0
      %4479 = vmatpush1.bf16.msra.mxu0 %v3733
      %4480 = vmatprep.subr.bf16.mxu0 0
      %4481 = vmatpush1.bf16.msra.mxu0 %v3734
      %4482 = vmatprep.subr.bf16.mxu0 0
      %4483 = vmatpush1.bf16.msra.mxu0 %v3735
      %4484 = vmatprep.subr.bf16.mxu0 0
      %4485 = vmatpush1.bf16.msra.mxu0 %v3736
      %4486 = vmatprep.subr.bf16.mxu0 0
      %4487 = vmatpush1.bf16.msra.mxu0 %v3737
      %4488 = vmatprep.subr.bf16.mxu0 0
      %4489 = vmatpush1.bf16.msra.mxu0 %v3738
      %4490 = vmatprep.subr.bf16.mxu0 0
      %4491 = vmatpush1.bf16.msra.mxu0 %v3739
      %4492 = vmatprep.subr.bf16.mxu0 0
      %4493 = vmatpush1.bf16.msra.mxu0 %v3740
      %4494 = vmatprep.subr.bf16.mxu0 0
      %4495 = vmatpush1.bf16.msra.mxu0 %v3741
      %4496 = vmatprep.subr.bf16.mxu0 0
      %4497 = vmatpush1.bf16.msra.mxu0 %v3742
      %4498 = vmatprep.subr.bf16.mxu0 0
      %4499 = vmatpush1.bf16.msra.mxu0 %v3743
      %4500 = vmatprep.subr.bf16.mxu0 0
      %4501 = vmatpush1.bf16.msra.mxu0 %v3744
      %4502 = vmatprep.subr.bf16.mxu0 0
      %4503 = vmatpush1.bf16.msra.mxu0 %v3745
      %4504 = vmatprep.subr.bf16.mxu0 0
      %4505 = vmatpush1.bf16.msra.mxu0 %v3746
      %4506 = vmatprep.mubr.bf16.mxu0 %v2190
      %4507 = vmatmul.mubr.bf16.gmra.mrb[0].mxu0 %v2150
      %v4508 = vpop.f32.mrb[0].mxu0
      %v4509 = vadd.f32 %v4444, %v4508
      %v4510 = vpop.f32.mrb[0].mxu0
      %v4511 = vpop.f32.mrb[0].mxu0
      %v4512 = vadd.f32 %v4447, %v4511
      %v4513 = vpop.f32.mrb[0].mxu0
      %4514 = vmatprep.mubr.bf16.mxu0 %v2191
      %4515 = vmatmul.mubr.bf16.gmra.mrb[0].mxu0 %v2167
      %v4516 = vpop.f32.mrb[0].mxu0
      %v4517 = vadd.f32 %v4452, %v4516
      %v4518 = vpop.f32.mrb[0].mxu0
      %v4519 = vpop.f32.mrb[0].mxu0
      %v4520 = vadd.f32 %v4455, %v4519
      %v4521 = vpop.f32.mrb[0].mxu0
      %4522 = vmatprep.mubr.bf16.mxu0 %v2200
      %4523 = vmatmul.mubr.bf16.gmra.mrb[0].mxu0 %v2184
      %v4524 = vpop.f32.mrb[0].mxu0
      %v4525 = vadd.f32 %v4460, %v4524
      %v4526 = vpop.f32.mrb[0].mxu0
      %v4527 = vpop.f32.mrb[0].mxu0
      %v4528 = vadd.f32 %v4463, %v4527
      %v4529 = vpop.f32.mrb[0].mxu0
      %4530 = vmatprep.mubr.bf16.mxu0 %v2327
      %4531 = vmatmul.mubr.bf16.gmra.mrb[0].mxu0 %v2317
      %v4532 = vpop.f32.mrb[0].mxu0
      %v4533 = vadd.f32 %v4468, %v4532
      %v4534 = vpop.f32.mrb[0].mxu0
      %v4535 = vpop.f32.mrb[0].mxu0
      %v4536 = vadd.f32 %v4471, %v4535
      %v4537 = vpop.f32.mrb[0].mxu0
      %4538 = vdwg.mxu0
      %4539 = vmatprep.subr.bf16.mxu0 0
      %4540 = vmatpush1.bf16.msra.mxu0 %v3747
      %4541 = vmatprep.subr.bf16.mxu0 0
      %4542 = vmatpush1.bf16.msra.mxu0 %v3748
      %4543 = vmatprep.subr.bf16.mxu0 0
      %4544 = vmatpush1.bf16.msra.mxu0 %v3749
      %4545 = vmatprep.subr.bf16.mxu0 0
      %4546 = vmatpush1.bf16.msra.mxu0 %v3750
      %4547 = vmatprep.subr.bf16.mxu0 0
      %4548 = vmatpush1.bf16.msra.mxu0 %v3751
      %4549 = vmatprep.subr.bf16.mxu0 0
      %4550 = vmatpush1.bf16.msra.mxu0 %v3752
      %4551 = vmatprep.subr.bf16.mxu0 0
      %4552 = vmatpush1.bf16.msra.mxu0 %v3753
      %4553 = vmatprep.subr.bf16.mxu0 0
      %4554 = vmatpush1.bf16.msra.mxu0 %v3754
      %4555 = vmatprep.subr.bf16.mxu0 0
      %4556 = vmatpush1.bf16.msra.mxu0 %v3755
      %4557 = vmatprep.subr.bf16.mxu0 0
      %4558 = vmatpush1.bf16.msra.mxu0 %v3756
      %4559 = vmatprep.subr.bf16.mxu0 0
      %4560 = vmatpush1.bf16.msra.mxu0 %v3757
      %4561 = vmatprep.subr.bf16.mxu0 0
      %4562 = vmatpush1.bf16.msra.mxu0 %v3758
      %4563 = vmatprep.subr.bf16.mxu0 0
      %4564 = vmatpush1.bf16.msra.mxu0 %v3759
      %4565 = vmatprep.subr.bf16.mxu0 0
      %4566 = vmatpush1.bf16.msra.mxu0 %v3760
      %4567 = vmatprep.subr.bf16.mxu0 0
      %4568 = vmatpush1.bf16.msra.mxu0 %v3761
      %4569 = vmatprep.subr.bf16.mxu0 0
      %4570 = vmatpush1.bf16.msra.mxu0 %v3762
      %4571 = vmatprep.mubr.bf16.mxu0 %v2222
      %4572 = vmatmul.mubr.bf16.gmra.mrb[0].mxu0 %v2206
      %v4573 = vpop.f32.mrb[0].mxu0
      %v4574 = vadd.f32 %v4509, %v4573
      %v4575 = vpop.f32.mrb[0].mxu0
      %v4576 = vpop.f32.mrb[0].mxu0
      %v4577 = vadd.f32 %v4512, %v4576
      %v4578 = vpop.f32.mrb[0].mxu0
      %4579 = vmatprep.mubr.bf16.mxu0 %v2223
      %4580 = vmatmul.mubr.bf16.gmra.mrb[0].mxu0 %v2207
      %v4581 = vpop.f32.mrb[0].mxu0
      %v4582 = vadd.f32 %v4517, %v4581
      %v4583 = vpop.f32.mrb[0].mxu0
      %v4584 = vpop.f32.mrb[0].mxu0
      %v4585 = vadd.f32 %v4520, %v4584
      %v4586 = vpop.f32.mrb[0].mxu0
      %4587 = vmatprep.mubr.bf16.mxu0 %v2232
      %4588 = vmatmul.mubr.bf16.gmra.mrb[0].mxu0 %v2216
      %v4589 = vpop.f32.mrb[0].mxu0
      %v4590 = vadd.f32 %v4525, %v4589
      %v4591 = vpop.f32.mrb[0].mxu0
      %v4592 = vpop.f32.mrb[0].mxu0
      %v4593 = vadd.f32 %v4528, %v4592
      %v4594 = vpop.f32.mrb[0].mxu0
      %4595 = vmatprep.mubr.bf16.mxu0 %v2347
      %4596 = vmatmul.mubr.bf16.gmra.mrb[0].mxu0 %v2337
      %v4597 = vpop.f32.mrb[0].mxu0
      %v4598 = vadd.f32 %v4533, %v4597
      %v4599 = vpop.f32.mrb[0].mxu0
      %v4600 = vpop.f32.mrb[0].mxu0
      %v4601 = vadd.f32 %v4536, %v4600
      %v4602 = vpop.f32.mrb[0].mxu0
      %4603 = vdwg.mxu0
      %4604 = vmatprep.subr.bf16.mxu0 0
      %4605 = vmatpush1.bf16.msra.mxu0 %v3763
      %4606 = vmatprep.subr.bf16.mxu0 0
      %4607 = vmatpush1.bf16.msra.mxu0 %v3764
      %4608 = vmatprep.subr.bf16.mxu0 0
      %4609 = vmatpush1.bf16.msra.mxu0 %v3765
      %4610 = vmatprep.subr.bf16.mxu0 0
      %4611 = vmatpush1.bf16.msra.mxu0 %v3766
      %4612 = vmatprep.subr.bf16.mxu0 0
      %4613 = vmatpush1.bf16.msra.mxu0 %v3767
      %4614 = vmatprep.subr.bf16.mxu0 0
      %4615 = vmatpush1.bf16.msra.mxu0 %v3768
      %4616 = vmatprep.subr.bf16.mxu0 0
      %4617 = vmatpush1.bf16.msra.mxu0 %v3769
      %4618 = vmatprep.subr.bf16.mxu0 0
      %4619 = vmatpush1.bf16.msra.mxu0 %v3770
      %4620 = vmatprep.subr.bf16.mxu0 0
      %4621 = vmatpush1.bf16.msra.mxu0 %v3771
      %4622 = vmatprep.subr.bf16.mxu0 0
      %4623 = vmatpush1.bf16.msra.mxu0 %v3772
      %4624 = vmatprep.subr.bf16.mxu0 0
      %4625 = vmatpush1.bf16.msra.mxu0 %v3773
      %4626 = vmatprep.subr.bf16.mxu0 0
      %4627 = vmatpush1.bf16.msra.mxu0 %v3774
      %4628 = vmatprep.subr.bf16.mxu0 0
      %4629 = vmatpush1.bf16.msra.mxu0 %v3775
      %4630 = vmatprep.subr.bf16.mxu0 0
      %4631 = vmatpush1.bf16.msra.mxu0 %v3776
      %4632 = vmatprep.subr.bf16.mxu0 0
      %4633 = vmatpush1.bf16.msra.mxu0 %v3777
      %4634 = vmatprep.subr.bf16.mxu0 0
      %4635 = vmatpush1.bf16.msra.mxu0 %v3778
      %4636 = vmatprep.mubr.bf16.mxu0 %v2254
      %4637 = vmatmul.mubr.bf16.gmra.mrb[0].mxu0 %v2238
      %v4638 = vpop.f32.mrb[0].mxu0
      %v4639 = vadd.f32 %v4574, %v4638
      %v4640 = vpop.f32.mrb[0].mxu0
      %v4641 = vpop.f32.mrb[0].mxu0
      %v4642 = vadd.f32 %v4577, %v4641
      %v4643 = vpop.f32.mrb[0].mxu0
      %4644 = vmatprep.mubr.bf16.mxu0 %v2255
      %4645 = vmatmul.mubr.bf16.gmra.mrb[0].mxu0 %v2239
      %v4646 = vpop.f32.mrb[0].mxu0
      %v4647 = vadd.f32 %v4582, %v4646
      %v4648 = vpop.f32.mrb[0].mxu0
      %v4649 = vpop.f32.mrb[0].mxu0
      %v4650 = vadd.f32 %v4585, %v4649
      %v4651 = vpop.f32.mrb[0].mxu0
      %4652 = vmatprep.mubr.bf16.mxu0 %v2264
      %4653 = vmatmul.mubr.bf16.gmra.mrb[0].mxu0 %v2248
      %v4654 = vpop.f32.mrb[0].mxu0
      %v4655 = vadd.f32 %v4590, %v4654
      %v4656 = vpop.f32.mrb[0].mxu0
      %v4657 = vpop.f32.mrb[0].mxu0
      %v4658 = vadd.f32 %v4593, %v4657
      %v4659 = vpop.f32.mrb[0].mxu0
      %4660 = vmatprep.mubr.bf16.mxu0 %v2367
      %4661 = vmatmul.mubr.bf16.gmra.mrb[0].mxu0 %v2357
      %v4662 = vpop.f32.mrb[0].mxu0
      %v4663 = vadd.f32 %v4598, %v4662
      %v4664 = vpop.f32.mrb[0].mxu0
      %v4665 = vpop.f32.mrb[0].mxu0
      %v4666 = vadd.f32 %v4601, %v4665
      %v4667 = vpop.f32.mrb[0].mxu0
      %4668 = vdwg.mxu0
      %4669 = vmatprep.subr.bf16.mxu0 0
      %4670 = vmatpush1.bf16.msra.mxu0 %v3779
      %4671 = vmatprep.subr.bf16.mxu0 0
      %4672 = vmatpush1.bf16.msra.mxu0 %v3780
      %4673 = vmatprep.subr.bf16.mxu0 0
      %4674 = vmatpush1.bf16.msra.mxu0 %v3781
      %4675 = vmatprep.subr.bf16.mxu0 0
      %4676 = vmatpush1.bf16.msra.mxu0 %v3782
      %4677 = vmatprep.subr.bf16.mxu0 0
      %4678 = vmatpush1.bf16.msra.mxu0 %v3783
      %4679 = vmatprep.subr.bf16.mxu0 0
      %4680 = vmatpush1.bf16.msra.mxu0 %v3784
      %4681 = vmatprep.subr.bf16.mxu0 0
      %4682 = vmatpush1.bf16.msra.mxu0 %v3785
      %4683 = vmatprep.subr.bf16.mxu0 0
      %4684 = vmatpush1.bf16.msra.mxu0 %v3786
      %4685 = vmatprep.subr.bf16.mxu0 0
      %4686 = vmatpush1.bf16.msra.mxu0 %v3787
      %4687 = vmatprep.subr.bf16.mxu0 0
      %4688 = vmatpush1.bf16.msra.mxu0 %v3788
      %4689 = vmatprep.subr.bf16.mxu0 0
      %4690 = vmatpush1.bf16.msra.mxu0 %v3789
      %4691 = vmatprep.subr.bf16.mxu0 0
      %4692 = vmatpush1.bf16.msra.mxu0 %v3790
      %4693 = vmatprep.subr.bf16.mxu0 0
      %4694 = vmatpush1.bf16.msra.mxu0 %v3791
      %4695 = vmatprep.subr.bf16.mxu0 0
      %4696 = vmatpush1.bf16.msra.mxu0 %v3792
      %4697 = vmatprep.subr.bf16.mxu0 0
      %4698 = vmatpush1.bf16.msra.mxu0 %v3793
      %4699 = vmatprep.subr.bf16.mxu0 0
      %4700 = vmatpush1.bf16.msra.mxu0 %v3794
      %4701 = vmatprep.mubr.bf16.mxu0 %v1951
      %4702 = vmatmul.mubr.bf16.gmra.mrb[0].mxu0 %v1879
      %v4703 = vpop.f32.mrb[0].mxu0
      %v4704 = vadd.f32 %v4639, %v4703
      %v4705 = vpop.f32.mrb[0].mxu0
      %v4706 = vpop.f32.mrb[0].mxu0
      %v4707 = vadd.f32 %v4642, %v4706
      %v4708 = vpop.f32.mrb[0].mxu0
      %4709 = vmatprep.mubr.bf16.mxu0 %v1968
      %4710 = vmatmul.mubr.bf16.gmra.mrb[0].mxu0 %v1896
      %v4711 = vpop.f32.mrb[0].mxu0
      %v4712 = vadd.f32 %v4647, %v4711
      %v4713 = vpop.f32.mrb[0].mxu0
      %v4714 = vpop.f32.mrb[0].mxu0
      %v4715 = vadd.f32 %v4650, %v4714
      %v4716 = vpop.f32.mrb[0].mxu0
      %4717 = vmatprep.mubr.bf16.mxu0 %v2287
      %4718 = vmatmul.mubr.bf16.gmra.mrb[0].mxu0 %v2277
      %v4719 = vpop.f32.mrb[0].mxu0
      %v4720 = vadd.f32 %v4655, %v4719
      %v4721 = vpop.f32.mrb[0].mxu0
      %v4722 = vpop.f32.mrb[0].mxu0
      %v4723 = vadd.f32 %v4658, %v4722
      %v4724 = vpop.f32.mrb[0].mxu0
      %4725 = vmatprep.mubr.bf16.mxu0 %v2387
      %4726 = vmatmul.mubr.bf16.gmra.mrb[0].mxu0 %v2377
      %v4727 = vpop.f32.mrb[0].mxu0
      %v4728 = vadd.f32 %v4663, %v4727
      %v4729 = vpop.f32.mrb[0].mxu0
      %v4730 = vpop.f32.mrb[0].mxu0
      %v4731 = vadd.f32 %v4666, %v4730
      %v4732 = vpop.f32.mrb[0].mxu0
      %4733 = vdwg.mxu0
      %4734 = vmatprep.subr.bf16.mxu0 0
      %4735 = vmatpush1.bf16.msra.mxu0 %v3795
      %4736 = vmatprep.subr.bf16.mxu0 0
      %4737 = vmatpush1.bf16.msra.mxu0 %v3796
      %4738 = vmatprep.subr.bf16.mxu0 0
      %4739 = vmatpush1.bf16.msra.mxu0 %v3797
      %4740 = vmatprep.subr.bf16.mxu0 0
      %4741 = vmatpush1.bf16.msra.mxu0 %v3798
      %4742 = vmatprep.subr.bf16.mxu0 0
      %4743 = vmatpush1.bf16.msra.mxu0 %v3799
      %4744 = vmatprep.subr.bf16.mxu0 0
      %4745 = vmatpush1.bf16.msra.mxu0 %v3800
      %4746 = vmatprep.subr.bf16.mxu0 0
      %4747 = vmatpush1.bf16.msra.mxu0 %v3801
      %4748 = vmatprep.subr.bf16.mxu0 0
      %4749 = vmatpush1.bf16.msra.mxu0 %v3802
      %4750 = vmatprep.subr.bf16.mxu0 0
      %4751 = vmatpush1.bf16.msra.mxu0 %v3803
      %4752 = vmatprep.subr.bf16.mxu0 0
      %4753 = vmatpush1.bf16.msra.mxu0 %v3804
      %4754 = vmatprep.subr.bf16.mxu0 0
      %4755 = vmatpush1.bf16.msra.mxu0 %v3805
      %4756 = vmatprep.subr.bf16.mxu0 0
      %4757 = vmatpush1.bf16.msra.mxu0 %v3806
      %4758 = vmatprep.subr.bf16.mxu0 0
      %4759 = vmatpush1.bf16.msra.mxu0 %v3807
      %4760 = vmatprep.subr.bf16.mxu0 0
      %4761 = vmatpush1.bf16.msra.mxu0 %v3808
      %4762 = vmatprep.subr.bf16.mxu0 0
      %4763 = vmatpush1.bf16.msra.mxu0 %v3809
      %4764 = vmatprep.subr.bf16.mxu0 0
      %4765 = vmatpush1.bf16.msra.mxu0 %v3810
      %4766 = vmatprep.mubr.bf16.mxu0 %v2095
      %4767 = vmatmul.mubr.bf16.gmra.mrb[0].mxu0 %v2023
      %v4768 = vpop.f32.mrb[0].mxu0
      %v4769 = vadd.f32 %v4704, %v4768
      %v4770 = vpop.f32.mrb[0].mxu0
      %v4771 = vpop.f32.mrb[0].mxu0
      %v4772 = vadd.f32 %v4707, %v4771
      %v4773 = vpop.f32.mrb[0].mxu0
      %4774 = vmatprep.mubr.bf16.mxu0 %v2112
      %4775 = vmatmul.mubr.bf16.gmra.mrb[0].mxu0 %v2040
      %v4776 = vpop.f32.mrb[0].mxu0
      %v4777 = vadd.f32 %v4712, %v4776
      %v4778 = vpop.f32.mrb[0].mxu0
      %v4779 = vpop.f32.mrb[0].mxu0
      %v4780 = vadd.f32 %v4715, %v4779
      %v4781 = vpop.f32.mrb[0].mxu0
      %4782 = vmatprep.mubr.bf16.mxu0 %v2307
      %4783 = vmatmul.mubr.bf16.gmra.mrb[0].mxu0 %v2297
      %v4784 = vpop.f32.mrb[0].mxu0
      %v4785 = vadd.f32 %v4720, %v4784
      %v4786 = vpop.f32.mrb[0].mxu0
      %v4787 = vpop.f32.mrb[0].mxu0
      %v4788 = vadd.f32 %v4723, %v4787
      %v4789 = vpop.f32.mrb[0].mxu0
      %4790 = vmatprep.mubr.bf16.mxu0 %v2407
      %4791 = vmatmul.mubr.bf16.gmra.mrb[0].mxu0 %v2397
      %v4792 = vpop.f32.mrb[0].mxu0
      %v4793 = vadd.f32 %v4728, %v4792
      %v4794 = vpop.f32.mrb[0].mxu0
      %v4795 = vpop.f32.mrb[0].mxu0
      %v4796 = vadd.f32 %v4731, %v4795
      %v4797 = vpop.f32.mrb[0].mxu0
      %4798 = vdwg.mxu0
      %4799 = vmatprep.subr.bf16.mxu0 0
      %4800 = vmatpush1.bf16.msra.mxu0 %v3811
      %4801 = vmatprep.subr.bf16.mxu0 0
      %4802 = vmatpush1.bf16.msra.mxu0 %v3812
      %4803 = vmatprep.subr.bf16.mxu0 0
      %4804 = vmatpush1.bf16.msra.mxu0 %v3813
      %4805 = vmatprep.subr.bf16.mxu0 0
      %4806 = vmatpush1.bf16.msra.mxu0 %v3814
      %4807 = vmatprep.subr.bf16.mxu0 0
      %4808 = vmatpush1.bf16.msra.mxu0 %v3815
      %4809 = vmatprep.subr.bf16.mxu0 0
      %4810 = vmatpush1.bf16.msra.mxu0 %v3816
      %4811 = vmatprep.subr.bf16.mxu0 0
      %4812 = vmatpush1.bf16.msra.mxu0 %v3817
      %4813 = vmatprep.subr.bf16.mxu0 0
      %4814 = vmatpush1.bf16.msra.mxu0 %v3818
      %4815 = vmatprep.subr.bf16.mxu0 0
      %4816 = vmatpush1.bf16.msra.mxu0 0
      %4817 = vmatprep.subr.bf16.mxu0 0
      %4818 = vmatpush1.bf16.msra.mxu0 0
      %4819 = vmatprep.subr.bf16.mxu0 0
      %4820 = vmatpush1.bf16.msra.mxu0 0
      %4821 = vmatprep.subr.bf16.mxu0 0
      %4822 = vmatpush1.bf16.msra.mxu0 0
      %4823 = vmatprep.subr.bf16.mxu0 0
      %4824 = vmatpush1.bf16.msra.mxu0 0
      %4825 = vmatprep.subr.bf16.mxu0 0
      %4826 = vmatpush1.bf16.msra.mxu0 0
      %4827 = vmatprep.subr.bf16.mxu0 0
      %4828 = vmatpush1.bf16.msra.mxu0 0
      %4829 = vmatprep.subr.bf16.mxu0 0
      %4830 = vmatpush1.bf16.msra.mxu0 0
      %4831 = vmatprep.mubr.bf16.mxu0 0
      %4832 = vmatmul.mubr.bf16.gmra.mrb[0].mxu0 %v2167
      %v4833 = vpop.f32.mrb[0].mxu0
      %v4834 = vadd.f32 %v4769, %v4833
      %v4835 = vpop.f32.mrb[0].mxu0
      %v4836 = vpop.f32.mrb[0].mxu0
      %v4837 = vadd.f32 %v4772, %v4836
      %v4838 = vpop.f32.mrb[0].mxu0
      %4839 = vmatprep.mubr.bf16.mxu0 0
      %4840 = vmatmul.mubr.bf16.gmra.mrb[0].mxu0 %v2184
      %v4841 = vpop.f32.mrb[0].mxu0
      %v4842 = vadd.f32 %v4777, %v4841
      %v4843 = vpop.f32.mrb[0].mxu0
      %v4844 = vpop.f32.mrb[0].mxu0
      %v4845 = vadd.f32 %v4780, %v4844
      %v4846 = vpop.f32.mrb[0].mxu0
      %4847 = vmatprep.mubr.bf16.mxu0 0
      %4848 = vmatmul.mubr.bf16.gmra.mrb[0].mxu0 %v2317
      %v4849 = vpop.f32.mrb[0].mxu0
      %v4850 = vadd.f32 %v4785, %v4849
      %v4851 = vpop.f32.mrb[0].mxu0
      %v4852 = vpop.f32.mrb[0].mxu0
      %v4853 = vadd.f32 %v4788, %v4852
      %v4854 = vpop.f32.mrb[0].mxu0
      %4855 = vmatprep.mubr.bf16.mxu0 0
      %4856 = vmatmul.mubr.bf16.gmra.mrb[0].mxu0 %v2417
      %v4857 = vpop.f32.mrb[0].mxu0
      %v4858 = vadd.f32 %v4793, %v4857
      %v4859 = vpop.f32.mrb[0].mxu0
      %v4860 = vpop.f32.mrb[0].mxu0
      %v4861 = vadd.f32 %v4796, %v4860
      %v4862 = vpop.f32.mrb[0].mxu0
      %4863 = vdwg.mxu0
      %v4864 = vmax.f32 %v4834, %v4837
      %v4865 = vmax.f32 %v4842, %v4845
      %v4866 = vmax.f32 %v4850, %v4853
      %v4867 = vmax.f32 %v4858, %v4861
      %v4872 = vcombine.high %v4864, %v4864
      %v4874 = vunpack.c.l.s4 1983009808
      %v4875 = vunpack.c.0.s8 %v4874
      %v4876 = vlaneseq
      %v4877 = vshrl.u32 %v4876, 7
      %v4878 = vsub.s32 %v4875, %v4877
      %v4879 = vrot.slane %v4864, %v4878
      %v4881 = vunpack.c.l.s4 1983009808
      %v4882 = vunpack.c.0.s8 %v4881
      %v4883 = vlaneseq
      %v4884 = vshrl.u32 %v4883, 7
      %v4885 = vsub.s32 %v4882, %v4884
      %v4886 = vrot.slane %v4872, %v4885
      %v4887 = vcombine.high %v4879, %v4879
      %v4888 = vcombine.high %v4886, %v4886
      %v4889 = vcombine.high %v4865, %v4865
      %v4891 = vunpack.c.l.s4 1983009808
      %v4892 = vunpack.c.0.s8 %v4891
      %v4893 = vlaneseq
      %v4894 = vshrl.u32 %v4893, 7
      %v4895 = vsub.s32 %v4892, %v4894
      %v4896 = vrot.slane %v4865, %v4895
      %v4898 = vunpack.c.l.s4 1983009808
      %v4899 = vunpack.c.0.s8 %v4898
      %v4900 = vlaneseq
      %v4901 = vshrl.u32 %v4900, 7
      %v4902 = vsub.s32 %v4899, %v4901
      %v4903 = vrot.slane %v4889, %v4902
      %v4904 = vcombine.high %v4896, %v4896
      %v4905 = vcombine.high %v4903, %v4903
      %v4906 = vcombine.high %v4866, %v4866
      %v4908 = vunpack.c.l.s4 1983009808
      %v4909 = vunpack.c.0.s8 %v4908
      %v4910 = vlaneseq
      %v4911 = vshrl.u32 %v4910, 7
      %v4912 = vsub.s32 %v4909, %v4911
      %v4913 = vrot.slane %v4866, %v4912
      %v4915 = vunpack.c.l.s4 1983009808
      %v4916 = vunpack.c.0.s8 %v4915
      %v4917 = vlaneseq
      %v4918 = vshrl.u32 %v4917, 7
      %v4919 = vsub.s32 %v4916, %v4918
      %v4920 = vrot.slane %v4906, %v4919
      %v4921 = vcombine.high %v4913, %v4913
      %v4922 = vcombine.high %v4920, %v4920
      %v4923 = vcombine.high %v4867, %v4867
      %v4925 = vunpack.c.l.s4 1983009808
      %v4926 = vunpack.c.0.s8 %v4925
      %v4927 = vlaneseq
      %v4928 = vshrl.u32 %v4927, 7
      %v4929 = vsub.s32 %v4926, %v4928
      %v4930 = vrot.slane %v4867, %v4929
      %v4932 = vunpack.c.l.s4 1983009808
      %v4933 = vunpack.c.0.s8 %v4932
      %v4934 = vlaneseq
      %v4935 = vshrl.u32 %v4934, 7
      %v4936 = vsub.s32 %v4933, %v4935
      %v4937 = vrot.slane %v4923, %v4936
      %v4938 = vcombine.high %v4930, %v4930
      %v4939 = vcombine.high %v4937, %v4937
      %vm4956 = vcmask 1041408
      %v4957 = vsel %vm4956, %v4879, -inf
      %v4958 = vrot.slane %v4957, 4
      %v4959 = vmax.f32 %v4957, %v4958
      %v4960 = vrot.slane %v4959, 2
      %v4961 = vmax.f32 %v4959, %v4960
      %v4962 = vrot.slane %v4961, 1
      %v4963 = vmax.f32 %v4961, %v4962
      %v4964 = vsel %vm4956, %v4887, -inf
      %v4965 = vrot.slane %v4964, 4
      %v4966 = vmax.f32 %v4964, %v4965
      %v4967 = vrot.slane %v4966, 2
      %v4968 = vmax.f32 %v4966, %v4967
      %v4969 = vrot.slane %v4968, 1
      %v4970 = vmax.f32 %v4968, %v4969
      %v4971 = vsel %vm4956, %v4886, -inf
      %v4972 = vrot.slane %v4971, 4
      %v4973 = vmax.f32 %v4971, %v4972
      %v4974 = vrot.slane %v4973, 2
      %v4975 = vmax.f32 %v4973, %v4974
      %v4976 = vrot.slane %v4975, 1
      %v4977 = vmax.f32 %v4975, %v4976
      %v4978 = vsel %vm4956, %v4888, -inf
      %v4979 = vrot.slane %v4978, 4
      %v4980 = vmax.f32 %v4978, %v4979
      %v4981 = vrot.slane %v4980, 2
      %v4982 = vmax.f32 %v4980, %v4981
      %v4983 = vrot.slane %v4982, 1
      %v4984 = vmax.f32 %v4982, %v4983
      %v4985 = vsel %vm4956, %v4896, -inf
      %v4986 = vrot.slane %v4985, 4
      %v4987 = vmax.f32 %v4985, %v4986
      %v4988 = vrot.slane %v4987, 2
      %v4989 = vmax.f32 %v4987, %v4988
      %v4990 = vrot.slane %v4989, 1
      %v4991 = vmax.f32 %v4989, %v4990
      %v4992 = vsel %vm4956, %v4904, -inf
      %v4993 = vrot.slane %v4992, 4
      %v4994 = vmax.f32 %v4992, %v4993
      %v4995 = vrot.slane %v4994, 2
      %v4996 = vmax.f32 %v4994, %v4995
      %v4997 = vrot.slane %v4996, 1
      %v4998 = vmax.f32 %v4996, %v4997
      %v4999 = vsel %vm4956, %v4903, -inf
      %v5000 = vrot.slane %v4999, 4
      %v5001 = vmax.f32 %v4999, %v5000
      %v5002 = vrot.slane %v5001, 2
      %v5003 = vmax.f32 %v5001, %v5002
      %v5004 = vrot.slane %v5003, 1
      %v5005 = vmax.f32 %v5003, %v5004
      %v5006 = vsel %vm4956, %v4905, -inf
      %v5007 = vrot.slane %v5006, 4
      %v5008 = vmax.f32 %v5006, %v5007
      %v5009 = vrot.slane %v5008, 2
      %v5010 = vmax.f32 %v5008, %v5009
      %v5011 = vrot.slane %v5010, 1
      %v5012 = vmax.f32 %v5010, %v5011
      %v5013 = vsel %vm4956, %v4913, -inf
      %v5014 = vrot.slane %v5013, 4
      %v5015 = vmax.f32 %v5013, %v5014
      %v5016 = vrot.slane %v5015, 2
      %v5017 = vmax.f32 %v5015, %v5016
      %v5018 = vrot.slane %v5017, 1
      %v5019 = vmax.f32 %v5017, %v5018
      %v5020 = vsel %vm4956, %v4921, -inf
      %v5021 = vrot.slane %v5020, 4
      %v5022 = vmax.f32 %v5020, %v5021
      %v5023 = vrot.slane %v5022, 2
      %v5024 = vmax.f32 %v5022, %v5023
      %v5025 = vrot.slane %v5024, 1
      %v5026 = vmax.f32 %v5024, %v5025
      %v5027 = vsel %vm4956, %v4920, -inf
      %v5028 = vrot.slane %v5027, 4
      %v5029 = vmax.f32 %v5027, %v5028
      %v5030 = vrot.slane %v5029, 2
      %v5031 = vmax.f32 %v5029, %v5030
      %v5032 = vrot.slane %v5031, 1
      %v5033 = vmax.f32 %v5031, %v5032
      %v5034 = vsel %vm4956, %v4922, -inf
      %v5035 = vrot.slane %v5034, 4
      %v5036 = vmax.f32 %v5034, %v5035
      %v5037 = vrot.slane %v5036, 2
      %v5038 = vmax.f32 %v5036, %v5037
      %v5039 = vrot.slane %v5038, 1
      %v5040 = vmax.f32 %v5038, %v5039
      %v5041 = vsel %vm4956, %v4930, -inf
      %v5042 = vrot.slane %v5041, 4
      %v5043 = vmax.f32 %v5041, %v5042
      %v5044 = vrot.slane %v5043, 2
      %v5045 = vmax.f32 %v5043, %v5044
      %v5046 = vrot.slane %v5045, 1
      %v5047 = vmax.f32 %v5045, %v5046
      %v5048 = vsel %vm4956, %v4938, -inf
      %v5049 = vrot.slane %v5048, 4
      %v5050 = vmax.f32 %v5048, %v5049
      %v5051 = vrot.slane %v5050, 2
      %v5052 = vmax.f32 %v5050, %v5051
      %v5053 = vrot.slane %v5052, 1
      %v5054 = vmax.f32 %v5052, %v5053
      %v5055 = vsel %vm4956, %v4937, -inf
      %v5056 = vrot.slane %v5055, 4
      %v5057 = vmax.f32 %v5055, %v5056
      %v5058 = vrot.slane %v5057, 2
      %v5059 = vmax.f32 %v5057, %v5058
      %v5060 = vrot.slane %v5059, 1
      %v5061 = vmax.f32 %v5059, %v5060
      %v5062 = vsel %vm4956, %v4939, -inf
      %v5063 = vrot.slane %v5062, 4
      %v5064 = vmax.f32 %v5062, %v5063
      %v5065 = vrot.slane %v5064, 2
      %v5066 = vmax.f32 %v5064, %v5065
      %v5067 = vrot.slane %v5066, 1
      %v5068 = vmax.f32 %v5066, %v5067
      %v5069 = vld [vmem:[%s4] sm:$0x1]
      %v5071 = vlaneseq
      %v5072 = vshrl.u32 %v5071, 7
      %v5073 = vsub.s32 0, %v5072
      %v5074 = vrot.slane %v5069, %v5073
      %v5076 = vadd.f32 %v4963, %v5074
      %v5077 = vadd.f32 %v4970, %v5074
      %v5078 = vadd.f32 %v4977, %v5074
      %v5079 = vadd.f32 %v4984, %v5074
      %v5080 = vadd.f32 %v4991, %v5074
      %v5081 = vadd.f32 %v4998, %v5074
      %v5082 = vadd.f32 %v5005, %v5074
      %v5083 = vadd.f32 %v5012, %v5074
      %v5084 = vadd.f32 %v5019, %v5074
      %v5085 = vadd.f32 %v5026, %v5074
      %v5086 = vadd.f32 %v5033, %v5074
      %v5087 = vadd.f32 %v5040, %v5074
      %v5088 = vadd.f32 %v5047, %v5074
      %v5089 = vadd.f32 %v5054, %v5074
      %v5090 = vadd.f32 %v5061, %v5074
      %v5091 = vadd.f32 %v5068, %v5074
      %v5092 = vmax.f32 %v5076, 0.0
      %v5093 = vmax.f32 %v5077, 0.0
      %v5094 = vmax.f32 %v5078, 0.0
      %v5095 = vmax.f32 %v5079, 0.0
      %v5096 = vmax.f32 %v5080, 0.0
      %v5097 = vmax.f32 %v5081, 0.0
      %v5098 = vmax.f32 %v5082, 0.0
      %v5099 = vmax.f32 %v5083, 0.0
      %v5100 = vmax.f32 %v5084, 0.0
      %v5101 = vmax.f32 %v5085, 0.0
      %v5102 = vmax.f32 %v5086, 0.0
      %v5103 = vmax.f32 %v5087, 0.0
      %v5104 = vmax.f32 %v5088, 0.0
      %v5105 = vmax.f32 %v5089, 0.0
      %v5106 = vmax.f32 %v5090, 0.0
      %v5107 = vmax.f32 %v5091, 0.0
      %v5124 = vrot.slane %v5093, 7
      %vm5125 = vcmask 1041409
      %v5126 = vsel %vm5125, %v5124, %v5092
      %v5127 = vrot.slane %v5094, 6
      %vm5128 = vcmask 1042434
      %v5129 = vsel %vm5128, %v5127, %v5126
      %v5130 = vrot.slane %v5095, 5
      %vm5131 = vcmask 1043459
      %v5132 = vsel %vm5131, %v5130, %v5129
      %v5133 = vrot.slane %v5097, 7
      %v5134 = vsel %vm5125, %v5133, %v5096
      %v5135 = vrot.slane %v5098, 6
      %v5136 = vsel %vm5128, %v5135, %v5134
      %v5137 = vrot.slane %v5099, 5
      %v5138 = vsel %vm5131, %v5137, %v5136
      %v5139 = vrot.slane %v5101, 7
      %v5140 = vsel %vm5125, %v5139, %v5100
      %v5141 = vrot.slane %v5102, 6
      %v5142 = vsel %vm5128, %v5141, %v5140
      %v5143 = vrot.slane %v5103, 5
      %v5144 = vsel %vm5131, %v5143, %v5142
      %v5145 = vrot.slane %v5105, 7
      %v5146 = vsel %vm5125, %v5145, %v5104
      %v5147 = vrot.slane %v5106, 6
      %v5148 = vsel %vm5128, %v5147, %v5146
      %v5149 = vrot.slane %v5107, 5
      %v5150 = vsel %vm5131, %v5149, %v5148
      %vm5155 = vcmask 1040384
      %v5156 = vsel %vm5155, %v5132, 0.0
      %v5157 = vrot.slane %v5132, 1
      %v5158 = vsel %vm5155, %v5157, 0.0
      %v5159 = vrot.slane %v5132, 2
      %v5160 = vsel %vm5155, %v5159, 0.0
      %v5161 = vrot.slane %v5132, 3
      %v5162 = vsel %vm5155, %v5161, 0.0
      %v5163 = vsel %vm5155, %v5138, 0.0
      %v5164 = vrot.slane %v5138, 1
      %v5165 = vsel %vm5155, %v5164, 0.0
      %v5166 = vrot.slane %v5138, 2
      %v5167 = vsel %vm5155, %v5166, 0.0
      %v5168 = vrot.slane %v5138, 3
      %v5169 = vsel %vm5155, %v5168, 0.0
      %v5170 = vsel %vm5155, %v5144, 0.0
      %v5171 = vrot.slane %v5144, 1
      %v5172 = vsel %vm5155, %v5171, 0.0
      %v5173 = vrot.slane %v5144, 2
      %v5174 = vsel %vm5155, %v5173, 0.0
      %v5175 = vrot.slane %v5144, 3
      %v5176 = vsel %vm5155, %v5175, 0.0
      %v5177 = vsel %vm5155, %v5150, 0.0
      %v5178 = vrot.slane %v5150, 1
      %v5179 = vsel %vm5155, %v5178, 0.0
      %v5180 = vrot.slane %v5150, 2
      %v5181 = vsel %vm5155, %v5180, 0.0
      %v5182 = vrot.slane %v5150, 3
      %v5183 = vsel %vm5155, %v5182, 0.0
      %v5184 = vpack.c.bf16 %v5156, %v5156
      %v5185 = vpack.c.bf16 %v5158, %v5158
      %v5186 = vpack.c.bf16 %v5160, %v5160
      %v5187 = vpack.c.bf16 %v5162, %v5162
      %v5188 = vpack.c.bf16 %v5163, %v5163
      %v5189 = vpack.c.bf16 %v5165, %v5165
      %v5190 = vpack.c.bf16 %v5167, %v5167
      %v5191 = vpack.c.bf16 %v5169, %v5169
      %v5192 = vpack.c.bf16 %v5170, %v5170
      %v5193 = vpack.c.bf16 %v5172, %v5172
      %v5194 = vpack.c.bf16 %v5174, %v5174
      %v5195 = vpack.c.bf16 %v5176, %v5176
      %v5196 = vpack.c.bf16 %v5177, %v5177
      %v5197 = vpack.c.bf16 %v5179, %v5179
      %v5198 = vpack.c.bf16 %v5181, %v5181
      %v5199 = vpack.c.bf16 %v5183, %v5183
      %v5200 = vld [vmem:[%s5] sm:$0xf]
      %v5201 = vld [vmem:[%s5 + $0x4] sm:$0xf]
      %v5202 = vld [vmem:[%s5 + $0x8] sm:$0xf]
      %v5203 = vld [vmem:[%s5 + $0xc] sm:$0xf]
      %v5204 = vld [vmem:[%s5 + $0x10] sm:$0xf]
      %v5205 = vld [vmem:[%s5 + $0x14] sm:$0xf]
      %v5206 = vld [vmem:[%s5 + $0x18] sm:$0xf]
      %v5207 = vld [vmem:[%s5 + $0x1c] sm:$0xf]
      %v5208 = vld [vmem:[%s5 + $0x20] sm:$0xf]
      %v5209 = vld [vmem:[%s5 + $0x24] sm:$0xf]
      %v5210 = vld [vmem:[%s5 + $0x28] sm:$0xf]
      %v5211 = vld [vmem:[%s5 + $0x2c] sm:$0xf]
      %v5212 = vld [vmem:[%s5 + $0x30] sm:$0xf]
      %v5213 = vld [vmem:[%s5 + $0x34] sm:$0xf]
      %v5214 = vld [vmem:[%s5 + $0x38] sm:$0xf]
      %v5215 = vld [vmem:[%s5 + $0x3c] sm:$0xf]
      %v5216 = vld [vmem:[%s5 + $0x40] sm:$0xf]
      %v5217 = vld [vmem:[%s5 + $0x44] sm:$0xf]
      %v5218 = vld [vmem:[%s5 + $0x48] sm:$0xf]
      %v5219 = vld [vmem:[%s5 + $0x4c] sm:$0xf]
      %v5220 = vld [vmem:[%s5 + $0x50] sm:$0xf]
      %v5221 = vld [vmem:[%s5 + $0x54] sm:$0xf]
      %v5222 = vld [vmem:[%s5 + $0x58] sm:$0xf]
      %v5223 = vld [vmem:[%s5 + $0x5c] sm:$0xf]
      %v5224 = vld [vmem:[%s5 + $0x60] sm:$0xf]
      %v5225 = vld [vmem:[%s5 + $0x64] sm:$0xf]
      %v5226 = vld [vmem:[%s5 + $0x68] sm:$0xf]
      %v5227 = vld [vmem:[%s5 + $0x6c] sm:$0xf]
      %v5228 = vld [vmem:[%s5 + $0x70] sm:$0xf]
      %v5229 = vld [vmem:[%s5 + $0x74] sm:$0xf]
      %v5230 = vld [vmem:[%s5 + $0x78] sm:$0xf]
      %v5231 = vld [vmem:[%s5 + $0x7c] sm:$0xf]
      %v5232 = vld [vmem:[%s5 + $0x80] sm:$0xf]
      %v5233 = vld [vmem:[%s5 + $0x84] sm:$0xf]
      %v5234 = vld [vmem:[%s5 + $0x88] sm:$0xf]
      %v5235 = vld [vmem:[%s5 + $0x8c] sm:$0xf]
      %v5236 = vld [vmem:[%s5 + $0x90] sm:$0xf]
      %v5237 = vld [vmem:[%s5 + $0x94] sm:$0xf]
      %v5238 = vld [vmem:[%s5 + $0x98] sm:$0xf]
      %v5239 = vld [vmem:[%s5 + $0x9c] sm:$0xf]
      %v5240 = vld [vmem:[%s5 + $0xa0] sm:$0xf]
      %v5241 = vld [vmem:[%s5 + $0xa4] sm:$0xf]
      %v5242 = vld [vmem:[%s5 + $0xa8] sm:$0xf]
      %v5243 = vld [vmem:[%s5 + $0xac] sm:$0xf]
      %v5244 = vld [vmem:[%s5 + $0xb0] sm:$0xf]
      %v5245 = vld [vmem:[%s5 + $0xb4] sm:$0xf]
      %v5246 = vld [vmem:[%s5 + $0xb8] sm:$0xf]
      %v5247 = vld [vmem:[%s5 + $0xbc] sm:$0xf]
      %v5248 = vld [vmem:[%s5 + $0xc0] sm:$0xf]
      %v5249 = vld [vmem:[%s5 + $0xc4] sm:$0xf]
      %v5250 = vld [vmem:[%s5 + $0xc8] sm:$0xf]
      %v5251 = vld [vmem:[%s5 + $0xcc] sm:$0xf]
      %v5252 = vld [vmem:[%s5 + $0xd0] sm:$0xf]
      %v5253 = vld [vmem:[%s5 + $0xd4] sm:$0xf]
      %v5254 = vld [vmem:[%s5 + $0xd8] sm:$0xf]
      %v5255 = vld [vmem:[%s5 + $0xdc] sm:$0xf]
      %v5256 = vld [vmem:[%s5 + $0xe0] sm:$0xf]
      %v5257 = vld [vmem:[%s5 + $0xe4] sm:$0xf]
      %v5258 = vld [vmem:[%s5 + $0xe8] sm:$0xf]
      %v5259 = vld [vmem:[%s5 + $0xec] sm:$0xf]
      %v5260 = vld [vmem:[%s5 + $0xf0] sm:$0xf]
      %v5261 = vld [vmem:[%s5 + $0xf4] sm:$0xf]
      %v5262 = vld [vmem:[%s5 + $0xf8] sm:$0xf]
      %v5263 = vld [vmem:[%s5 + $0xfc] sm:$0xf]
      %v5264 = vld [vmem:[%s5 + $0x100] sm:$0xf]
      %v5265 = vld [vmem:[%s5 + $0x104] sm:$0xf]
      %v5266 = vld [vmem:[%s5 + $0x108] sm:$0xf]
      %v5267 = vld [vmem:[%s5 + $0x10c] sm:$0xf]
      %v5268 = vld [vmem:[%s5 + $0x110] sm:$0xf]
      %v5269 = vld [vmem:[%s5 + $0x114] sm:$0xf]
      %v5270 = vld [vmem:[%s5 + $0x118] sm:$0xf]
      %v5271 = vld [vmem:[%s5 + $0x11c] sm:$0xf]
      %v5272 = vld [vmem:[%s5 + $0x120] sm:$0xf]
      %v5273 = vld [vmem:[%s5 + $0x124] sm:$0xf]
      %v5274 = vld [vmem:[%s5 + $0x128] sm:$0xf]
      %v5275 = vld [vmem:[%s5 + $0x12c] sm:$0xf]
      %v5276 = vld [vmem:[%s5 + $0x130] sm:$0xf]
      %v5277 = vld [vmem:[%s5 + $0x134] sm:$0xf]
      %v5278 = vld [vmem:[%s5 + $0x138] sm:$0xf]
      %v5279 = vld [vmem:[%s5 + $0x13c] sm:$0xf]
      %v5280 = vld [vmem:[%s5 + $0x140] sm:$0xf]
      %v5281 = vld [vmem:[%s5 + $0x144] sm:$0xf]
      %v5282 = vld [vmem:[%s5 + $0x148] sm:$0xf]
      %v5283 = vld [vmem:[%s5 + $0x14c] sm:$0xf]
      %v5284 = vld [vmem:[%s5 + $0x150] sm:$0xf]
      %v5285 = vld [vmem:[%s5 + $0x154] sm:$0xf]
      %v5286 = vld [vmem:[%s5 + $0x158] sm:$0xf]
      %v5287 = vld [vmem:[%s5 + $0x15c] sm:$0xf]
      %v5288 = vld [vmem:[%s5 + $0x160] sm:$0xf]
      %v5289 = vld [vmem:[%s5 + $0x164] sm:$0xf]
      %v5290 = vld [vmem:[%s5 + $0x168] sm:$0xf]
      %v5291 = vld [vmem:[%s5 + $0x16c] sm:$0xf]
      %v5292 = vld [vmem:[%s5 + $0x170] sm:$0xf]
      %v5293 = vld [vmem:[%s5 + $0x174] sm:$0xf]
      %v5294 = vld [vmem:[%s5 + $0x178] sm:$0xf]
      %v5295 = vld [vmem:[%s5 + $0x17c] sm:$0xf]
      %v5296 = vld [vmem:[%s5 + $0x180] sm:$0xf]
      %v5297 = vld [vmem:[%s5 + $0x184] sm:$0xf]
      %v5298 = vld [vmem:[%s5 + $0x188] sm:$0xf]
      %v5299 = vld [vmem:[%s5 + $0x18c] sm:$0xf]
      %v5300 = vld [vmem:[%s5 + $0x190] sm:$0xf]
      %v5301 = vld [vmem:[%s5 + $0x194] sm:$0xf]
      %v5302 = vld [vmem:[%s5 + $0x198] sm:$0xf]
      %v5303 = vld [vmem:[%s5 + $0x19c] sm:$0xf]
      %v5304 = vld [vmem:[%s5 + $0x1a0] sm:$0xf]
      %v5305 = vld [vmem:[%s5 + $0x1a4] sm:$0xf]
      %v5306 = vld [vmem:[%s5 + $0x1a8] sm:$0xf]
      %v5307 = vld [vmem:[%s5 + $0x1ac] sm:$0xf]
      %v5308 = vld [vmem:[%s5 + $0x1b0] sm:$0xf]
      %v5309 = vld [vmem:[%s5 + $0x1b4] sm:$0xf]
      %v5310 = vld [vmem:[%s5 + $0x1b8] sm:$0xf]
      %v5311 = vld [vmem:[%s5 + $0x1bc] sm:$0xf]
      %v5312 = vld [vmem:[%s5 + $0x1c0] sm:$0xf]
      %v5313 = vld [vmem:[%s5 + $0x1c4] sm:$0xf]
      %v5314 = vld [vmem:[%s5 + $0x1c8] sm:$0xf]
      %v5315 = vld [vmem:[%s5 + $0x1cc] sm:$0xf]
      %v5316 = vld [vmem:[%s5 + $0x1d0] sm:$0xf]
      %v5317 = vld [vmem:[%s5 + $0x1d4] sm:$0xf]
      %v5318 = vld [vmem:[%s5 + $0x1d8] sm:$0xf]
      %v5319 = vld [vmem:[%s5 + $0x1dc] sm:$0xf]
      %v5320 = vld [vmem:[%s5 + $0x1e0] sm:$0xf]
      %v5321 = vld [vmem:[%s5 + $0x1e4] sm:$0xf]
      %v5322 = vld [vmem:[%s5 + $0x1e8] sm:$0xf]
      %v5323 = vld [vmem:[%s5 + $0x1ec] sm:$0xf]
      %v5324 = vld [vmem:[%s5 + $0x1f0] sm:$0xf]
      %v5325 = vld [vmem:[%s5 + $0x1f4] sm:$0xf]
      %v5326 = vld [vmem:[%s5 + $0x1f8] sm:$0xf]
      %v5327 = vld [vmem:[%s5 + $0x1fc] sm:$0xf]
      %v5328 = vld [vmem:[%s5 + $0x200] sm:$0xf]
      %v5329 = vld [vmem:[%s5 + $0x204] sm:$0xf]
      %v5330 = vld [vmem:[%s5 + $0x208] sm:$0xf]
      %v5331 = vld [vmem:[%s5 + $0x20c] sm:$0xf]
      %v5332 = vld [vmem:[%s5 + $0x210] sm:$0xf]
      %v5333 = vld [vmem:[%s5 + $0x214] sm:$0xf]
      %v5334 = vld [vmem:[%s5 + $0x218] sm:$0xf]
      %v5335 = vld [vmem:[%s5 + $0x21c] sm:$0xf]
      %v5336 = vld [vmem:[%s5 + $0x220] sm:$0xf]
      %v5337 = vld [vmem:[%s5 + $0x224] sm:$0xf]
      %v5338 = vld [vmem:[%s5 + $0x228] sm:$0xf]
      %v5339 = vld [vmem:[%s5 + $0x22c] sm:$0xf]
      %v5340 = vld [vmem:[%s5 + $0x230] sm:$0xf]
      %v5341 = vld [vmem:[%s5 + $0x234] sm:$0xf]
      %v5342 = vld [vmem:[%s5 + $0x238] sm:$0xf]
      %v5343 = vld [vmem:[%s5 + $0x23c] sm:$0xf]
      %v5344 = vld [vmem:[%s5 + $0x240] sm:$0xf]
      %v5345 = vld [vmem:[%s5 + $0x244] sm:$0xf]
      %v5346 = vld [vmem:[%s5 + $0x248] sm:$0xf]
      %v5347 = vld [vmem:[%s5 + $0x24c] sm:$0xf]
      %v5348 = vld [vmem:[%s5 + $0x250] sm:$0xf]
      %v5349 = vld [vmem:[%s5 + $0x254] sm:$0xf]
      %v5350 = vld [vmem:[%s5 + $0x258] sm:$0xf]
      %v5351 = vld [vmem:[%s5 + $0x25c] sm:$0xf]
      %v5352 = vld [vmem:[%s5 + $0x260] sm:$0xf]
      %v5353 = vld [vmem:[%s5 + $0x264] sm:$0xf]
      %v5354 = vld [vmem:[%s5 + $0x268] sm:$0xf]
      %v5355 = vld [vmem:[%s5 + $0x26c] sm:$0xf]
      %v5356 = vld [vmem:[%s5 + $0x270] sm:$0xf]
      %v5357 = vld [vmem:[%s5 + $0x274] sm:$0xf]
      %v5358 = vld [vmem:[%s5 + $0x278] sm:$0xf]
      %v5359 = vld [vmem:[%s5 + $0x27c] sm:$0xf]
      %v5360 = vld [vmem:[%s5 + $0x280] sm:$0xf]
      %v5361 = vld [vmem:[%s5 + $0x284] sm:$0xf]
      %v5362 = vld [vmem:[%s5 + $0x288] sm:$0xf]
      %v5363 = vld [vmem:[%s5 + $0x28c] sm:$0xf]
      %v5364 = vld [vmem:[%s5 + $0x290] sm:$0xf]
      %v5365 = vld [vmem:[%s5 + $0x294] sm:$0xf]
      %v5366 = vld [vmem:[%s5 + $0x298] sm:$0xf]
      %v5367 = vld [vmem:[%s5 + $0x29c] sm:$0xf]
      %v5368 = vld [vmem:[%s5 + $0x2a0] sm:$0xf]
      %v5369 = vld [vmem:[%s5 + $0x2a4] sm:$0xf]
      %v5370 = vld [vmem:[%s5 + $0x2a8] sm:$0xf]
      %v5371 = vld [vmem:[%s5 + $0x2ac] sm:$0xf]
      %v5372 = vld [vmem:[%s5 + $0x2b0] sm:$0xf]
      %v5373 = vld [vmem:[%s5 + $0x2b4] sm:$0xf]
      %v5374 = vld [vmem:[%s5 + $0x2b8] sm:$0xf]
      %v5375 = vld [vmem:[%s5 + $0x2bc] sm:$0xf]
      %v5376 = vld [vmem:[%s5 + $0x2c0] sm:$0xf]
      %v5377 = vld [vmem:[%s5 + $0x2c4] sm:$0xf]
      %v5378 = vld [vmem:[%s5 + $0x2c8] sm:$0xf]
      %v5379 = vld [vmem:[%s5 + $0x2cc] sm:$0xf]
      %v5380 = vld [vmem:[%s5 + $0x2d0] sm:$0xf]
      %v5381 = vld [vmem:[%s5 + $0x2d4] sm:$0xf]
      %v5382 = vld [vmem:[%s5 + $0x2d8] sm:$0xf]
      %v5383 = vld [vmem:[%s5 + $0x2dc] sm:$0xf]
      %v5384 = vld [vmem:[%s5 + $0x2e0] sm:$0xf]
      %v5385 = vld [vmem:[%s5 + $0x2e4] sm:$0xf]
      %v5386 = vld [vmem:[%s5 + $0x2e8] sm:$0xf]
      %v5387 = vld [vmem:[%s5 + $0x2ec] sm:$0xf]
      %v5388 = vld [vmem:[%s5 + $0x2f0] sm:$0xf]
      %v5389 = vld [vmem:[%s5 + $0x2f4] sm:$0xf]
      %v5390 = vld [vmem:[%s5 + $0x2f8] sm:$0xf]
      %v5391 = vld [vmem:[%s5 + $0x2fc] sm:$0xf]
      %v5392 = vld [vmem:[%s5 + $0x300] sm:$0xf]
      %v5393 = vld [vmem:[%s5 + $0x304] sm:$0xf]
      %v5394 = vld [vmem:[%s5 + $0x308] sm:$0xf]
      %v5395 = vld [vmem:[%s5 + $0x30c] sm:$0xf]
      %v5396 = vld [vmem:[%s5 + $0x310] sm:$0xf]
      %v5397 = vld [vmem:[%s5 + $0x314] sm:$0xf]
      %v5398 = vld [vmem:[%s5 + $0x318] sm:$0xf]
      %v5399 = vld [vmem:[%s5 + $0x31c] sm:$0xf]
      %v5400 = vld [vmem:[%s5 + $0x320] sm:$0xf]
      %v5401 = vld [vmem:[%s5 + $0x324] sm:$0xf]
      %v5402 = vld [vmem:[%s5 + $0x328] sm:$0xf]
      %v5403 = vld [vmem:[%s5 + $0x32c] sm:$0xf]
      %v5404 = vld [vmem:[%s5 + $0x330] sm:$0xf]
      %v5405 = vld [vmem:[%s5 + $0x334] sm:$0xf]
      %v5406 = vld [vmem:[%s5 + $0x338] sm:$0xf]
      %v5407 = vld [vmem:[%s5 + $0x33c] sm:$0xf]
      %v5408 = vld [vmem:[%s5 + $0x340] sm:$0xf]
      %v5409 = vld [vmem:[%s5 + $0x344] sm:$0xf]
      %v5410 = vld [vmem:[%s5 + $0x348] sm:$0xf]
      %v5411 = vld [vmem:[%s5 + $0x34c] sm:$0xf]
      %v5412 = vld [vmem:[%s5 + $0x350] sm:$0xf]
      %v5413 = vld [vmem:[%s5 + $0x354] sm:$0xf]
      %v5414 = vld [vmem:[%s5 + $0x358] sm:$0xf]
      %v5415 = vld [vmem:[%s5 + $0x35c] sm:$0xf]
      %v5416 = vld [vmem:[%s5 + $0x360] sm:$0xf]
      %v5417 = vld [vmem:[%s5 + $0x364] sm:$0xf]
      %v5418 = vld [vmem:[%s5 + $0x368] sm:$0xf]
      %v5419 = vld [vmem:[%s5 + $0x36c] sm:$0xf]
      %v5420 = vld [vmem:[%s5 + $0x370] sm:$0xf]
      %v5421 = vld [vmem:[%s5 + $0x374] sm:$0xf]
      %v5422 = vld [vmem:[%s5 + $0x378] sm:$0xf]
      %v5423 = vld [vmem:[%s5 + $0x37c] sm:$0xf]
      %v5424 = vld [vmem:[%s5 + $0x380] sm:$0xf]
      %v5425 = vld [vmem:[%s5 + $0x384] sm:$0xf]
      %v5426 = vld [vmem:[%s5 + $0x388] sm:$0xf]
      %v5427 = vld [vmem:[%s5 + $0x38c] sm:$0xf]
      %v5428 = vld [vmem:[%s5 + $0x390] sm:$0xf]
      %v5429 = vld [vmem:[%s5 + $0x394] sm:$0xf]
      %v5430 = vld [vmem:[%s5 + $0x398] sm:$0xf]
      %v5431 = vld [vmem:[%s5 + $0x39c] sm:$0xf]
      %v5432 = vld [vmem:[%s5 + $0x3a0] sm:$0xf]
      %v5433 = vld [vmem:[%s5 + $0x3a4] sm:$0xf]
      %v5434 = vld [vmem:[%s5 + $0x3a8] sm:$0xf]
      %v5435 = vld [vmem:[%s5 + $0x3ac] sm:$0xf]
      %v5436 = vld [vmem:[%s5 + $0x3b0] sm:$0xf]
      %v5437 = vld [vmem:[%s5 + $0x3b4] sm:$0xf]
      %v5438 = vld [vmem:[%s5 + $0x3b8] sm:$0xf]
      %v5439 = vld [vmem:[%s5 + $0x3bc] sm:$0xf]
      %v5440 = vld [vmem:[%s5 + $0x3c0] sm:$0xf]
      %v5441 = vld [vmem:[%s5 + $0x3c4] sm:$0xf]
      %v5442 = vld [vmem:[%s5 + $0x3c8] sm:$0xf]
      %v5443 = vld [vmem:[%s5 + $0x3cc] sm:$0xf]
      %v5444 = vld [vmem:[%s5 + $0x3d0] sm:$0xf]
      %v5445 = vld [vmem:[%s5 + $0x3d4] sm:$0xf]
      %v5446 = vld [vmem:[%s5 + $0x3d8] sm:$0xf]
      %v5447 = vld [vmem:[%s5 + $0x3dc] sm:$0xf]
      %v5448 = vld [vmem:[%s5 + $0x3e0] sm:$0xf]
      %v5449 = vld [vmem:[%s5 + $0x3e4] sm:$0xf]
      %v5450 = vld [vmem:[%s5 + $0x3e8] sm:$0xf]
      %v5451 = vld [vmem:[%s5 + $0x3ec] sm:$0xf]
      %v5452 = vld [vmem:[%s5 + $0x3f0] sm:$0xf]
      %v5453 = vld [vmem:[%s5 + $0x3f4] sm:$0xf]
      %v5454 = vld [vmem:[%s5 + $0x3f8] sm:$0xf]
      %v5455 = vld [vmem:[%s5 + $0x3fc] sm:$0xf]
      %v5456 = vld [vmem:[%s6] sm:$0x1]
      %v5713 = vunpack.c.l.b16 %v5200
      %v5714 = vunpack.c.l.b16 %v5201
      %v5715 = vunpack.c.l.b16 %v5202
      %v5716 = vunpack.c.l.b16 %v5203
      %v5717 = vunpack.c.l.b16 %v5204
      %v5718 = vunpack.c.l.b16 %v5205
      %v5719 = vunpack.c.l.b16 %v5206
      %v5720 = vunpack.c.l.b16 %v5207
      %v5721 = vunpack.c.l.b16 %v5208
      %v5722 = vunpack.c.l.b16 %v5209
      %v5723 = vunpack.c.l.b16 %v5210
      %v5724 = vunpack.c.l.b16 %v5211
      %v5725 = vunpack.c.l.b16 %v5212
      %v5726 = vunpack.c.l.b16 %v5213
      %v5727 = vunpack.c.l.b16 %v5214
      %v5728 = vunpack.c.l.b16 %v5215
      %v5729 = vunpack.c.l.b16 %v5216
      %v5730 = vunpack.c.l.b16 %v5217
      %v5731 = vunpack.c.l.b16 %v5218
      %v5732 = vunpack.c.l.b16 %v5219
      %v5733 = vunpack.c.l.b16 %v5220
      %v5734 = vunpack.c.l.b16 %v5221
      %v5735 = vunpack.c.l.b16 %v5222
      %v5736 = vunpack.c.l.b16 %v5223
      %v5737 = vunpack.c.l.b16 %v5224
      %v5738 = vunpack.c.l.b16 %v5225
      %v5739 = vunpack.c.l.b16 %v5226
      %v5740 = vunpack.c.l.b16 %v5227
      %v5741 = vunpack.c.l.b16 %v5228
      %v5742 = vunpack.c.l.b16 %v5229
      %v5743 = vunpack.c.l.b16 %v5230
      %v5744 = vunpack.c.l.b16 %v5231
      %v5745 = vunpack.c.l.b16 %v5232
      %v5746 = vunpack.c.l.b16 %v5233
      %v5747 = vunpack.c.l.b16 %v5234
      %v5748 = vunpack.c.l.b16 %v5235
      %v5749 = vunpack.c.l.b16 %v5236
      %v5750 = vunpack.c.l.b16 %v5237
      %v5751 = vunpack.c.l.b16 %v5238
      %v5752 = vunpack.c.l.b16 %v5239
      %v5753 = vunpack.c.l.b16 %v5240
      %v5754 = vunpack.c.l.b16 %v5241
      %v5755 = vunpack.c.l.b16 %v5242
      %v5756 = vunpack.c.l.b16 %v5243
      %v5757 = vunpack.c.l.b16 %v5244
      %v5758 = vunpack.c.l.b16 %v5245
      %v5759 = vunpack.c.l.b16 %v5246
      %v5760 = vunpack.c.l.b16 %v5247
      %v5761 = vunpack.c.l.b16 %v5248
      %v5762 = vunpack.c.l.b16 %v5249
      %v5763 = vunpack.c.l.b16 %v5250
      %v5764 = vunpack.c.l.b16 %v5251
      %v5765 = vunpack.c.l.b16 %v5252
      %v5766 = vunpack.c.l.b16 %v5253
      %v5767 = vunpack.c.l.b16 %v5254
      %v5768 = vunpack.c.l.b16 %v5255
      %v5769 = vunpack.c.l.b16 %v5256
      %v5770 = vunpack.c.l.b16 %v5257
      %v5771 = vunpack.c.l.b16 %v5258
      %v5772 = vunpack.c.l.b16 %v5259
      %v5773 = vunpack.c.l.b16 %v5260
      %v5774 = vunpack.c.l.b16 %v5261
      %v5775 = vunpack.c.l.b16 %v5262
      %v5776 = vunpack.c.l.b16 %v5263
      %v5777 = vunpack.c.l.b16 %v5264
      %v5778 = vunpack.c.l.b16 %v5265
      %v5779 = vunpack.c.l.b16 %v5266
      %v5780 = vunpack.c.l.b16 %v5267
      %v5781 = vunpack.c.l.b16 %v5268
      %v5782 = vunpack.c.l.b16 %v5269
      %v5783 = vunpack.c.l.b16 %v5270
      %v5784 = vunpack.c.l.b16 %v5271
      %v5785 = vunpack.c.l.b16 %v5272
      %v5786 = vunpack.c.l.b16 %v5273
      %v5787 = vunpack.c.l.b16 %v5274
      %v5788 = vunpack.c.l.b16 %v5275
      %v5789 = vunpack.c.l.b16 %v5276
      %v5790 = vunpack.c.l.b16 %v5277
      %v5791 = vunpack.c.l.b16 %v5278
      %v5792 = vunpack.c.l.b16 %v5279
      %v5793 = vunpack.c.l.b16 %v5280
      %v5794 = vunpack.c.l.b16 %v5281
      %v5795 = vunpack.c.l.b16 %v5282
      %v5796 = vunpack.c.l.b16 %v5283
      %v5797 = vunpack.c.l.b16 %v5284
      %v5798 = vunpack.c.l.b16 %v5285
      %v5799 = vunpack.c.l.b16 %v5286
      %v5800 = vunpack.c.l.b16 %v5287
      %v5801 = vunpack.c.l.b16 %v5288
      %v5802 = vunpack.c.l.b16 %v5289
      %v5803 = vunpack.c.l.b16 %v5290
      %v5804 = vunpack.c.l.b16 %v5291
      %v5805 = vunpack.c.l.b16 %v5292
      %v5806 = vunpack.c.l.b16 %v5293
      %v5807 = vunpack.c.l.b16 %v5294
      %v5808 = vunpack.c.l.b16 %v5295
      %v5809 = vunpack.c.l.b16 %v5296
      %v5810 = vunpack.c.l.b16 %v5297
      %v5811 = vunpack.c.l.b16 %v5298
      %v5812 = vunpack.c.l.b16 %v5299
      %v5813 = vunpack.c.l.b16 %v5300
      %v5814 = vunpack.c.l.b16 %v5301
      %v5815 = vunpack.c.l.b16 %v5302
      %v5816 = vunpack.c.l.b16 %v5303
      %v5817 = vunpack.c.l.b16 %v5304
      %v5818 = vunpack.c.l.b16 %v5305
      %v5819 = vunpack.c.l.b16 %v5306
      %v5820 = vunpack.c.l.b16 %v5307
      %v5821 = vunpack.c.l.b16 %v5308
      %v5822 = vunpack.c.l.b16 %v5309
      %v5823 = vunpack.c.l.b16 %v5310
      %v5824 = vunpack.c.l.b16 %v5311
      %v5825 = vunpack.c.l.b16 %v5312
      %v5826 = vunpack.c.l.b16 %v5313
      %v5827 = vunpack.c.l.b16 %v5314
      %v5828 = vunpack.c.l.b16 %v5315
      %v5829 = vunpack.c.l.b16 %v5316
      %v5830 = vunpack.c.l.b16 %v5317
      %v5831 = vunpack.c.l.b16 %v5318
      %v5832 = vunpack.c.l.b16 %v5319
      %v5833 = vunpack.c.l.b16 %v5320
      %v5834 = vunpack.c.l.b16 %v5321
      %v5835 = vunpack.c.l.b16 %v5322
      %v5836 = vunpack.c.l.b16 %v5323
      %v5837 = vunpack.c.l.b16 %v5324
      %v5838 = vunpack.c.l.b16 %v5325
      %v5839 = vunpack.c.l.b16 %v5326
      %v5840 = vunpack.c.l.b16 %v5327
      %v5841 = vunpack.c.l.b16 %v5328
      %v5842 = vunpack.c.l.b16 %v5329
      %v5843 = vunpack.c.l.b16 %v5330
      %v5844 = vunpack.c.l.b16 %v5331
      %v5845 = vunpack.c.l.b16 %v5332
      %v5846 = vunpack.c.l.b16 %v5333
      %v5847 = vunpack.c.l.b16 %v5334
      %v5848 = vunpack.c.l.b16 %v5335
      %v5849 = vunpack.c.l.b16 %v5336
      %v5850 = vunpack.c.l.b16 %v5337
      %v5851 = vunpack.c.l.b16 %v5338
      %v5852 = vunpack.c.l.b16 %v5339
      %v5853 = vunpack.c.l.b16 %v5340
      %v5854 = vunpack.c.l.b16 %v5341
      %v5855 = vunpack.c.l.b16 %v5342
      %v5856 = vunpack.c.l.b16 %v5343
      %v5857 = vunpack.c.l.b16 %v5344
      %v5858 = vunpack.c.l.b16 %v5345
      %v5859 = vunpack.c.l.b16 %v5346
      %v5860 = vunpack.c.l.b16 %v5347
      %v5861 = vunpack.c.l.b16 %v5348
      %v5862 = vunpack.c.l.b16 %v5349
      %v5863 = vunpack.c.l.b16 %v5350
      %v5864 = vunpack.c.l.b16 %v5351
      %v5865 = vunpack.c.l.b16 %v5352
      %v5866 = vunpack.c.l.b16 %v5353
      %v5867 = vunpack.c.l.b16 %v5354
      %v5868 = vunpack.c.l.b16 %v5355
      %v5869 = vunpack.c.l.b16 %v5356
      %v5870 = vunpack.c.l.b16 %v5357
      %v5871 = vunpack.c.l.b16 %v5358
      %v5872 = vunpack.c.l.b16 %v5359
      %v5873 = vunpack.c.l.b16 %v5360
      %v5874 = vunpack.c.l.b16 %v5361
      %v5875 = vunpack.c.l.b16 %v5362
      %v5876 = vunpack.c.l.b16 %v5363
      %v5877 = vunpack.c.l.b16 %v5364
      %v5878 = vunpack.c.l.b16 %v5365
      %v5879 = vunpack.c.l.b16 %v5366
      %v5880 = vunpack.c.l.b16 %v5367
      %v5881 = vunpack.c.l.b16 %v5368
      %v5882 = vunpack.c.l.b16 %v5369
      %v5883 = vunpack.c.l.b16 %v5370
      %v5884 = vunpack.c.l.b16 %v5371
      %v5885 = vunpack.c.l.b16 %v5372
      %v5886 = vunpack.c.l.b16 %v5373
      %v5887 = vunpack.c.l.b16 %v5374
      %v5888 = vunpack.c.l.b16 %v5375
      %v5889 = vunpack.c.l.b16 %v5376
      %v5890 = vunpack.c.l.b16 %v5377
      %v5891 = vunpack.c.l.b16 %v5378
      %v5892 = vunpack.c.l.b16 %v5379
      %v5893 = vunpack.c.l.b16 %v5380
      %v5894 = vunpack.c.l.b16 %v5381
      %v5895 = vunpack.c.l.b16 %v5382
      %v5896 = vunpack.c.l.b16 %v5383
      %v5897 = vunpack.c.l.b16 %v5384
      %v5898 = vunpack.c.l.b16 %v5385
      %v5899 = vunpack.c.l.b16 %v5386
      %v5900 = vunpack.c.l.b16 %v5387
      %v5901 = vunpack.c.l.b16 %v5388
      %v5902 = vunpack.c.l.b16 %v5389
      %v5903 = vunpack.c.l.b16 %v5390
      %v5904 = vunpack.c.l.b16 %v5391
      %v5905 = vunpack.c.l.b16 %v5392
      %v5906 = vunpack.c.l.b16 %v5393
      %v5907 = vunpack.c.l.b16 %v5394
      %v5908 = vunpack.c.l.b16 %v5395
      %v5909 = vunpack.c.l.b16 %v5396
      %v5910 = vunpack.c.l.b16 %v5397
      %v5911 = vunpack.c.l.b16 %v5398
      %v5912 = vunpack.c.l.b16 %v5399
      %v5913 = vunpack.c.l.b16 %v5400
      %v5914 = vunpack.c.l.b16 %v5401
      %v5915 = vunpack.c.l.b16 %v5402
      %v5916 = vunpack.c.l.b16 %v5403
      %v5917 = vunpack.c.l.b16 %v5404
      %v5918 = vunpack.c.l.b16 %v5405
      %v5919 = vunpack.c.l.b16 %v5406
      %v5920 = vunpack.c.l.b16 %v5407
      %v5921 = vunpack.c.l.b16 %v5408
      %v5922 = vunpack.c.l.b16 %v5409
      %v5923 = vunpack.c.l.b16 %v5410
      %v5924 = vunpack.c.l.b16 %v5411
      %v5925 = vunpack.c.l.b16 %v5412
      %v5926 = vunpack.c.l.b16 %v5413
      %v5927 = vunpack.c.l.b16 %v5414
      %v5928 = vunpack.c.l.b16 %v5415
      %v5929 = vunpack.c.l.b16 %v5416
      %v5930 = vunpack.c.l.b16 %v5417
      %v5931 = vunpack.c.l.b16 %v5418
      %v5932 = vunpack.c.l.b16 %v5419
      %v5933 = vunpack.c.l.b16 %v5420
      %v5934 = vunpack.c.l.b16 %v5421
      %v5935 = vunpack.c.l.b16 %v5422
      %v5936 = vunpack.c.l.b16 %v5423
      %v5937 = vunpack.c.l.b16 %v5424
      %v5938 = vunpack.c.l.b16 %v5425
      %v5939 = vunpack.c.l.b16 %v5426
      %v5940 = vunpack.c.l.b16 %v5427
      %v5941 = vunpack.c.l.b16 %v5428
      %v5942 = vunpack.c.l.b16 %v5429
      %v5943 = vunpack.c.l.b16 %v5430
      %v5944 = vunpack.c.l.b16 %v5431
      %v5945 = vunpack.c.l.b16 %v5432
      %v5946 = vunpack.c.l.b16 %v5433
      %v5947 = vunpack.c.l.b16 %v5434
      %v5948 = vunpack.c.l.b16 %v5435
      %v5949 = vunpack.c.l.b16 %v5436
      %v5950 = vunpack.c.l.b16 %v5437
      %v5951 = vunpack.c.l.b16 %v5438
      %v5952 = vunpack.c.l.b16 %v5439
      %v5953 = vunpack.c.l.b16 %v5440
      %v5954 = vunpack.c.l.b16 %v5441
      %v5955 = vunpack.c.l.b16 %v5442
      %v5956 = vunpack.c.l.b16 %v5443
      %v5957 = vunpack.c.l.b16 %v5444
      %v5958 = vunpack.c.l.b16 %v5445
      %v5959 = vunpack.c.l.b16 %v5446
      %v5960 = vunpack.c.l.b16 %v5447
      %v5961 = vunpack.c.l.b16 %v5448
      %v5962 = vunpack.c.l.b16 %v5449
      %v5963 = vunpack.c.l.b16 %v5450
      %v5964 = vunpack.c.l.b16 %v5451
      %v5965 = vunpack.c.l.b16 %v5452
      %v5966 = vunpack.c.l.b16 %v5453
      %v5967 = vunpack.c.l.b16 %v5454
      %v5968 = vunpack.c.l.b16 %v5455
      %v5969 = vpack.c.b16 %v5714, %v5713
      %v5970 = vpack.c.b16 %v5716, %v5715
      %v5971 = vpack.c.b16 %v5718, %v5717
      %v5972 = vpack.c.b16 %v5720, %v5719
      %v5973 = vpack.c.b16 %v5722, %v5721
      %v5974 = vpack.c.b16 %v5724, %v5723
      %v5975 = vpack.c.b16 %v5726, %v5725
      %v5976 = vpack.c.b16 %v5728, %v5727
      %v5977 = vpack.c.b16 %v5730, %v5729
      %v5978 = vpack.c.b16 %v5732, %v5731
      %v5979 = vpack.c.b16 %v5734, %v5733
      %v5980 = vpack.c.b16 %v5736, %v5735
      %v5981 = vpack.c.b16 %v5738, %v5737
      %v5982 = vpack.c.b16 %v5740, %v5739
      %v5983 = vpack.c.b16 %v5742, %v5741
      %v5984 = vpack.c.b16 %v5744, %v5743
      %v5985 = vpack.c.b16 %v5746, %v5745
      %v5986 = vpack.c.b16 %v5748, %v5747
      %v5987 = vpack.c.b16 %v5750, %v5749
      %v5988 = vpack.c.b16 %v5752, %v5751
      %v5989 = vpack.c.b16 %v5754, %v5753
      %v5990 = vpack.c.b16 %v5756, %v5755
      %v5991 = vpack.c.b16 %v5758, %v5757
      %v5992 = vpack.c.b16 %v5760, %v5759
      %v5993 = vpack.c.b16 %v5762, %v5761
      %v5994 = vpack.c.b16 %v5764, %v5763
      %v5995 = vpack.c.b16 %v5766, %v5765
      %v5996 = vpack.c.b16 %v5768, %v5767
      %v5997 = vpack.c.b16 %v5770, %v5769
      %v5998 = vpack.c.b16 %v5772, %v5771
      %v5999 = vpack.c.b16 %v5774, %v5773
      %v6000 = vpack.c.b16 %v5776, %v5775
      %v6001 = vpack.c.b16 %v5778, %v5777
      %v6002 = vpack.c.b16 %v5780, %v5779
      %v6003 = vpack.c.b16 %v5782, %v5781
      %v6004 = vpack.c.b16 %v5784, %v5783
      %v6005 = vpack.c.b16 %v5786, %v5785
      %v6006 = vpack.c.b16 %v5788, %v5787
      %v6007 = vpack.c.b16 %v5790, %v5789
      %v6008 = vpack.c.b16 %v5792, %v5791
      %v6009 = vpack.c.b16 %v5794, %v5793
      %v6010 = vpack.c.b16 %v5796, %v5795
      %v6011 = vpack.c.b16 %v5798, %v5797
      %v6012 = vpack.c.b16 %v5800, %v5799
      %v6013 = vpack.c.b16 %v5802, %v5801
      %v6014 = vpack.c.b16 %v5804, %v5803
      %v6015 = vpack.c.b16 %v5806, %v5805
      %v6016 = vpack.c.b16 %v5808, %v5807
      %v6017 = vpack.c.b16 %v5810, %v5809
      %v6018 = vpack.c.b16 %v5812, %v5811
      %v6019 = vpack.c.b16 %v5814, %v5813
      %v6020 = vpack.c.b16 %v5816, %v5815
      %v6021 = vpack.c.b16 %v5818, %v5817
      %v6022 = vpack.c.b16 %v5820, %v5819
      %v6023 = vpack.c.b16 %v5822, %v5821
      %v6024 = vpack.c.b16 %v5824, %v5823
      %v6025 = vpack.c.b16 %v5826, %v5825
      %v6026 = vpack.c.b16 %v5828, %v5827
      %v6027 = vpack.c.b16 %v5830, %v5829
      %v6028 = vpack.c.b16 %v5832, %v5831
      %v6029 = vpack.c.b16 %v5834, %v5833
      %v6030 = vpack.c.b16 %v5836, %v5835
      %v6031 = vpack.c.b16 %v5838, %v5837
      %v6032 = vpack.c.b16 %v5840, %v5839
      %v6033 = vpack.c.b16 %v5842, %v5841
      %v6034 = vpack.c.b16 %v5844, %v5843
      %v6035 = vpack.c.b16 %v5846, %v5845
      %v6036 = vpack.c.b16 %v5848, %v5847
      %v6037 = vpack.c.b16 %v5850, %v5849
      %v6038 = vpack.c.b16 %v5852, %v5851
      %v6039 = vpack.c.b16 %v5854, %v5853
      %v6040 = vpack.c.b16 %v5856, %v5855
      %v6041 = vpack.c.b16 %v5858, %v5857
      %v6042 = vpack.c.b16 %v5860, %v5859
      %v6043 = vpack.c.b16 %v5862, %v5861
      %v6044 = vpack.c.b16 %v5864, %v5863
      %v6045 = vpack.c.b16 %v5866, %v5865
      %v6046 = vpack.c.b16 %v5868, %v5867
      %v6047 = vpack.c.b16 %v5870, %v5869
      %v6048 = vpack.c.b16 %v5872, %v5871
      %v6049 = vpack.c.b16 %v5874, %v5873
      %v6050 = vpack.c.b16 %v5876, %v5875
      %v6051 = vpack.c.b16 %v5878, %v5877
      %v6052 = vpack.c.b16 %v5880, %v5879
      %v6053 = vpack.c.b16 %v5882, %v5881
      %v6054 = vpack.c.b16 %v5884, %v5883
      %v6055 = vpack.c.b16 %v5886, %v5885
      %v6056 = vpack.c.b16 %v5888, %v5887
      %v6057 = vpack.c.b16 %v5890, %v5889
      %v6058 = vpack.c.b16 %v5892, %v5891
      %v6059 = vpack.c.b16 %v5894, %v5893
      %v6060 = vpack.c.b16 %v5896, %v5895
      %v6061 = vpack.c.b16 %v5898, %v5897
      %v6062 = vpack.c.b16 %v5900, %v5899
      %v6063 = vpack.c.b16 %v5902, %v5901
      %v6064 = vpack.c.b16 %v5904, %v5903
      %v6065 = vpack.c.b16 %v5906, %v5905
      %v6066 = vpack.c.b16 %v5908, %v5907
      %v6067 = vpack.c.b16 %v5910, %v5909
      %v6068 = vpack.c.b16 %v5912, %v5911
      %v6069 = vpack.c.b16 %v5914, %v5913
      %v6070 = vpack.c.b16 %v5916, %v5915
      %v6071 = vpack.c.b16 %v5918, %v5917
      %v6072 = vpack.c.b16 %v5920, %v5919
      %v6073 = vpack.c.b16 %v5922, %v5921
      %v6074 = vpack.c.b16 %v5924, %v5923
      %v6075 = vpack.c.b16 %v5926, %v5925
      %v6076 = vpack.c.b16 %v5928, %v5927
      %v6077 = vpack.c.b16 %v5930, %v5929
      %v6078 = vpack.c.b16 %v5932, %v5931
      %v6079 = vpack.c.b16 %v5934, %v5933
      %v6080 = vpack.c.b16 %v5936, %v5935
      %v6081 = vpack.c.b16 %v5938, %v5937
      %v6082 = vpack.c.b16 %v5940, %v5939
      %v6083 = vpack.c.b16 %v5942, %v5941
      %v6084 = vpack.c.b16 %v5944, %v5943
      %v6085 = vpack.c.b16 %v5946, %v5945
      %v6086 = vpack.c.b16 %v5948, %v5947
      %v6087 = vpack.c.b16 %v5950, %v5949
      %v6088 = vpack.c.b16 %v5952, %v5951
      %v6089 = vpack.c.b16 %v5954, %v5953
      %v6090 = vpack.c.b16 %v5956, %v5955
      %v6091 = vpack.c.b16 %v5958, %v5957
      %v6092 = vpack.c.b16 %v5960, %v5959
      %v6093 = vpack.c.b16 %v5962, %v5961
      %v6094 = vpack.c.b16 %v5964, %v5963
      %v6095 = vpack.c.b16 %v5966, %v5965
      %v6096 = vpack.c.b16 %v5968, %v5967
      %6225 = vmatprep.subr.bf16.mxu0 0
      %6226 = vmatpush1.bf16.msra.mxu0 %v5969
      %6227 = vmatprep.subr.bf16.mxu0 0
      %6228 = vmatpush1.bf16.msra.mxu0 %v5970
      %6229 = vmatprep.subr.bf16.mxu0 0
      %6230 = vmatpush1.bf16.msra.mxu0 %v5971
      %6231 = vmatprep.subr.bf16.mxu0 0
      %6232 = vmatpush1.bf16.msra.mxu0 %v5972
      %6233 = vmatprep.subr.bf16.mxu0 0
      %6234 = vmatpush1.bf16.msra.mxu0 %v5973
      %6235 = vmatprep.subr.bf16.mxu0 0
      %6236 = vmatpush1.bf16.msra.mxu0 %v5974
      %6237 = vmatprep.subr.bf16.mxu0 0
      %6238 = vmatpush1.bf16.msra.mxu0 %v5975
      %6239 = vmatprep.subr.bf16.mxu0 0
      %6240 = vmatpush1.bf16.msra.mxu0 %v5976
      %6241 = vmatprep.subr.bf16.mxu0 0
      %6242 = vmatpush1.bf16.msra.mxu0 %v5977
      %6243 = vmatprep.subr.bf16.mxu0 0
      %6244 = vmatpush1.bf16.msra.mxu0 %v5978
      %6245 = vmatprep.subr.bf16.mxu0 0
      %6246 = vmatpush1.bf16.msra.mxu0 %v5979
      %6247 = vmatprep.subr.bf16.mxu0 0
      %6248 = vmatpush1.bf16.msra.mxu0 %v5980
      %6249 = vmatprep.subr.bf16.mxu0 0
      %6250 = vmatpush1.bf16.msra.mxu0 %v5981
      %6251 = vmatprep.subr.bf16.mxu0 0
      %6252 = vmatpush1.bf16.msra.mxu0 %v5982
      %6253 = vmatprep.subr.bf16.mxu0 0
      %6254 = vmatpush1.bf16.msra.mxu0 %v5983
      %6255 = vmatprep.subr.bf16.mxu0 0
      %6256 = vmatpush1.bf16.msra.mxu0 %v5984
      %6257 = vmatprep.mubr.bf16.mxu0 %v5185
      %6258 = vmatmul.mubr.bf16.gmra.mrb[0].mxu0 %v5184
      %v6259 = vpop.f32.mrb[0].mxu0
      %v6260 = vadd.f32 %v5456, %v6259
      %v6261 = vpop.f32.mrb[0].mxu0
      %v6262 = vpop.f32.mrb[0].mxu0
      %v6263 = vpop.f32.mrb[0].mxu0
      %6264 = vdwg.mxu0
      %6265 = vmatprep.subr.bf16.mxu0 0
      %6266 = vmatpush1.bf16.msra.mxu0 %v5985
      %6267 = vmatprep.subr.bf16.mxu0 0
      %6268 = vmatpush1.bf16.msra.mxu0 %v5986
      %6269 = vmatprep.subr.bf16.mxu0 0
      %6270 = vmatpush1.bf16.msra.mxu0 %v5987
      %6271 = vmatprep.subr.bf16.mxu0 0
      %6272 = vmatpush1.bf16.msra.mxu0 %v5988
      %6273 = vmatprep.subr.bf16.mxu0 0
      %6274 = vmatpush1.bf16.msra.mxu0 %v5989
      %6275 = vmatprep.subr.bf16.mxu0 0
      %6276 = vmatpush1.bf16.msra.mxu0 %v5990
      %6277 = vmatprep.subr.bf16.mxu0 0
      %6278 = vmatpush1.bf16.msra.mxu0 %v5991
      %6279 = vmatprep.subr.bf16.mxu0 0
      %6280 = vmatpush1.bf16.msra.mxu0 %v5992
      %6281 = vmatprep.subr.bf16.mxu0 0
      %6282 = vmatpush1.bf16.msra.mxu0 %v5993
      %6283 = vmatprep.subr.bf16.mxu0 0
      %6284 = vmatpush1.bf16.msra.mxu0 %v5994
      %6285 = vmatprep.subr.bf16.mxu0 0
      %6286 = vmatpush1.bf16.msra.mxu0 %v5995
      %6287 = vmatprep.subr.bf16.mxu0 0
      %6288 = vmatpush1.bf16.msra.mxu0 %v5996
      %6289 = vmatprep.subr.bf16.mxu0 0
      %6290 = vmatpush1.bf16.msra.mxu0 %v5997
      %6291 = vmatprep.subr.bf16.mxu0 0
      %6292 = vmatpush1.bf16.msra.mxu0 %v5998
      %6293 = vmatprep.subr.bf16.mxu0 0
      %6294 = vmatpush1.bf16.msra.mxu0 %v5999
      %6295 = vmatprep.subr.bf16.mxu0 0
      %6296 = vmatpush1.bf16.msra.mxu0 %v6000
      %6297 = vmatprep.mubr.bf16.mxu0 %v5187
      %6298 = vmatmul.mubr.bf16.gmra.mrb[0].mxu0 %v5186
      %v6299 = vpop.f32.mrb[0].mxu0
      %v6300 = vadd.f32 %v6260, %v6299
      %v6301 = vpop.f32.mrb[0].mxu0
      %v6302 = vpop.f32.mrb[0].mxu0
      %v6303 = vpop.f32.mrb[0].mxu0
      %6304 = vdwg.mxu0
      %6305 = vmatprep.subr.bf16.mxu0 0
      %6306 = vmatpush1.bf16.msra.mxu0 %v6001
      %6307 = vmatprep.subr.bf16.mxu0 0
      %6308 = vmatpush1.bf16.msra.mxu0 %v6002
      %6309 = vmatprep.subr.bf16.mxu0 0
      %6310 = vmatpush1.bf16.msra.mxu0 %v6003
      %6311 = vmatprep.subr.bf16.mxu0 0
      %6312 = vmatpush1.bf16.msra.mxu0 %v6004
      %6313 = vmatprep.subr.bf16.mxu0 0
      %6314 = vmatpush1.bf16.msra.mxu0 %v6005
      %6315 = vmatprep.subr.bf16.mxu0 0
      %6316 = vmatpush1.bf16.msra.mxu0 %v6006
      %6317 = vmatprep.subr.bf16.mxu0 0
      %6318 = vmatpush1.bf16.msra.mxu0 %v6007
      %6319 = vmatprep.subr.bf16.mxu0 0
      %6320 = vmatpush1.bf16.msra.mxu0 %v6008
      %6321 = vmatprep.subr.bf16.mxu0 0
      %6322 = vmatpush1.bf16.msra.mxu0 %v6009
      %6323 = vmatprep.subr.bf16.mxu0 0
      %6324 = vmatpush1.bf16.msra.mxu0 %v6010
      %6325 = vmatprep.subr.bf16.mxu0 0
      %6326 = vmatpush1.bf16.msra.mxu0 %v6011
      %6327 = vmatprep.subr.bf16.mxu0 0
      %6328 = vmatpush1.bf16.msra.mxu0 %v6012
      %6329 = vmatprep.subr.bf16.mxu0 0
      %6330 = vmatpush1.bf16.msra.mxu0 %v6013
      %6331 = vmatprep.subr.bf16.mxu0 0
      %6332 = vmatpush1.bf16.msra.mxu0 %v6014
      %6333 = vmatprep.subr.bf16.mxu0 0
      %6334 = vmatpush1.bf16.msra.mxu0 %v6015
      %6335 = vmatprep.subr.bf16.mxu0 0
      %6336 = vmatpush1.bf16.msra.mxu0 %v6016
      %6337 = vmatprep.mubr.bf16.mxu0 %v5189
      %6338 = vmatmul.mubr.bf16.gmra.mrb[0].mxu0 %v5188
      %v6339 = vpop.f32.mrb[0].mxu0
      %v6340 = vadd.f32 %v6300, %v6339
      %v6341 = vpop.f32.mrb[0].mxu0
      %v6342 = vpop.f32.mrb[0].mxu0
      %v6343 = vpop.f32.mrb[0].mxu0
      %6344 = vdwg.mxu0
      %6345 = vmatprep.subr.bf16.mxu0 0
      %6346 = vmatpush1.bf16.msra.mxu0 %v6017
      %6347 = vmatprep.subr.bf16.mxu0 0
      %6348 = vmatpush1.bf16.msra.mxu0 %v6018
      %6349 = vmatprep.subr.bf16.mxu0 0
      %6350 = vmatpush1.bf16.msra.mxu0 %v6019
      %6351 = vmatprep.subr.bf16.mxu0 0
      %6352 = vmatpush1.bf16.msra.mxu0 %v6020
      %6353 = vmatprep.subr.bf16.mxu0 0
      %6354 = vmatpush1.bf16.msra.mxu0 %v6021
      %6355 = vmatprep.subr.bf16.mxu0 0
      %6356 = vmatpush1.bf16.msra.mxu0 %v6022
      %6357 = vmatprep.subr.bf16.mxu0 0
      %6358 = vmatpush1.bf16.msra.mxu0 %v6023
      %6359 = vmatprep.subr.bf16.mxu0 0
      %6360 = vmatpush1.bf16.msra.mxu0 %v6024
      %6361 = vmatprep.subr.bf16.mxu0 0
      %6362 = vmatpush1.bf16.msra.mxu0 %v6025
      %6363 = vmatprep.subr.bf16.mxu0 0
      %6364 = vmatpush1.bf16.msra.mxu0 %v6026
      %6365 = vmatprep.subr.bf16.mxu0 0
      %6366 = vmatpush1.bf16.msra.mxu0 %v6027
      %6367 = vmatprep.subr.bf16.mxu0 0
      %6368 = vmatpush1.bf16.msra.mxu0 %v6028
      %6369 = vmatprep.subr.bf16.mxu0 0
      %6370 = vmatpush1.bf16.msra.mxu0 %v6029
      %6371 = vmatprep.subr.bf16.mxu0 0
      %6372 = vmatpush1.bf16.msra.mxu0 %v6030
      %6373 = vmatprep.subr.bf16.mxu0 0
      %6374 = vmatpush1.bf16.msra.mxu0 %v6031
      %6375 = vmatprep.subr.bf16.mxu0 0
      %6376 = vmatpush1.bf16.msra.mxu0 %v6032
      %6377 = vmatprep.mubr.bf16.mxu0 %v5191
      %6378 = vmatmul.mubr.bf16.gmra.mrb[0].mxu0 %v5190
      %v6379 = vpop.f32.mrb[0].mxu0
      %v6380 = vadd.f32 %v6340, %v6379
      %v6381 = vpop.f32.mrb[0].mxu0
      %v6382 = vpop.f32.mrb[0].mxu0
      %v6383 = vpop.f32.mrb[0].mxu0
      %6384 = vdwg.mxu0
      %6385 = vmatprep.subr.bf16.mxu0 0
      %6386 = vmatpush1.bf16.msra.mxu0 %v6033
      %6387 = vmatprep.subr.bf16.mxu0 0
      %6388 = vmatpush1.bf16.msra.mxu0 %v6034
      %6389 = vmatprep.subr.bf16.mxu0 0
      %6390 = vmatpush1.bf16.msra.mxu0 %v6035
      %6391 = vmatprep.subr.bf16.mxu0 0
      %6392 = vmatpush1.bf16.msra.mxu0 %v6036
      %6393 = vmatprep.subr.bf16.mxu0 0
      %6394 = vmatpush1.bf16.msra.mxu0 %v6037
      %6395 = vmatprep.subr.bf16.mxu0 0
      %6396 = vmatpush1.bf16.msra.mxu0 %v6038
      %6397 = vmatprep.subr.bf16.mxu0 0
      %6398 = vmatpush1.bf16.msra.mxu0 %v6039
      %6399 = vmatprep.subr.bf16.mxu0 0
      %6400 = vmatpush1.bf16.msra.mxu0 %v6040
      %6401 = vmatprep.subr.bf16.mxu0 0
      %6402 = vmatpush1.bf16.msra.mxu0 %v6041
      %6403 = vmatprep.subr.bf16.mxu0 0
      %6404 = vmatpush1.bf16.msra.mxu0 %v6042
      %6405 = vmatprep.subr.bf16.mxu0 0
      %6406 = vmatpush1.bf16.msra.mxu0 %v6043
      %6407 = vmatprep.subr.bf16.mxu0 0
      %6408 = vmatpush1.bf16.msra.mxu0 %v6044
      %6409 = vmatprep.subr.bf16.mxu0 0
      %6410 = vmatpush1.bf16.msra.mxu0 %v6045
      %6411 = vmatprep.subr.bf16.mxu0 0
      %6412 = vmatpush1.bf16.msra.mxu0 %v6046
      %6413 = vmatprep.subr.bf16.mxu0 0
      %6414 = vmatpush1.bf16.msra.mxu0 %v6047
      %6415 = vmatprep.subr.bf16.mxu0 0
      %6416 = vmatpush1.bf16.msra.mxu0 %v6048
      %6417 = vmatprep.mubr.bf16.mxu0 %v5193
      %6418 = vmatmul.mubr.bf16.gmra.mrb[0].mxu0 %v5192
      %v6419 = vpop.f32.mrb[0].mxu0
      %v6420 = vadd.f32 %v6380, %v6419
      %v6421 = vpop.f32.mrb[0].mxu0
      %v6422 = vpop.f32.mrb[0].mxu0
      %v6423 = vpop.f32.mrb[0].mxu0
      %6424 = vdwg.mxu0
      %6425 = vmatprep.subr.bf16.mxu0 0
      %6426 = vmatpush1.bf16.msra.mxu0 %v6049
      %6427 = vmatprep.subr.bf16.mxu0 0
      %6428 = vmatpush1.bf16.msra.mxu0 %v6050
      %6429 = vmatprep.subr.bf16.mxu0 0
      %6430 = vmatpush1.bf16.msra.mxu0 %v6051
      %6431 = vmatprep.subr.bf16.mxu0 0
      %6432 = vmatpush1.bf16.msra.mxu0 %v6052
      %6433 = vmatprep.subr.bf16.mxu0 0
      %6434 = vmatpush1.bf16.msra.mxu0 %v6053
      %6435 = vmatprep.subr.bf16.mxu0 0
      %6436 = vmatpush1.bf16.msra.mxu0 %v6054
      %6437 = vmatprep.subr.bf16.mxu0 0
      %6438 = vmatpush1.bf16.msra.mxu0 %v6055
      %6439 = vmatprep.subr.bf16.mxu0 0
      %6440 = vmatpush1.bf16.msra.mxu0 %v6056
      %6441 = vmatprep.subr.bf16.mxu0 0
      %6442 = vmatpush1.bf16.msra.mxu0 %v6057
      %6443 = vmatprep.subr.bf16.mxu0 0
      %6444 = vmatpush1.bf16.msra.mxu0 %v6058
      %6445 = vmatprep.subr.bf16.mxu0 0
      %6446 = vmatpush1.bf16.msra.mxu0 %v6059
      %6447 = vmatprep.subr.bf16.mxu0 0
      %6448 = vmatpush1.bf16.msra.mxu0 %v6060
      %6449 = vmatprep.subr.bf16.mxu0 0
      %6450 = vmatpush1.bf16.msra.mxu0 %v6061
      %6451 = vmatprep.subr.bf16.mxu0 0
      %6452 = vmatpush1.bf16.msra.mxu0 %v6062
      %6453 = vmatprep.subr.bf16.mxu0 0
      %6454 = vmatpush1.bf16.msra.mxu0 %v6063
      %6455 = vmatprep.subr.bf16.mxu0 0
      %6456 = vmatpush1.bf16.msra.mxu0 %v6064
      %6457 = vmatprep.mubr.bf16.mxu0 %v5195
      %6458 = vmatmul.mubr.bf16.gmra.mrb[0].mxu0 %v5194
      %v6459 = vpop.f32.mrb[0].mxu0
      %v6460 = vadd.f32 %v6420, %v6459
      %v6461 = vpop.f32.mrb[0].mxu0
      %v6462 = vpop.f32.mrb[0].mxu0
      %v6463 = vpop.f32.mrb[0].mxu0
      %6464 = vdwg.mxu0
      %6465 = vmatprep.subr.bf16.mxu0 0
      %6466 = vmatpush1.bf16.msra.mxu0 %v6065
      %6467 = vmatprep.subr.bf16.mxu0 0
      %6468 = vmatpush1.bf16.msra.mxu0 %v6066
      %6469 = vmatprep.subr.bf16.mxu0 0
      %6470 = vmatpush1.bf16.msra.mxu0 %v6067
      %6471 = vmatprep.subr.bf16.mxu0 0
      %6472 = vmatpush1.bf16.msra.mxu0 %v6068
      %6473 = vmatprep.subr.bf16.mxu0 0
      %6474 = vmatpush1.bf16.msra.mxu0 %v6069
      %6475 = vmatprep.subr.bf16.mxu0 0
      %6476 = vmatpush1.bf16.msra.mxu0 %v6070
      %6477 = vmatprep.subr.bf16.mxu0 0
      %6478 = vmatpush1.bf16.msra.mxu0 %v6071
      %6479 = vmatprep.subr.bf16.mxu0 0
      %6480 = vmatpush1.bf16.msra.mxu0 %v6072
      %6481 = vmatprep.subr.bf16.mxu0 0
      %6482 = vmatpush1.bf16.msra.mxu0 %v6073
      %6483 = vmatprep.subr.bf16.mxu0 0
      %6484 = vmatpush1.bf16.msra.mxu0 %v6074
      %6485 = vmatprep.subr.bf16.mxu0 0
      %6486 = vmatpush1.bf16.msra.mxu0 %v6075
      %6487 = vmatprep.subr.bf16.mxu0 0
      %6488 = vmatpush1.bf16.msra.mxu0 %v6076
      %6489 = vmatprep.subr.bf16.mxu0 0
      %6490 = vmatpush1.bf16.msra.mxu0 %v6077
      %6491 = vmatprep.subr.bf16.mxu0 0
      %6492 = vmatpush1.bf16.msra.mxu0 %v6078
      %6493 = vmatprep.subr.bf16.mxu0 0
      %6494 = vmatpush1.bf16.msra.mxu0 %v6079
      %6495 = vmatprep.subr.bf16.mxu0 0
      %6496 = vmatpush1.bf16.msra.mxu0 %v6080
      %6497 = vmatprep.mubr.bf16.mxu0 %v5197
      %6498 = vmatmul.mubr.bf16.gmra.mrb[0].mxu0 %v5196
      %v6499 = vpop.f32.mrb[0].mxu0
      %v6500 = vadd.f32 %v6460, %v6499
      %v6501 = vpop.f32.mrb[0].mxu0
      %v6502 = vpop.f32.mrb[0].mxu0
      %v6503 = vpop.f32.mrb[0].mxu0
      %6504 = vdwg.mxu0
      %6505 = vmatprep.subr.bf16.mxu0 0
      %6506 = vmatpush1.bf16.msra.mxu0 %v6081
      %6507 = vmatprep.subr.bf16.mxu0 0
      %6508 = vmatpush1.bf16.msra.mxu0 %v6082
      %6509 = vmatprep.subr.bf16.mxu0 0
      %6510 = vmatpush1.bf16.msra.mxu0 %v6083
      %6511 = vmatprep.subr.bf16.mxu0 0
      %6512 = vmatpush1.bf16.msra.mxu0 %v6084
      %6513 = vmatprep.subr.bf16.mxu0 0
      %6514 = vmatpush1.bf16.msra.mxu0 %v6085
      %6515 = vmatprep.subr.bf16.mxu0 0
      %6516 = vmatpush1.bf16.msra.mxu0 %v6086
      %6517 = vmatprep.subr.bf16.mxu0 0
      %6518 = vmatpush1.bf16.msra.mxu0 %v6087
      %6519 = vmatprep.subr.bf16.mxu0 0
      %6520 = vmatpush1.bf16.msra.mxu0 %v6088
      %6521 = vmatprep.subr.bf16.mxu0 0
      %6522 = vmatpush1.bf16.msra.mxu0 %v6089
      %6523 = vmatprep.subr.bf16.mxu0 0
      %6524 = vmatpush1.bf16.msra.mxu0 %v6090
      %6525 = vmatprep.subr.bf16.mxu0 0
      %6526 = vmatpush1.bf16.msra.mxu0 %v6091
      %6527 = vmatprep.subr.bf16.mxu0 0
      %6528 = vmatpush1.bf16.msra.mxu0 %v6092
      %6529 = vmatprep.subr.bf16.mxu0 0
      %6530 = vmatpush1.bf16.msra.mxu0 %v6093
      %6531 = vmatprep.subr.bf16.mxu0 0
      %6532 = vmatpush1.bf16.msra.mxu0 %v6094
      %6533 = vmatprep.subr.bf16.mxu0 0
      %6534 = vmatpush1.bf16.msra.mxu0 %v6095
      %6535 = vmatprep.subr.bf16.mxu0 0
      %6536 = vmatpush1.bf16.msra.mxu0 %v6096
      %6537 = vmatprep.mubr.bf16.mxu0 %v5199
      %6538 = vmatmul.mubr.bf16.gmra.mrb[0].mxu0 %v5198
      %v6539 = vpop.f32.mrb[0].mxu0
      %v6540 = vadd.f32 %v6500, %v6539
      %v6541 = vpop.f32.mrb[0].mxu0
      %v6542 = vpop.f32.mrb[0].mxu0
      %v6543 = vpop.f32.mrb[0].mxu0
      %6544 = vdwg.mxu0
      %v6545 = vmax.f32 %v6540, 0.0
      %v6546 = vld [vmem:[%s7] sm:$0x1]
      %v6547 = vmul.f32 %v6545, %v6546
      %v6548 = vsel %vm5155, %v6547, 0.0
      %6549 = vadd.xlane.f32.xlu0 %v6548
      %v6550 = vpop.xlane.xlu0 %6549
      %v6551 = vld [vmem:[#allocation2] sm:$0x1]
      %v6552 = vadd.f32 %v6550, %v6551
      %v6553 = vsub.f32 0.0, %v6552
      %v6554 = vmul.f32 %v6553, 1.442695
      %v6555 = vpow.pop %v6554
      %v6556 = vadd.f32 %v6555, 1.0
      %v6557 = vrcp.pop %v6556
      %v6558 = vmul.f32 1.0, %v6557
      %6560 = vset.pattern.permute.xlu0 0
      %6561 = vperm.xlu0 %6560, %v6558
      %v6562 = vpop.permute.xlu0 %6561
      %6564 = vst [vmem:[%s330] sm:$0x1] %v6562
      %p6565 = scmp.lt.s32.totalorder %s22, 1
      %s6566 = scalar_select %p6565, %s22, 1
      %s6567 = scalar_lea.vmem %s9, %s6566
      // Predicated region
      $region57: #{discriminator_forward.1} parent=55 // pred_check
        %p6568 = pneg %p234
      $region58: #{discriminator_forward.1} parent=55 // pred_check_branch
        %6570 = sbr.rel (%p6568) target = $region60
      $region59: #{discriminator_forward.1} parent=55 // pred_region
        _
      $region60: #{discriminator_forward.1} parent=55 // pred_fallthru
        _
    $region56: #{discriminator_forward.1} parent=5 // pred_fallthru
      _
    %p6571 = scmp.le.s32.totalorder 2, %s17
    // Predicated region
    $region61: #{discriminator_forward.1} parent=5 // pred_check
      %p6572 = pneg %p6571
    $region62: #{discriminator_forward.1} parent=5 // pred_check_branch
      %6574 = sbr.rel (%p6572) target = $region64
    $region63: #{discriminator_forward.1} parent=5 // pred_region
      %s6575 = ssub.s32 %s17, 2
      // Predicated region
      $region65: #{discriminator_forward.1} parent=63 // pred_check
        %p6576 = pneg %p240
      $region66: #{discriminator_forward.1} parent=63 // pred_check_branch
        %6578 = sbr.rel (%p6576) target = $region68
      $region67: #{discriminator_forward.1} parent=63 // pred_region
        %p6579 = scmp.lt.s32.totalorder %s23, 1
        %s6580 = scalar_select %p6579, %s23, 1
        %s6581 = scalar_lea.vmem %s9, %s6580
      $region68: #{discriminator_forward.1} parent=63 // pred_fallthru
        _
    $region64: #{discriminator_forward.1} parent=5 // pred_fallthru
      _
  $region6: #{discriminator_forward.1} parent=0 // loop_footer
    %s21 = sadd.s32 1, %s17
  $region7: #{discriminator_forward.1} parent=0 // loop_footer_branch
    %16 = sbr.rel target = $region3
  $region8: #{discriminator_forward.1} parent=0 // loop_exit
    _

</llo_original>
